<compile_context>
chip_gen: v7x
topology: tpu7x:2x2x1
jax: 0.10.0
libtpu: 0.0.40
codegen_flags: <defaults>
</compile_context>

<pallas_src>
import functools
import math

import jax
import jax.numpy as jnp
from jax.experimental import pallas as pl
from jax.experimental.pallas import tpu as pltpu

LANE = 128           # last-dim (lane) tile
SUBLANE_BF16 = 16    # second-to-last tile for bf16 blocks (also fine for f32)


# ---------------------------------------------------------------------------
# small padding / layout helpers
# ---------------------------------------------------------------------------
def _round_up(v, m):
    return ((v + m - 1) // m) * m


def _pick_time_block(T, target=8):
    for tc in range(min(T, target), 0, -1):
        if T % tc == 0:
            return tc
    return 1


def _pad_last(a, new):
    pad = [(0, 0)] * a.ndim
    pad[-1] = (0, new - a.shape[-1])
    return jnp.pad(a, pad)


def _pad_axis(a, axis, new):
    pad = [(0, 0)] * a.ndim
    pad[axis] = (0, new - a.shape[axis])
    return jnp.pad(a, pad)


def _pad_gate_cols(w, H, H_pad):
    """(..., 4H) -> (..., 4*H_pad): each i/f/g/o chunk zero-padded to its own 128-aligned slot."""
    parts = [_pad_last(w[..., k * H:(k + 1) * H], H_pad) for k in range(4)]
    return jnp.concatenate(parts, axis=-1)


# ---------------------------------------------------------------------------
# Fused kernel: DropConnect on W_hh (at first time block) + LSTM recurrence
# ---------------------------------------------------------------------------
def weightdrop_lstm_kernel(gx_ref, whh_ref, mask_ref, h0_ref, c0_ref,   # inputs
                           y_ref, cn_ref,                               # outputs
                           h_sc, c_sc, whh_sc,                          # scratch
                           *, hp, t_blk, scale):
    @pl.when(pl.program_id(1) == 0)
    def _init():
        # Fused DropConnect (F.dropout semantics): mask + 1/(1-p) scale, kept resident in VMEM (bf16).
        whh_sc[...] = (whh_ref[...].astype(jnp.float32)
                       * mask_ref[...].astype(jnp.float32)
                       * scale).astype(jnp.bfloat16)
        h_sc[...] = h0_ref[...].astype(jnp.bfloat16)
        c_sc[...] = c0_ref[...]

    def step(s, carry):
        # recurrent matmul: (B_blk, Hp) bf16 x (Hp, 4Hp) bf16 -> f32 on the MXU
        rec = jnp.dot(h_sc[...], whh_sc[...], preferred_element_type=jnp.float32)
        g = gx_ref[s].astype(jnp.float32) + rec            # (B_blk, 4*Hp), gate order i,f,g,o
        i_g = jax.nn.sigmoid(g[:, 0 * hp:1 * hp])
        f_g = jax.nn.sigmoid(g[:, 1 * hp:2 * hp])
        g_g = jnp.tanh(g[:, 2 * hp:3 * hp])
        o_g = jax.nn.sigmoid(g[:, 3 * hp:4 * hp])
        c_new = f_g * c_sc[...] + i_g * g_g
        h_new = o_g * jnp.tanh(c_new)
        c_sc[...] = c_new                                  # f32 carry
        h_sc[...] = h_new.astype(jnp.bfloat16)             # bf16 copy feeds the next MXU call
        y_ref[s] = h_new.astype(y_ref.dtype)
        return carry

    jax.lax.fori_loop(0, t_blk, step, 0, unroll=True)
    cn_ref[...] = c_sc[...]                                # resident across time blocks


def weightdrop_lstm_forward(gates_x, w_hh_t, mask, h0, c0, *, t_blk, b_blk, scale):
    T, B_pad, G4 = gates_x.shape
    H_pad = h0.shape[-1]
    nb = B_pad // b_blk
    nt = T // t_blk
    kernel = functools.partial(weightdrop_lstm_kernel, hp=H_pad, t_blk=t_blk, scale=scale)
    return pl.pallas_call(
        kernel,
        out_shape=(
            jax.ShapeDtypeStruct((T, B_pad, H_pad), jnp.float32),   # y (all hidden states)
            jax.ShapeDtypeStruct((B_pad, H_pad), jnp.float32),      # c_n
        ),
        grid=(nb, nt),
        in_specs=[
            pl.BlockSpec((t_blk, b_blk, G4), lambda b, t: (t, b, 0)),   # precomputed x-gates (bf16)
            pl.BlockSpec((H_pad, G4), lambda b, t: (0, 0)),             # raw W_hh^T (bf16, resident)
            pl.BlockSpec((H_pad, G4), lambda b, t: (0, 0)),             # DropConnect mask (bf16 0/1)
            pl.BlockSpec((b_blk, H_pad), lambda b, t: (b, 0)),          # h0
            pl.BlockSpec((b_blk, H_pad), lambda b, t: (b, 0)),          # c0
        ],
        out_specs=(
            pl.BlockSpec((t_blk, b_blk, H_pad), lambda b, t: (t, b, 0)),
            pl.BlockSpec((b_blk, H_pad), lambda b, t: (b, 0)),
        ),
        scratch_shapes=[
            pltpu.VMEM((b_blk, H_pad), jnp.bfloat16),   # h carry (bf16 -> MXU)
            pltpu.VMEM((b_blk, H_pad), jnp.float32),    # c carry (f32)
            pltpu.VMEM((H_pad, G4), jnp.bfloat16),      # masked+scaled W_hh (resident)
        ],
        compiler_params=pltpu.CompilerParams(
            dimension_semantics=("parallel", "arbitrary"),   # batch blocks parallel, time serial
            vmem_limit_bytes=64 * 1024 * 1024,
        ),
    )(gates_x, w_hh_t, mask, h0, c0)


# ---------------------------------------------------------------------------
# WeightDrop wrapper: dropout on weight_hh_l0 + single-layer LSTM forward
# ---------------------------------------------------------------------------
class WeightDropLSTM:
    """WeightDrop(nn.LSTM(I, H), ['weight_hh_l0'], dropout=p) — forward only (training mode)."""

    def __init__(self, input_size, hidden_size, dropout=0.5, key=None):
        self.input_size = input_size
        self.hidden_size = hidden_size
        self.dropout = float(dropout)
        k = jax.random.PRNGKey(0) if key is None else key
        k1, k2, k3, k4 = jax.random.split(k, 4)
        bound = 1.0 / math.sqrt(hidden_size)
        # PyTorch LSTM parameter shapes: (4H, I), (4H, H), (4H,), (4H,); gate order i,f,g,o
        self.w_ih = jax.random.uniform(k1, (4 * hidden_size, input_size), jnp.float32, -bound, bound)
        self.w_hh_raw = jax.random.uniform(k2, (4 * hidden_size, hidden_size), jnp.float32, -bound, bound)
        self.b_ih = jax.random.uniform(k3, (4 * hidden_size,), jnp.float32, -bound, bound)
        self.b_hh = jax.random.uniform(k4, (4 * hidden_size,), jnp.float32, -bound, bound)
        self._mask = None   # last DropConnect mask, (H, 4H) transposed layout

    def _new_mask(self, key):
        H = self.hidden_size
        if self.dropout == 0.0:
            self._mask = jnp.ones((H, 4 * H), jnp.float32)
        else:
            keep = jax.random.bernoulli(key, 1.0 - self.dropout, (H, 4 * H))
            self._mask = keep.astype(jnp.float32)

    def __call__(self, x, hidden=None, fixed=False, key=None):
        T, B, _ = x.shape
        H = self.hidden_size
        H_pad = _round_up(H, LANE)
        b_blk = SUBLANE_BF16
        B_pad = _round_up(B, b_blk)
        t_blk = _pick_time_block(T)

        # F.dropout on weight_hh_l0: fresh mask per forward unless `fixed` reuses the cached one.
        if not fixed or self._mask is None:
            self._new_mask(jax.random.PRNGKey(0) if key is None else key)
        scale = 1.0 / (1.0 - self.dropout) if self.dropout > 0.0 else 1.0

        # Parameter layout: transpose, align each gate's H chunk to its own 128-lane slot, zero-pad.
        w_ih_t = _pad_gate_cols(self.w_ih.T, H, H_pad)                            # (I, 4*H_pad)
        w_hh_t = _pad_axis(_pad_gate_cols(self.w_hh_raw.T, H, H_pad), 0, H_pad)   # (H_pad, 4*H_pad)
        mask_p = _pad_axis(_pad_gate_cols(self._mask, H, H_pad), 0, H_pad)        # (H_pad, 4*H_pad)
        bias = _pad_gate_cols((self.b_ih + self.b_hh)[None, :], H, H_pad)         # (1, 4*H_pad)

        if hidden is None:
            h0 = jnp.zeros((B, H), jnp.float32)
            c0 = jnp.zeros((B, H), jnp.float32)
        else:
            h0, c0 = hidden
        h0 = _pad_axis(_pad_last(h0.astype(jnp.float32), H_pad), 0, B_pad)
        c0 = _pad_axis(_pad_last(c0.astype(jnp.float32), H_pad), 0, B_pad)

        # Hoisted input projection: one big bf16 GEMM over all T*B rows (no time dependence),
        # bias folded in here so the per-step kernel body only adds the recurrent term.
        x_p = _pad_axis(x.astype(jnp.float32), 1, B_pad)
        gates_x = jnp.einsum(
            "tbi,ig->tbg",
            x_p.astype(jnp.bfloat16), w_ih_t.astype(jnp.bfloat16),
            preferred_element_type=jnp.float32,
        ) + bias
        gates_x = gates_x.astype(jnp.bfloat16)                                    # (T, B_pad, 4*H_pad)

        y_p, c_n_p = weightdrop_lstm_forward(
            gates_x, w_hh_t.astype(jnp.bfloat16), mask_p.astype(jnp.bfloat16),
            h0, c0, t_blk=t_blk, b_blk=b_blk, scale=scale,
        )
        y = y_p[:, :B, :H]
        h_n = y[-1]
        c_n = c_n_p[:B, :H]
        return y, (h_n, c_n)


# ---------------------------------------------------------------------------
# pure-JAX f32 reference (same dropped weight) for a parity sanity check
# ---------------------------------------------------------------------------
def lstm_reference(x, w_ih, w_hh, b_ih, b_hh, h0, c0):
    T = x.shape[0]
    H = h0.shape[-1]
    h, c = h0, c0
    ys = []
    for t in range(T):
        g = x[t] @ w_ih.T + h @ w_hh.T + b_ih + b_hh
        i = jax.nn.sigmoid(g[:, 0 * H:1 * H])
        f = jax.nn.sigmoid(g[:, 1 * H:2 * H])
        gg = jnp.tanh(g[:, 2 * H:3 * H])
        o = jax.nn.sigmoid(g[:, 3 * H:4 * H])
        c = f * c + i * gg
        h = o * jnp.tanh(c)
        ys.append(h)
    return jnp.stack(ys), h, c


if __name__ == "__main__":
    # time-major x (T, B, I) — matches PyTorch nn.LSTM batch_first=False.
    # H, B intentionally not lane/sublane aligned to exercise the padding path.
    T, B, I, H = 16, 4, 64, 96
    key = jax.random.PRNGKey(0)
    kx, kw, kd = jax.random.split(key, 3)

    x = jax.random.normal(kx, (T, B, I), dtype=jnp.float32)

    model = WeightDropLSTM(I, H, dropout=0.5, key=kw)
    y, (h_n, c_n) = model(x, hidden=None, fixed=False, key=kd)
    jax.block_until_ready(y)
    jax.block_until_ready(c_n)

    assert y.shape == (T, B, H) and h_n.shape == (B, H) and c_n.shape == (B, H)
    assert bool(jnp.all(jnp.isfinite(y))) and bool(jnp.all(jnp.isfinite(c_n)))

    # Parity vs. f32 reference using the SAME DropConnect mask (loose tol: kernel runs bf16 matmuls).
    w_hh_dropped = model.w_hh_raw * model._mask.T * (1.0 / (1.0 - model.dropout))
    y_ref, h_ref, c_ref = lstm_reference(
        x, model.w_ih, w_hh_dropped, model.b_ih, model.b_hh,
        jnp.zeros((B, H), jnp.float32), jnp.zeros((B, H), jnp.float32))
    assert bool(jnp.allclose(y, y_ref, atol=0.1, rtol=0.0))
    assert bool(jnp.allclose(c_n, c_ref, atol=0.2, rtol=0.0))

    print("KERNEL_OK")
</pallas_src>

<mosaic_0001>
module attributes {stable_mosaic.version = 11 : i64} {
  func.func @weightdrop_lstm_kernel(%arg0: i32, %arg1: i32, %arg2: memref<8x16x512xbf16, #tpu.memory_space<vmem>>, %arg3: memref<128x512xbf16, #tpu.memory_space<vmem>>, %arg4: memref<128x512xbf16, #tpu.memory_space<vmem>>, %arg5: memref<16x128xf32, #tpu.memory_space<vmem>>, %arg6: memref<16x128xf32, #tpu.memory_space<vmem>>, %arg7: memref<8x16x128xf32, #tpu.memory_space<vmem>>, %arg8: memref<16x128xf32, #tpu.memory_space<vmem>>, %arg9: memref<16x128xbf16, #tpu.memory_space<vmem>>, %arg10: memref<16x128xf32, #tpu.memory_space<vmem>>, %arg11: memref<128x512xbf16, #tpu.memory_space<vmem>>) attributes {dimension_semantics = [#tpu.dimension_semantics<parallel>, #tpu.dimension_semantics<arbitrary>], iteration_bounds = array<i64: 1, 2>, scalar_prefetch = 0 : i64, scratch_operands = 3 : i64, tpu.core_type = #tpu.core_type<tc>, window_params = [{transform_indices = @transform_0, window_bounds = array<i64: 8, 16, 512>}, {pipeline_mode = #tpu.pipeline_mode<synchronous>, transform_indices = @transform_1, window_bounds = array<i64: 128, 512>}, {pipeline_mode = #tpu.pipeline_mode<synchronous>, transform_indices = @transform_2, window_bounds = array<i64: 128, 512>}, {transform_indices = @transform_3, window_bounds = array<i64: 16, 128>}, {transform_indices = @transform_4, window_bounds = array<i64: 16, 128>}, {transform_indices = @transform_5, window_bounds = array<i64: 8, 16, 128>}, {transform_indices = @transform_6, window_bounds = array<i64: 16, 128>}]} {
    %c0_i32 = arith.constant 0 : i32
    %0 = arith.cmpi eq, %arg1, %c0_i32 : i32
    %1 = arith.extui %0 : i1 to i32
    %c0_i32_0 = arith.constant 0 : i32
    %2 = arith.cmpi ne, %1, %c0_i32_0 : i32
    scf.if %2 {
      %c0_148 = arith.constant 0 : index
      %c0_149 = arith.constant 0 : index
      %333 = vector.load %arg3[%c0_148, %c0_149] : memref<128x512xbf16, #tpu.memory_space<vmem>>, vector<128x512xbf16>
      %334 = arith.extf %333 : vector<128x512xbf16> to vector<128x512xf32>
      %c0_150 = arith.constant 0 : index
      %c0_151 = arith.constant 0 : index
      %335 = vector.load %arg4[%c0_150, %c0_151] : memref<128x512xbf16, #tpu.memory_space<vmem>>, vector<128x512xbf16>
      %336 = arith.extf %335 : vector<128x512xbf16> to vector<128x512xf32>
      %337 = arith.mulf %334, %336 : vector<128x512xf32>
      %cst_152 = arith.constant 2.000000e+00 : f32
      %338 = vector.broadcast %cst_152 : f32 to vector<128x512xf32>
      %339 = arith.mulf %337, %338 : vector<128x512xf32>
      %340 = arith.truncf %339 : vector<128x512xf32> to vector<128x512xbf16>
      %c0_153 = arith.constant 0 : index
      %c0_154 = arith.constant 0 : index
      %341 = vector.load %arg11[%c0_153, %c0_154] : memref<128x512xbf16, #tpu.memory_space<vmem>>, vector<128x512xbf16>
      tpu.vector_store %arg11[%c0_153, %c0_154], %340 {strides = array<i32>} : memref<128x512xbf16, #tpu.memory_space<vmem>>, vector<128x512xbf16>,
      %c0_155 = arith.constant 0 : index
      %c0_156 = arith.constant 0 : index
      %342 = vector.load %arg5[%c0_155, %c0_156] : memref<16x128xf32, #tpu.memory_space<vmem>>, vector<16x128xf32>
      %343 = arith.truncf %342 : vector<16x128xf32> to vector<16x128xbf16>
      %c0_157 = arith.constant 0 : index
      %c0_158 = arith.constant 0 : index
      %344 = vector.load %arg9[%c0_157, %c0_158] : memref<16x128xbf16, #tpu.memory_space<vmem>>, vector<16x128xbf16>
      tpu.vector_store %arg9[%c0_157, %c0_158], %343 {strides = array<i32>} : memref<16x128xbf16, #tpu.memory_space<vmem>>, vector<16x128xbf16>,
      %c0_159 = arith.constant 0 : index
      %c0_160 = arith.constant 0 : index
      %345 = vector.load %arg6[%c0_159, %c0_160] : memref<16x128xf32, #tpu.memory_space<vmem>>, vector<16x128xf32>
      %c0_161 = arith.constant 0 : index
      %c0_162 = arith.constant 0 : index
      %346 = vector.load %arg10[%c0_161, %c0_162] : memref<16x128xf32, #tpu.memory_space<vmem>>, vector<16x128xf32>
      tpu.vector_store %arg10[%c0_161, %c0_162], %345 {strides = array<i32>} : memref<16x128xf32, #tpu.memory_space<vmem>>, vector<16x128xf32>,
    } else {
    }
    %c0_i32_1 = arith.constant 0 : i32
    %c0 = arith.constant 0 : index
    %c0_2 = arith.constant 0 : index
    %3 = vector.load %arg9[%c0, %c0_2] : memref<16x128xbf16, #tpu.memory_space<vmem>>, vector<16x128xbf16>
    %c0_3 = arith.constant 0 : index
    %c0_4 = arith.constant 0 : index
    %4 = vector.load %arg11[%c0_3, %c0_4] : memref<128x512xbf16, #tpu.memory_space<vmem>>, vector<128x512xbf16>
    %cst = arith.constant dense<0.000000e+00> : vector<16x512xf32>
    %5 = tpu.matmul %3, %4, %cst {dimension_numbers = #tpu.dot_dimension_numbers<[1], [0], [0], [1], [0, 0, 1, 1], [], []>} : vector<16x128xbf16>, vector<128x512xbf16>, vector<16x512xf32> -> vector<16x512xf32>
    %6 = arith.index_cast %c0_i32_1 : i32 to index
    %c0_5 = arith.constant 0 : index
    %c0_6 = arith.constant 0 : index
    %7 = vector.load %arg2[%6, %c0_5, %c0_6] : memref<8x16x512xbf16, #tpu.memory_space<vmem>>, vector<1x16x512xbf16>
    %8 = vector.shape_cast %7 : vector<1x16x512xbf16> to vector<16x512xbf16>
    %9 = arith.extf %8 : vector<16x512xbf16> to vector<16x512xf32>
    %10 = arith.addf %9, %5 : vector<16x512xf32>
    %11 = vector.extract_strided_slice %10 {offsets = [0, 0], sizes = [16, 128], strides = [1, 1]} : vector<16x512xf32> to vector<16x128xf32>
    %12 = arith.negf %11 : vector<16x128xf32>
    %13 = math.exp %12 : vector<16x128xf32>
    %cst_7 = arith.constant 1.000000e+00 : f32
    %14 = vector.broadcast %cst_7 : f32 to vector<16x128xf32>
    %15 = arith.addf %14, %13 : vector<16x128xf32>
    %16 = arith.divf %14, %15 : vector<16x128xf32>
    %17 = vector.extract_strided_slice %10 {offsets = [0, 128], sizes = [16, 128], strides = [1, 1]} : vector<16x512xf32> to vector<16x128xf32>
    %18 = arith.negf %17 : vector<16x128xf32>
    %19 = math.exp %18 : vector<16x128xf32>
    %cst_8 = arith.constant 1.000000e+00 : f32
    %20 = vector.broadcast %cst_8 : f32 to vector<16x128xf32>
    %21 = arith.addf %20, %19 : vector<16x128xf32>
    %22 = arith.divf %20, %21 : vector<16x128xf32>
    %23 = vector.extract_strided_slice %10 {offsets = [0, 256], sizes = [16, 128], strides = [1, 1]} : vector<16x512xf32> to vector<16x128xf32>
    %24 = math.tanh %23 : vector<16x128xf32>
    %25 = vector.extract_strided_slice %10 {offsets = [0, 384], sizes = [16, 128], strides = [1, 1]} : vector<16x512xf32> to vector<16x128xf32>
    %26 = arith.negf %25 : vector<16x128xf32>
    %27 = math.exp %26 : vector<16x128xf32>
    %cst_9 = arith.constant 1.000000e+00 : f32
    %28 = vector.broadcast %cst_9 : f32 to vector<16x128xf32>
    %29 = arith.addf %28, %27 : vector<16x128xf32>
    %30 = arith.divf %28, %29 : vector<16x128xf32>
    %c0_10 = arith.constant 0 : index
    %c0_11 = arith.constant 0 : index
    %31 = vector.load %arg10[%c0_10, %c0_11] : memref<16x128xf32, #tpu.memory_space<vmem>>, vector<16x128xf32>
    %32 = arith.mulf %22, %31 : vector<16x128xf32>
    %33 = arith.mulf %16, %24 : vector<16x128xf32>
    %34 = arith.addf %32, %33 : vector<16x128xf32>
    %35 = math.tanh %34 : vector<16x128xf32>
    %36 = arith.mulf %30, %35 : vector<16x128xf32>
    %c0_12 = arith.constant 0 : index
    %c0_13 = arith.constant 0 : index
    %37 = vector.load %arg10[%c0_12, %c0_13] : memref<16x128xf32, #tpu.memory_space<vmem>>, vector<16x128xf32>
    tpu.vector_store %arg10[%c0_12, %c0_13], %34 {strides = array<i32>} : memref<16x128xf32, #tpu.memory_space<vmem>>, vector<16x128xf32>,
    %38 = arith.truncf %36 : vector<16x128xf32> to vector<16x128xbf16>
    %c0_14 = arith.constant 0 : index
    %c0_15 = arith.constant 0 : index
    %39 = vector.load %arg9[%c0_14, %c0_15] : memref<16x128xbf16, #tpu.memory_space<vmem>>, vector<16x128xbf16>
    tpu.vector_store %arg9[%c0_14, %c0_15], %38 {strides = array<i32>} : memref<16x128xbf16, #tpu.memory_space<vmem>>, vector<16x128xbf16>,
    %40 = arith.index_cast %c0_i32_1 : i32 to index
    %c0_16 = arith.constant 0 : index
    %c0_17 = arith.constant 0 : index
    %41 = vector.load %arg7[%40, %c0_16, %c0_17] : memref<8x16x128xf32, #tpu.memory_space<vmem>>, vector<1x16x128xf32>
    %42 = vector.shape_cast %41 : vector<1x16x128xf32> to vector<16x128xf32>
    %43 = vector.shape_cast %36 : vector<16x128xf32> to vector<1x16x128xf32>
    tpu.vector_store %arg7[%40, %c0_16, %c0_17], %43 {strides = array<i32>} : memref<8x16x128xf32, #tpu.memory_space<vmem>>, vector<1x16x128xf32>,
    %c1_i32 = arith.constant 1 : i32
    %c0_18 = arith.constant 0 : index
    %c0_19 = arith.constant 0 : index
    %44 = vector.load %arg9[%c0_18, %c0_19] : memref<16x128xbf16, #tpu.memory_space<vmem>>, vector<16x128xbf16>
    %c0_20 = arith.constant 0 : index
    %c0_21 = arith.constant 0 : index
    %45 = vector.load %arg11[%c0_20, %c0_21] : memref<128x512xbf16, #tpu.memory_space<vmem>>, vector<128x512xbf16>
    %cst_22 = arith.constant dense<0.000000e+00> : vector<16x512xf32>
    %46 = tpu.matmul %44, %45, %cst_22 {dimension_numbers = #tpu.dot_dimension_numbers<[1], [0], [0], [1], [0, 0, 1, 1], [], []>} : vector<16x128xbf16>, vector<128x512xbf16>, vector<16x512xf32> -> vector<16x512xf32>
    %47 = arith.index_cast %c1_i32 : i32 to index
    %c0_23 = arith.constant 0 : index
    %c0_24 = arith.constant 0 : index
    %48 = vector.load %arg2[%47, %c0_23, %c0_24] : memref<8x16x512xbf16, #tpu.memory_space<vmem>>, vector<1x16x512xbf16>
    %49 = vector.shape_cast %48 : vector<1x16x512xbf16> to vector<16x512xbf16>
    %50 = arith.extf %49 : vector<16x512xbf16> to vector<16x512xf32>
    %51 = arith.addf %50, %46 : vector<16x512xf32>
    %52 = vector.extract_strided_slice %51 {offsets = [0, 0], sizes = [16, 128], strides = [1, 1]} : vector<16x512xf32> to vector<16x128xf32>
    %53 = arith.negf %52 : vector<16x128xf32>
    %54 = math.exp %53 : vector<16x128xf32>
    %cst_25 = arith.constant 1.000000e+00 : f32
    %55 = vector.broadcast %cst_25 : f32 to vector<16x128xf32>
    %56 = arith.addf %55, %54 : vector<16x128xf32>
    %57 = arith.divf %55, %56 : vector<16x128xf32>
    %58 = vector.extract_strided_slice %51 {offsets = [0, 128], sizes = [16, 128], strides = [1, 1]} : vector<16x512xf32> to vector<16x128xf32>
    %59 = arith.negf %58 : vector<16x128xf32>
    %60 = math.exp %59 : vector<16x128xf32>
    %cst_26 = arith.constant 1.000000e+00 : f32
    %61 = vector.broadcast %cst_26 : f32 to vector<16x128xf32>
    %62 = arith.addf %61, %60 : vector<16x128xf32>
    %63 = arith.divf %61, %62 : vector<16x128xf32>
    %64 = vector.extract_strided_slice %51 {offsets = [0, 256], sizes = [16, 128], strides = [1, 1]} : vector<16x512xf32> to vector<16x128xf32>
    %65 = math.tanh %64 : vector<16x128xf32>
    %66 = vector.extract_strided_slice %51 {offsets = [0, 384], sizes = [16, 128], strides = [1, 1]} : vector<16x512xf32> to vector<16x128xf32>
    %67 = arith.negf %66 : vector<16x128xf32>
    %68 = math.exp %67 : vector<16x128xf32>
    %cst_27 = arith.constant 1.000000e+00 : f32
    %69 = vector.broadcast %cst_27 : f32 to vector<16x128xf32>
    %70 = arith.addf %69, %68 : vector<16x128xf32>
    %71 = arith.divf %69, %70 : vector<16x128xf32>
    %c0_28 = arith.constant 0 : index
    %c0_29 = arith.constant 0 : index
    %72 = vector.load %arg10[%c0_28, %c0_29] : memref<16x128xf32, #tpu.memory_space<vmem>>, vector<16x128xf32>
    %73 = arith.mulf %63, %72 : vector<16x128xf32>
    %74 = arith.mulf %57, %65 : vector<16x128xf32>
    %75 = arith.addf %73, %74 : vector<16x128xf32>
    %76 = math.tanh %75 : vector<16x128xf32>
    %77 = arith.mulf %71, %76 : vector<16x128xf32>
    %c0_30 = arith.constant 0 : index
    %c0_31 = arith.constant 0 : index
    %78 = vector.load %arg10[%c0_30, %c0_31] : memref<16x128xf32, #tpu.memory_space<vmem>>, vector<16x128xf32>
    tpu.vector_store %arg10[%c0_30, %c0_31], %75 {strides = array<i32>} : memref<16x128xf32, #tpu.memory_space<vmem>>, vector<16x128xf32>,
    %79 = arith.truncf %77 : vector<16x128xf32> to vector<16x128xbf16>
    %c0_32 = arith.constant 0 : index
    %c0_33 = arith.constant 0 : index
    %80 = vector.load %arg9[%c0_32, %c0_33] : memref<16x128xbf16, #tpu.memory_space<vmem>>, vector<16x128xbf16>
    tpu.vector_store %arg9[%c0_32, %c0_33], %79 {strides = array<i32>} : memref<16x128xbf16, #tpu.memory_space<vmem>>, vector<16x128xbf16>,
    %81 = arith.index_cast %c1_i32 : i32 to index
    %c0_34 = arith.constant 0 : index
    %c0_35 = arith.constant 0 : index
    %82 = vector.load %arg7[%81, %c0_34, %c0_35] : memref<8x16x128xf32, #tpu.memory_space<vmem>>, vector<1x16x128xf32>
    %83 = vector.shape_cast %82 : vector<1x16x128xf32> to vector<16x128xf32>
    %84 = vector.shape_cast %77 : vector<16x128xf32> to vector<1x16x128xf32>
    tpu.vector_store %arg7[%81, %c0_34, %c0_35], %84 {strides = array<i32>} : memref<8x16x128xf32, #tpu.memory_space<vmem>>, vector<1x16x128xf32>,
    %c2_i32 = arith.constant 2 : i32
    %c0_36 = arith.constant 0 : index
    %c0_37 = arith.constant 0 : index
    %85 = vector.load %arg9[%c0_36, %c0_37] : memref<16x128xbf16, #tpu.memory_space<vmem>>, vector<16x128xbf16>
    %c0_38 = arith.constant 0 : index
    %c0_39 = arith.constant 0 : index
    %86 = vector.load %arg11[%c0_38, %c0_39] : memref<128x512xbf16, #tpu.memory_space<vmem>>, vector<128x512xbf16>
    %cst_40 = arith.constant dense<0.000000e+00> : vector<16x512xf32>
    %87 = tpu.matmul %85, %86, %cst_40 {dimension_numbers = #tpu.dot_dimension_numbers<[1], [0], [0], [1], [0, 0, 1, 1], [], []>} : vector<16x128xbf16>, vector<128x512xbf16>, vector<16x512xf32> -> vector<16x512xf32>
    %88 = arith.index_cast %c2_i32 : i32 to index
    %c0_41 = arith.constant 0 : index
    %c0_42 = arith.constant 0 : index
    %89 = vector.load %arg2[%88, %c0_41, %c0_42] : memref<8x16x512xbf16, #tpu.memory_space<vmem>>, vector<1x16x512xbf16>
    %90 = vector.shape_cast %89 : vector<1x16x512xbf16> to vector<16x512xbf16>
    %91 = arith.extf %90 : vector<16x512xbf16> to vector<16x512xf32>
    %92 = arith.addf %91, %87 : vector<16x512xf32>
    %93 = vector.extract_strided_slice %92 {offsets = [0, 0], sizes = [16, 128], strides = [1, 1]} : vector<16x512xf32> to vector<16x128xf32>
    %94 = arith.negf %93 : vector<16x128xf32>
    %95 = math.exp %94 : vector<16x128xf32>
    %cst_43 = arith.constant 1.000000e+00 : f32
    %96 = vector.broadcast %cst_43 : f32 to vector<16x128xf32>
    %97 = arith.addf %96, %95 : vector<16x128xf32>
    %98 = arith.divf %96, %97 : vector<16x128xf32>
    %99 = vector.extract_strided_slice %92 {offsets = [0, 128], sizes = [16, 128], strides = [1, 1]} : vector<16x512xf32> to vector<16x128xf32>
    %100 = arith.negf %99 : vector<16x128xf32>
    %101 = math.exp %100 : vector<16x128xf32>
    %cst_44 = arith.constant 1.000000e+00 : f32
    %102 = vector.broadcast %cst_44 : f32 to vector<16x128xf32>
    %103 = arith.addf %102, %101 : vector<16x128xf32>
    %104 = arith.divf %102, %103 : vector<16x128xf32>
    %105 = vector.extract_strided_slice %92 {offsets = [0, 256], sizes = [16, 128], strides = [1, 1]} : vector<16x512xf32> to vector<16x128xf32>
    %106 = math.tanh %105 : vector<16x128xf32>
    %107 = vector.extract_strided_slice %92 {offsets = [0, 384], sizes = [16, 128], strides = [1, 1]} : vector<16x512xf32> to vector<16x128xf32>
    %108 = arith.negf %107 : vector<16x128xf32>
    %109 = math.exp %108 : vector<16x128xf32>
    %cst_45 = arith.constant 1.000000e+00 : f32
    %110 = vector.broadcast %cst_45 : f32 to vector<16x128xf32>
    %111 = arith.addf %110, %109 : vector<16x128xf32>
    %112 = arith.divf %110, %111 : vector<16x128xf32>
    %c0_46 = arith.constant 0 : index
    %c0_47 = arith.constant 0 : index
    %113 = vector.load %arg10[%c0_46, %c0_47] : memref<16x128xf32, #tpu.memory_space<vmem>>, vector<16x128xf32>
    %114 = arith.mulf %104, %113 : vector<16x128xf32>
    %115 = arith.mulf %98, %106 : vector<16x128xf32>
    %116 = arith.addf %114, %115 : vector<16x128xf32>
    %117 = math.tanh %116 : vector<16x128xf32>
    %118 = arith.mulf %112, %117 : vector<16x128xf32>
    %c0_48 = arith.constant 0 : index
    %c0_49 = arith.constant 0 : index
    %119 = vector.load %arg10[%c0_48, %c0_49] : memref<16x128xf32, #tpu.memory_space<vmem>>, vector<16x128xf32>
    tpu.vector_store %arg10[%c0_48, %c0_49], %116 {strides = array<i32>} : memref<16x128xf32, #tpu.memory_space<vmem>>, vector<16x128xf32>,
    %120 = arith.truncf %118 : vector<16x128xf32> to vector<16x128xbf16>
    %c0_50 = arith.constant 0 : index
    %c0_51 = arith.constant 0 : index
    %121 = vector.load %arg9[%c0_50, %c0_51] : memref<16x128xbf16, #tpu.memory_space<vmem>>, vector<16x128xbf16>
    tpu.vector_store %arg9[%c0_50, %c0_51], %120 {strides = array<i32>} : memref<16x128xbf16, #tpu.memory_space<vmem>>, vector<16x128xbf16>,
    %122 = arith.index_cast %c2_i32 : i32 to index
    %c0_52 = arith.constant 0 : index
    %c0_53 = arith.constant 0 : index
    %123 = vector.load %arg7[%122, %c0_52, %c0_53] : memref<8x16x128xf32, #tpu.memory_space<vmem>>, vector<1x16x128xf32>
    %124 = vector.shape_cast %123 : vector<1x16x128xf32> to vector<16x128xf32>
    %125 = vector.shape_cast %118 : vector<16x128xf32> to vector<1x16x128xf32>
    tpu.vector_store %arg7[%122, %c0_52, %c0_53], %125 {strides = array<i32>} : memref<8x16x128xf32, #tpu.memory_space<vmem>>, vector<1x16x128xf32>,
    %c3_i32 = arith.constant 3 : i32
    %c0_54 = arith.constant 0 : index
    %c0_55 = arith.constant 0 : index
    %126 = vector.load %arg9[%c0_54, %c0_55] : memref<16x128xbf16, #tpu.memory_space<vmem>>, vector<16x128xbf16>
    %c0_56 = arith.constant 0 : index
    %c0_57 = arith.constant 0 : index
    %127 = vector.load %arg11[%c0_56, %c0_57] : memref<128x512xbf16, #tpu.memory_space<vmem>>, vector<128x512xbf16>
    %cst_58 = arith.constant dense<0.000000e+00> : vector<16x512xf32>
    %128 = tpu.matmul %126, %127, %cst_58 {dimension_numbers = #tpu.dot_dimension_numbers<[1], [0], [0], [1], [0, 0, 1, 1], [], []>} : vector<16x128xbf16>, vector<128x512xbf16>, vector<16x512xf32> -> vector<16x512xf32>
    %129 = arith.index_cast %c3_i32 : i32 to index
    %c0_59 = arith.constant 0 : index
    %c0_60 = arith.constant 0 : index
    %130 = vector.load %arg2[%129, %c0_59, %c0_60] : memref<8x16x512xbf16, #tpu.memory_space<vmem>>, vector<1x16x512xbf16>
    %131 = vector.shape_cast %130 : vector<1x16x512xbf16> to vector<16x512xbf16>
    %132 = arith.extf %131 : vector<16x512xbf16> to vector<16x512xf32>
    %133 = arith.addf %132, %128 : vector<16x512xf32>
    %134 = vector.extract_strided_slice %133 {offsets = [0, 0], sizes = [16, 128], strides = [1, 1]} : vector<16x512xf32> to vector<16x128xf32>
    %135 = arith.negf %134 : vector<16x128xf32>
    %136 = math.exp %135 : vector<16x128xf32>
    %cst_61 = arith.constant 1.000000e+00 : f32
    %137 = vector.broadcast %cst_61 : f32 to vector<16x128xf32>
    %138 = arith.addf %137, %136 : vector<16x128xf32>
    %139 = arith.divf %137, %138 : vector<16x128xf32>
    %140 = vector.extract_strided_slice %133 {offsets = [0, 128], sizes = [16, 128], strides = [1, 1]} : vector<16x512xf32> to vector<16x128xf32>
    %141 = arith.negf %140 : vector<16x128xf32>
    %142 = math.exp %141 : vector<16x128xf32>
    %cst_62 = arith.constant 1.000000e+00 : f32
    %143 = vector.broadcast %cst_62 : f32 to vector<16x128xf32>
    %144 = arith.addf %143, %142 : vector<16x128xf32>
    %145 = arith.divf %143, %144 : vector<16x128xf32>
    %146 = vector.extract_strided_slice %133 {offsets = [0, 256], sizes = [16, 128], strides = [1, 1]} : vector<16x512xf32> to vector<16x128xf32>
    %147 = math.tanh %146 : vector<16x128xf32>
    %148 = vector.extract_strided_slice %133 {offsets = [0, 384], sizes = [16, 128], strides = [1, 1]} : vector<16x512xf32> to vector<16x128xf32>
    %149 = arith.negf %148 : vector<16x128xf32>
    %150 = math.exp %149 : vector<16x128xf32>
    %cst_63 = arith.constant 1.000000e+00 : f32
    %151 = vector.broadcast %cst_63 : f32 to vector<16x128xf32>
    %152 = arith.addf %151, %150 : vector<16x128xf32>
    %153 = arith.divf %151, %152 : vector<16x128xf32>
    %c0_64 = arith.constant 0 : index
    %c0_65 = arith.constant 0 : index
    %154 = vector.load %arg10[%c0_64, %c0_65] : memref<16x128xf32, #tpu.memory_space<vmem>>, vector<16x128xf32>
    %155 = arith.mulf %145, %154 : vector<16x128xf32>
    %156 = arith.mulf %139, %147 : vector<16x128xf32>
    %157 = arith.addf %155, %156 : vector<16x128xf32>
    %158 = math.tanh %157 : vector<16x128xf32>
    %159 = arith.mulf %153, %158 : vector<16x128xf32>
    %c0_66 = arith.constant 0 : index
    %c0_67 = arith.constant 0 : index
    %160 = vector.load %arg10[%c0_66, %c0_67] : memref<16x128xf32, #tpu.memory_space<vmem>>, vector<16x128xf32>
    tpu.vector_store %arg10[%c0_66, %c0_67], %157 {strides = array<i32>} : memref<16x128xf32, #tpu.memory_space<vmem>>, vector<16x128xf32>,
    %161 = arith.truncf %159 : vector<16x128xf32> to vector<16x128xbf16>
    %c0_68 = arith.constant 0 : index
    %c0_69 = arith.constant 0 : index
    %162 = vector.load %arg9[%c0_68, %c0_69] : memref<16x128xbf16, #tpu.memory_space<vmem>>, vector<16x128xbf16>
    tpu.vector_store %arg9[%c0_68, %c0_69], %161 {strides = array<i32>} : memref<16x128xbf16, #tpu.memory_space<vmem>>, vector<16x128xbf16>,
    %163 = arith.index_cast %c3_i32 : i32 to index
    %c0_70 = arith.constant 0 : index
    %c0_71 = arith.constant 0 : index
    %164 = vector.load %arg7[%163, %c0_70, %c0_71] : memref<8x16x128xf32, #tpu.memory_space<vmem>>, vector<1x16x128xf32>
    %165 = vector.shape_cast %164 : vector<1x16x128xf32> to vector<16x128xf32>
    %166 = vector.shape_cast %159 : vector<16x128xf32> to vector<1x16x128xf32>
    tpu.vector_store %arg7[%163, %c0_70, %c0_71], %166 {strides = array<i32>} : memref<8x16x128xf32, #tpu.memory_space<vmem>>, vector<1x16x128xf32>,
    %c4_i32 = arith.constant 4 : i32
    %c0_72 = arith.constant 0 : index
    %c0_73 = arith.constant 0 : index
    %167 = vector.load %arg9[%c0_72, %c0_73] : memref<16x128xbf16, #tpu.memory_space<vmem>>, vector<16x128xbf16>
    %c0_74 = arith.constant 0 : index
    %c0_75 = arith.constant 0 : index
    %168 = vector.load %arg11[%c0_74, %c0_75] : memref<128x512xbf16, #tpu.memory_space<vmem>>, vector<128x512xbf16>
    %cst_76 = arith.constant dense<0.000000e+00> : vector<16x512xf32>
    %169 = tpu.matmul %167, %168, %cst_76 {dimension_numbers = #tpu.dot_dimension_numbers<[1], [0], [0], [1], [0, 0, 1, 1], [], []>} : vector<16x128xbf16>, vector<128x512xbf16>, vector<16x512xf32> -> vector<16x512xf32>
    %170 = arith.index_cast %c4_i32 : i32 to index
    %c0_77 = arith.constant 0 : index
    %c0_78 = arith.constant 0 : index
    %171 = vector.load %arg2[%170, %c0_77, %c0_78] : memref<8x16x512xbf16, #tpu.memory_space<vmem>>, vector<1x16x512xbf16>
    %172 = vector.shape_cast %171 : vector<1x16x512xbf16> to vector<16x512xbf16>
    %173 = arith.extf %172 : vector<16x512xbf16> to vector<16x512xf32>
    %174 = arith.addf %173, %169 : vector<16x512xf32>
    %175 = vector.extract_strided_slice %174 {offsets = [0, 0], sizes = [16, 128], strides = [1, 1]} : vector<16x512xf32> to vector<16x128xf32>
    %176 = arith.negf %175 : vector<16x128xf32>
    %177 = math.exp %176 : vector<16x128xf32>
    %cst_79 = arith.constant 1.000000e+00 : f32
    %178 = vector.broadcast %cst_79 : f32 to vector<16x128xf32>
    %179 = arith.addf %178, %177 : vector<16x128xf32>
    %180 = arith.divf %178, %179 : vector<16x128xf32>
    %181 = vector.extract_strided_slice %174 {offsets = [0, 128], sizes = [16, 128], strides = [1, 1]} : vector<16x512xf32> to vector<16x128xf32>
    %182 = arith.negf %181 : vector<16x128xf32>
    %183 = math.exp %182 : vector<16x128xf32>
    %cst_80 = arith.constant 1.000000e+00 : f32
    %184 = vector.broadcast %cst_80 : f32 to vector<16x128xf32>
    %185 = arith.addf %184, %183 : vector<16x128xf32>
    %186 = arith.divf %184, %185 : vector<16x128xf32>
    %187 = vector.extract_strided_slice %174 {offsets = [0, 256], sizes = [16, 128], strides = [1, 1]} : vector<16x512xf32> to vector<16x128xf32>
    %188 = math.tanh %187 : vector<16x128xf32>
    %189 = vector.extract_strided_slice %174 {offsets = [0, 384], sizes = [16, 128], strides = [1, 1]} : vector<16x512xf32> to vector<16x128xf32>
    %190 = arith.negf %189 : vector<16x128xf32>
    %191 = math.exp %190 : vector<16x128xf32>
    %cst_81 = arith.constant 1.000000e+00 : f32
    %192 = vector.broadcast %cst_81 : f32 to vector<16x128xf32>
    %193 = arith.addf %192, %191 : vector<16x128xf32>
    %194 = arith.divf %192, %193 : vector<16x128xf32>
    %c0_82 = arith.constant 0 : index
    %c0_83 = arith.constant 0 : index
    %195 = vector.load %arg10[%c0_82, %c0_83] : memref<16x128xf32, #tpu.memory_space<vmem>>, vector<16x128xf32>
    %196 = arith.mulf %186, %195 : vector<16x128xf32>
    %197 = arith.mulf %180, %188 : vector<16x128xf32>
    %198 = arith.addf %196, %197 : vector<16x128xf32>
    %199 = math.tanh %198 : vector<16x128xf32>
    %200 = arith.mulf %194, %199 : vector<16x128xf32>
    %c0_84 = arith.constant 0 : index
    %c0_85 = arith.constant 0 : index
    %201 = vector.load %arg10[%c0_84, %c0_85] : memref<16x128xf32, #tpu.memory_space<vmem>>, vector<16x128xf32>
    tpu.vector_store %arg10[%c0_84, %c0_85], %198 {strides = array<i32>} : memref<16x128xf32, #tpu.memory_space<vmem>>, vector<16x128xf32>,
    %202 = arith.truncf %200 : vector<16x128xf32> to vector<16x128xbf16>
    %c0_86 = arith.constant 0 : index
    %c0_87 = arith.constant 0 : index
    %203 = vector.load %arg9[%c0_86, %c0_87] : memref<16x128xbf16, #tpu.memory_space<vmem>>, vector<16x128xbf16>
    tpu.vector_store %arg9[%c0_86, %c0_87], %202 {strides = array<i32>} : memref<16x128xbf16, #tpu.memory_space<vmem>>, vector<16x128xbf16>,
    %204 = arith.index_cast %c4_i32 : i32 to index
    %c0_88 = arith.constant 0 : index
    %c0_89 = arith.constant 0 : index
    %205 = vector.load %arg7[%204, %c0_88, %c0_89] : memref<8x16x128xf32, #tpu.memory_space<vmem>>, vector<1x16x128xf32>
    %206 = vector.shape_cast %205 : vector<1x16x128xf32> to vector<16x128xf32>
    %207 = vector.shape_cast %200 : vector<16x128xf32> to vector<1x16x128xf32>
    tpu.vector_store %arg7[%204, %c0_88, %c0_89], %207 {strides = array<i32>} : memref<8x16x128xf32, #tpu.memory_space<vmem>>, vector<1x16x128xf32>,
    %c5_i32 = arith.constant 5 : i32
    %c0_90 = arith.constant 0 : index
    %c0_91 = arith.constant 0 : index
    %208 = vector.load %arg9[%c0_90, %c0_91] : memref<16x128xbf16, #tpu.memory_space<vmem>>, vector<16x128xbf16>
    %c0_92 = arith.constant 0 : index
    %c0_93 = arith.constant 0 : index
    %209 = vector.load %arg11[%c0_92, %c0_93] : memref<128x512xbf16, #tpu.memory_space<vmem>>, vector<128x512xbf16>
    %cst_94 = arith.constant dense<0.000000e+00> : vector<16x512xf32>
    %210 = tpu.matmul %208, %209, %cst_94 {dimension_numbers = #tpu.dot_dimension_numbers<[1], [0], [0], [1], [0, 0, 1, 1], [], []>} : vector<16x128xbf16>, vector<128x512xbf16>, vector<16x512xf32> -> vector<16x512xf32>
    %211 = arith.index_cast %c5_i32 : i32 to index
    %c0_95 = arith.constant 0 : index
    %c0_96 = arith.constant 0 : index
    %212 = vector.load %arg2[%211, %c0_95, %c0_96] : memref<8x16x512xbf16, #tpu.memory_space<vmem>>, vector<1x16x512xbf16>
    %213 = vector.shape_cast %212 : vector<1x16x512xbf16> to vector<16x512xbf16>
    %214 = arith.extf %213 : vector<16x512xbf16> to vector<16x512xf32>
    %215 = arith.addf %214, %210 : vector<16x512xf32>
    %216 = vector.extract_strided_slice %215 {offsets = [0, 0], sizes = [16, 128], strides = [1, 1]} : vector<16x512xf32> to vector<16x128xf32>
    %217 = arith.negf %216 : vector<16x128xf32>
    %218 = math.exp %217 : vector<16x128xf32>
    %cst_97 = arith.constant 1.000000e+00 : f32
    %219 = vector.broadcast %cst_97 : f32 to vector<16x128xf32>
    %220 = arith.addf %219, %218 : vector<16x128xf32>
    %221 = arith.divf %219, %220 : vector<16x128xf32>
    %222 = vector.extract_strided_slice %215 {offsets = [0, 128], sizes = [16, 128], strides = [1, 1]} : vector<16x512xf32> to vector<16x128xf32>
    %223 = arith.negf %222 : vector<16x128xf32>
    %224 = math.exp %223 : vector<16x128xf32>
    %cst_98 = arith.constant 1.000000e+00 : f32
    %225 = vector.broadcast %cst_98 : f32 to vector<16x128xf32>
    %226 = arith.addf %225, %224 : vector<16x128xf32>
    %227 = arith.divf %225, %226 : vector<16x128xf32>
    %228 = vector.extract_strided_slice %215 {offsets = [0, 256], sizes = [16, 128], strides = [1, 1]} : vector<16x512xf32> to vector<16x128xf32>
    %229 = math.tanh %228 : vector<16x128xf32>
    %230 = vector.extract_strided_slice %215 {offsets = [0, 384], sizes = [16, 128], strides = [1, 1]} : vector<16x512xf32> to vector<16x128xf32>
    %231 = arith.negf %230 : vector<16x128xf32>
    %232 = math.exp %231 : vector<16x128xf32>
    %cst_99 = arith.constant 1.000000e+00 : f32
    %233 = vector.broadcast %cst_99 : f32 to vector<16x128xf32>
    %234 = arith.addf %233, %232 : vector<16x128xf32>
    %235 = arith.divf %233, %234 : vector<16x128xf32>
    %c0_100 = arith.constant 0 : index
    %c0_101 = arith.constant 0 : index
    %236 = vector.load %arg10[%c0_100, %c0_101] : memref<16x128xf32, #tpu.memory_space<vmem>>, vector<16x128xf32>
    %237 = arith.mulf %227, %236 : vector<16x128xf32>
    %238 = arith.mulf %221, %229 : vector<16x128xf32>
    %239 = arith.addf %237, %238 : vector<16x128xf32>
    %240 = math.tanh %239 : vector<16x128xf32>
    %241 = arith.mulf %235, %240 : vector<16x128xf32>
    %c0_102 = arith.constant 0 : index
    %c0_103 = arith.constant 0 : index
    %242 = vector.load %arg10[%c0_102, %c0_103] : memref<16x128xf32, #tpu.memory_space<vmem>>, vector<16x128xf32>
    tpu.vector_store %arg10[%c0_102, %c0_103], %239 {strides = array<i32>} : memref<16x128xf32, #tpu.memory_space<vmem>>, vector<16x128xf32>,
    %243 = arith.truncf %241 : vector<16x128xf32> to vector<16x128xbf16>
    %c0_104 = arith.constant 0 : index
    %c0_105 = arith.constant 0 : index
    %244 = vector.load %arg9[%c0_104, %c0_105] : memref<16x128xbf16, #tpu.memory_space<vmem>>, vector<16x128xbf16>
    tpu.vector_store %arg9[%c0_104, %c0_105], %243 {strides = array<i32>} : memref<16x128xbf16, #tpu.memory_space<vmem>>, vector<16x128xbf16>,
    %245 = arith.index_cast %c5_i32 : i32 to index
    %c0_106 = arith.constant 0 : index
    %c0_107 = arith.constant 0 : index
    %246 = vector.load %arg7[%245, %c0_106, %c0_107] : memref<8x16x128xf32, #tpu.memory_space<vmem>>, vector<1x16x128xf32>
    %247 = vector.shape_cast %246 : vector<1x16x128xf32> to vector<16x128xf32>
    %248 = vector.shape_cast %241 : vector<16x128xf32> to vector<1x16x128xf32>
    tpu.vector_store %arg7[%245, %c0_106, %c0_107], %248 {strides = array<i32>} : memref<8x16x128xf32, #tpu.memory_space<vmem>>, vector<1x16x128xf32>,
    %c6_i32 = arith.constant 6 : i32
    %c0_108 = arith.constant 0 : index
    %c0_109 = arith.constant 0 : index
    %249 = vector.load %arg9[%c0_108, %c0_109] : memref<16x128xbf16, #tpu.memory_space<vmem>>, vector<16x128xbf16>
    %c0_110 = arith.constant 0 : index
    %c0_111 = arith.constant 0 : index
    %250 = vector.load %arg11[%c0_110, %c0_111] : memref<128x512xbf16, #tpu.memory_space<vmem>>, vector<128x512xbf16>
    %cst_112 = arith.constant dense<0.000000e+00> : vector<16x512xf32>
    %251 = tpu.matmul %249, %250, %cst_112 {dimension_numbers = #tpu.dot_dimension_numbers<[1], [0], [0], [1], [0, 0, 1, 1], [], []>} : vector<16x128xbf16>, vector<128x512xbf16>, vector<16x512xf32> -> vector<16x512xf32>
    %252 = arith.index_cast %c6_i32 : i32 to index
    %c0_113 = arith.constant 0 : index
    %c0_114 = arith.constant 0 : index
    %253 = vector.load %arg2[%252, %c0_113, %c0_114] : memref<8x16x512xbf16, #tpu.memory_space<vmem>>, vector<1x16x512xbf16>
    %254 = vector.shape_cast %253 : vector<1x16x512xbf16> to vector<16x512xbf16>
    %255 = arith.extf %254 : vector<16x512xbf16> to vector<16x512xf32>
    %256 = arith.addf %255, %251 : vector<16x512xf32>
    %257 = vector.extract_strided_slice %256 {offsets = [0, 0], sizes = [16, 128], strides = [1, 1]} : vector<16x512xf32> to vector<16x128xf32>
    %258 = arith.negf %257 : vector<16x128xf32>
    %259 = math.exp %258 : vector<16x128xf32>
    %cst_115 = arith.constant 1.000000e+00 : f32
    %260 = vector.broadcast %cst_115 : f32 to vector<16x128xf32>
    %261 = arith.addf %260, %259 : vector<16x128xf32>
    %262 = arith.divf %260, %261 : vector<16x128xf32>
    %263 = vector.extract_strided_slice %256 {offsets = [0, 128], sizes = [16, 128], strides = [1, 1]} : vector<16x512xf32> to vector<16x128xf32>
    %264 = arith.negf %263 : vector<16x128xf32>
    %265 = math.exp %264 : vector<16x128xf32>
    %cst_116 = arith.constant 1.000000e+00 : f32
    %266 = vector.broadcast %cst_116 : f32 to vector<16x128xf32>
    %267 = arith.addf %266, %265 : vector<16x128xf32>
    %268 = arith.divf %266, %267 : vector<16x128xf32>
    %269 = vector.extract_strided_slice %256 {offsets = [0, 256], sizes = [16, 128], strides = [1, 1]} : vector<16x512xf32> to vector<16x128xf32>
    %270 = math.tanh %269 : vector<16x128xf32>
    %271 = vector.extract_strided_slice %256 {offsets = [0, 384], sizes = [16, 128], strides = [1, 1]} : vector<16x512xf32> to vector<16x128xf32>
    %272 = arith.negf %271 : vector<16x128xf32>
    %273 = math.exp %272 : vector<16x128xf32>
    %cst_117 = arith.constant 1.000000e+00 : f32
    %274 = vector.broadcast %cst_117 : f32 to vector<16x128xf32>
    %275 = arith.addf %274, %273 : vector<16x128xf32>
    %276 = arith.divf %274, %275 : vector<16x128xf32>
    %c0_118 = arith.constant 0 : index
    %c0_119 = arith.constant 0 : index
    %277 = vector.load %arg10[%c0_118, %c0_119] : memref<16x128xf32, #tpu.memory_space<vmem>>, vector<16x128xf32>
    %278 = arith.mulf %268, %277 : vector<16x128xf32>
    %279 = arith.mulf %262, %270 : vector<16x128xf32>
    %280 = arith.addf %278, %279 : vector<16x128xf32>
    %281 = math.tanh %280 : vector<16x128xf32>
    %282 = arith.mulf %276, %281 : vector<16x128xf32>
    %c0_120 = arith.constant 0 : index
    %c0_121 = arith.constant 0 : index
    %283 = vector.load %arg10[%c0_120, %c0_121] : memref<16x128xf32, #tpu.memory_space<vmem>>, vector<16x128xf32>
    tpu.vector_store %arg10[%c0_120, %c0_121], %280 {strides = array<i32>} : memref<16x128xf32, #tpu.memory_space<vmem>>, vector<16x128xf32>,
    %284 = arith.truncf %282 : vector<16x128xf32> to vector<16x128xbf16>
    %c0_122 = arith.constant 0 : index
    %c0_123 = arith.constant 0 : index
    %285 = vector.load %arg9[%c0_122, %c0_123] : memref<16x128xbf16, #tpu.memory_space<vmem>>, vector<16x128xbf16>
    tpu.vector_store %arg9[%c0_122, %c0_123], %284 {strides = array<i32>} : memref<16x128xbf16, #tpu.memory_space<vmem>>, vector<16x128xbf16>,
    %286 = arith.index_cast %c6_i32 : i32 to index
    %c0_124 = arith.constant 0 : index
    %c0_125 = arith.constant 0 : index
    %287 = vector.load %arg7[%286, %c0_124, %c0_125] : memref<8x16x128xf32, #tpu.memory_space<vmem>>, vector<1x16x128xf32>
    %288 = vector.shape_cast %287 : vector<1x16x128xf32> to vector<16x128xf32>
    %289 = vector.shape_cast %282 : vector<16x128xf32> to vector<1x16x128xf32>
    tpu.vector_store %arg7[%286, %c0_124, %c0_125], %289 {strides = array<i32>} : memref<8x16x128xf32, #tpu.memory_space<vmem>>, vector<1x16x128xf32>,
    %c7_i32 = arith.constant 7 : i32
    %c0_126 = arith.constant 0 : index
    %c0_127 = arith.constant 0 : index
    %290 = vector.load %arg9[%c0_126, %c0_127] : memref<16x128xbf16, #tpu.memory_space<vmem>>, vector<16x128xbf16>
    %c0_128 = arith.constant 0 : index
    %c0_129 = arith.constant 0 : index
    %291 = vector.load %arg11[%c0_128, %c0_129] : memref<128x512xbf16, #tpu.memory_space<vmem>>, vector<128x512xbf16>
    %cst_130 = arith.constant dense<0.000000e+00> : vector<16x512xf32>
    %292 = tpu.matmul %290, %291, %cst_130 {dimension_numbers = #tpu.dot_dimension_numbers<[1], [0], [0], [1], [0, 0, 1, 1], [], []>} : vector<16x128xbf16>, vector<128x512xbf16>, vector<16x512xf32> -> vector<16x512xf32>
    %293 = arith.index_cast %c7_i32 : i32 to index
    %c0_131 = arith.constant 0 : index
    %c0_132 = arith.constant 0 : index
    %294 = vector.load %arg2[%293, %c0_131, %c0_132] : memref<8x16x512xbf16, #tpu.memory_space<vmem>>, vector<1x16x512xbf16>
    %295 = vector.shape_cast %294 : vector<1x16x512xbf16> to vector<16x512xbf16>
    %296 = arith.extf %295 : vector<16x512xbf16> to vector<16x512xf32>
    %297 = arith.addf %296, %292 : vector<16x512xf32>
    %298 = vector.extract_strided_slice %297 {offsets = [0, 0], sizes = [16, 128], strides = [1, 1]} : vector<16x512xf32> to vector<16x128xf32>
    %299 = arith.negf %298 : vector<16x128xf32>
    %300 = math.exp %299 : vector<16x128xf32>
    %cst_133 = arith.constant 1.000000e+00 : f32
    %301 = vector.broadcast %cst_133 : f32 to vector<16x128xf32>
    %302 = arith.addf %301, %300 : vector<16x128xf32>
    %303 = arith.divf %301, %302 : vector<16x128xf32>
    %304 = vector.extract_strided_slice %297 {offsets = [0, 128], sizes = [16, 128], strides = [1, 1]} : vector<16x512xf32> to vector<16x128xf32>
    %305 = arith.negf %304 : vector<16x128xf32>
    %306 = math.exp %305 : vector<16x128xf32>
    %cst_134 = arith.constant 1.000000e+00 : f32
    %307 = vector.broadcast %cst_134 : f32 to vector<16x128xf32>
    %308 = arith.addf %307, %306 : vector<16x128xf32>
    %309 = arith.divf %307, %308 : vector<16x128xf32>
    %310 = vector.extract_strided_slice %297 {offsets = [0, 256], sizes = [16, 128], strides = [1, 1]} : vector<16x512xf32> to vector<16x128xf32>
    %311 = math.tanh %310 : vector<16x128xf32>
    %312 = vector.extract_strided_slice %297 {offsets = [0, 384], sizes = [16, 128], strides = [1, 1]} : vector<16x512xf32> to vector<16x128xf32>
    %313 = arith.negf %312 : vector<16x128xf32>
    %314 = math.exp %313 : vector<16x128xf32>
    %cst_135 = arith.constant 1.000000e+00 : f32
    %315 = vector.broadcast %cst_135 : f32 to vector<16x128xf32>
    %316 = arith.addf %315, %314 : vector<16x128xf32>
    %317 = arith.divf %315, %316 : vector<16x128xf32>
    %c0_136 = arith.constant 0 : index
    %c0_137 = arith.constant 0 : index
    %318 = vector.load %arg10[%c0_136, %c0_137] : memref<16x128xf32, #tpu.memory_space<vmem>>, vector<16x128xf32>
    %319 = arith.mulf %309, %318 : vector<16x128xf32>
    %320 = arith.mulf %303, %311 : vector<16x128xf32>
    %321 = arith.addf %319, %320 : vector<16x128xf32>
    %322 = math.tanh %321 : vector<16x128xf32>
    %323 = arith.mulf %317, %322 : vector<16x128xf32>
    %c0_138 = arith.constant 0 : index
    %c0_139 = arith.constant 0 : index
    %324 = vector.load %arg10[%c0_138, %c0_139] : memref<16x128xf32, #tpu.memory_space<vmem>>, vector<16x128xf32>
    tpu.vector_store %arg10[%c0_138, %c0_139], %321 {strides = array<i32>} : memref<16x128xf32, #tpu.memory_space<vmem>>, vector<16x128xf32>,
    %325 = arith.truncf %323 : vector<16x128xf32> to vector<16x128xbf16>
    %c0_140 = arith.constant 0 : index
    %c0_141 = arith.constant 0 : index
    %326 = vector.load %arg9[%c0_140, %c0_141] : memref<16x128xbf16, #tpu.memory_space<vmem>>, vector<16x128xbf16>
    tpu.vector_store %arg9[%c0_140, %c0_141], %325 {strides = array<i32>} : memref<16x128xbf16, #tpu.memory_space<vmem>>, vector<16x128xbf16>,
    %327 = arith.index_cast %c7_i32 : i32 to index
    %c0_142 = arith.constant 0 : index
    %c0_143 = arith.constant 0 : index
    %328 = vector.load %arg7[%327, %c0_142, %c0_143] : memref<8x16x128xf32, #tpu.memory_space<vmem>>, vector<1x16x128xf32>
    %329 = vector.shape_cast %328 : vector<1x16x128xf32> to vector<16x128xf32>
    %330 = vector.shape_cast %323 : vector<16x128xf32> to vector<1x16x128xf32>
    tpu.vector_store %arg7[%327, %c0_142, %c0_143], %330 {strides = array<i32>} : memref<8x16x128xf32, #tpu.memory_space<vmem>>, vector<1x16x128xf32>,
    %c8_i32 = arith.constant 8 : i32
    %c0_144 = arith.constant 0 : index
    %c0_145 = arith.constant 0 : index
    %331 = vector.load %arg10[%c0_144, %c0_145] : memref<16x128xf32, #tpu.memory_space<vmem>>, vector<16x128xf32>
    %c0_146 = arith.constant 0 : index
    %c0_147 = arith.constant 0 : index
    %332 = vector.load %arg8[%c0_146, %c0_147] : memref<16x128xf32, #tpu.memory_space<vmem>>, vector<16x128xf32>
    tpu.vector_store %arg8[%c0_146, %c0_147], %331 {strides = array<i32>} : memref<16x128xf32, #tpu.memory_space<vmem>>, vector<16x128xf32>,
    return
  }
  func.func @transform_0(%arg0: i32, %arg1: i32) -> (i32, i32, i32) {
    %c0_i32 = arith.constant 0 : i32
    %c0_i32_0 = arith.constant 0 : i32
    return %arg1, %arg0, %c0_i32 : i32, i32, i32
  }
  func.func @transform_1(%arg0: i32, %arg1: i32) -> (i32, i32) {
    %c0_i32 = arith.constant 0 : i32
    %c0_i32_0 = arith.constant 0 : i32
    %c0_i32_1 = arith.constant 0 : i32
    return %c0_i32, %c0_i32_0 : i32, i32
  }
  func.func @transform_2(%arg0: i32, %arg1: i32) -> (i32, i32) {
    %c0_i32 = arith.constant 0 : i32
    %c0_i32_0 = arith.constant 0 : i32
    %c0_i32_1 = arith.constant 0 : i32
    return %c0_i32, %c0_i32_0 : i32, i32
  }
  func.func @transform_3(%arg0: i32, %arg1: i32) -> (i32, i32) {
    %c0_i32 = arith.constant 0 : i32
    %c0_i32_0 = arith.constant 0 : i32
    return %arg0, %c0_i32 : i32, i32
  }
  func.func @transform_4(%arg0: i32, %arg1: i32) -> (i32, i32) {
    %c0_i32 = arith.constant 0 : i32
    %c0_i32_0 = arith.constant 0 : i32
    return %arg0, %c0_i32 : i32, i32
  }
  func.func @transform_5(%arg0: i32, %arg1: i32) -> (i32, i32, i32) {
    %c0_i32 = arith.constant 0 : i32
    %c0_i32_0 = arith.constant 0 : i32
    return %arg1, %arg0, %c0_i32 : i32, i32, i32
  }
  func.func @transform_6(%arg0: i32, %arg1: i32) -> (i32, i32) {
    %c0_i32 = arith.constant 0 : i32
    %c0_i32_0 = arith.constant 0 : i32
    return %arg0, %c0_i32 : i32, i32
  }
}

</mosaic_0001>

<llo_original>
// kernel: tpu_custom_call.1
$region0: #{tpu_custom_call.1}
  #allocation0 [shape = 'u32[]', space=smem, size = 0x4, offset = 0x4, fixed_abs, tag = 'smem constant byte address 0x4 - core index']
  #allocation1 [shape = 'u32[144,128]{1,0:T(1,128)}', space=vmem, size = 0x12000, scoped, tag = 'internal scratch']
  #allocation2 [shape = 'bf16[16,128]{1,0:T(16,128)(2,1)}', space=vmem, size = 0x1000, scoped, tag = 'scratch operand']
  #allocation3 [shape = 'f32[16,128]{1,0:T(8,128)}', space=vmem, size = 0x2000, scoped, tag = 'scratch operand']
  #allocation4 [shape = 'bf16[128,512]{1,0:T(16,128)(2,1)}', space=vmem, size = 0x20000, scoped, tag = 'scratch operand']
  %s0 = inlined_call_operand.hbm [shape: bf16[16,16,512], index: 0, kind: input, shape index: {}]
  %s1 = inlined_call_operand.hbm [shape: bf16[128,512], index: 1, kind: input, shape index: {}]
  %s2 = inlined_call_operand.hbm [shape: bf16[128,512], index: 2, kind: input, shape index: {}]
  %s3 = inlined_call_operand.hbm [shape: f32[16,128], index: 3, kind: input, shape index: {}]
  %s4 = inlined_call_operand.hbm [shape: f32[16,128], index: 4, kind: input, shape index: {}]
  %s5 = inlined_call_operand.hbm [shape: f32[16,16,128], index: 5, kind: output, shape index: {0}]
  %s6 = inlined_call_operand.hbm [shape: f32[16,128], index: 6, kind: output, shape index: {1}]
  %7 = xla_tuple %s5, %s6
  %s8 = sld [smem:[#allocation0]]
  $region85: #{tpu_custom_call.1} parent=0
    _
  %s10 = ssub.s32 1, %s8
  %s11 = scalar_select 0, %s10, %s8
  $region1: #{tpu_custom_call.1} parent=0
    #allocation5 [shape = 'u8[262144]{0}', space=vmem, size = 0x40000, scoped, tag = 'input window, operand 0']
    #allocation6 [shape = 's32[2]{0}', space=sflag, size = 0x8, scoped, tag = 'scoped memory for tpu_custom_call.1']
    #allocation7 [shape = 's32[2]{0}', space=sflag, size = 0x8, scoped, tag = 'scoped memory for tpu_custom_call.1']
    #allocation8 [shape = 'u8[131072]{0}', space=vmem, size = 0x20000, scoped, tag = 'input window, operand 1, single buffered']
    #allocation9 [shape = 's32[1]{0}', space=sflag, size = 0x4, scoped, tag = 'scoped memory for tpu_custom_call.1']
    #allocation10 [shape = 'u8[131072]{0}', space=vmem, size = 0x20000, scoped, tag = 'input window, operand 2, single buffered']
    #allocation11 [shape = 'u8[8192]{0}', space=vmem, size = 0x2000, scoped, tag = 'input window, operand 3, single buffered']
    #allocation12 [shape = 's32[1]{0}', space=sflag, size = 0x4, scoped, tag = 'scoped memory for tpu_custom_call.1']
    #allocation13 [shape = 'u8[8192]{0}', space=vmem, size = 0x2000, scoped, tag = 'input window, operand 4, single buffered']
    #allocation14 [shape = 'u8[131072]{0}', space=vmem, size = 0x20000, scoped, tag = 'output window, operand 0']
    #allocation15 [shape = 'u8[8192]{0}', space=vmem, size = 0x2000, scoped, tag = 'output window, operand 1, single buffered']
    #allocation16 [shape = 's32[1]{0}', space=sflag, size = 0x4, scoped, tag = 'scoped memory for tpu_custom_call.1']
    %12 = vsyncpa [#allocation6], 0
    %s13 = scalar_lea.sflag [#allocation6], 1
    %14 = vsyncpa %s13, 0
    %15 = vsyncpa [#allocation9], 0
    %16 = vsyncpa [#allocation12], 0
    %17 = vsyncpa [#allocation7], 0
    %s18 = scalar_lea.sflag [#allocation7], 1
    %19 = vsyncpa %s18, 0
    %20 = vsyncpa [#allocation16], 0
    loop: start=0, step=1, limit=4
    $region2: #{tpu_custom_call.1} parent=1 // loop_pre_header
      _
    $region3: #{tpu_custom_call.1} parent=1 // loop_header
      %s22 = sphi 0, %s26
      %p23 = scmp.ge.s32.totalorder %s22, 4
      %s29 = sphi 0, %s41
      %s30 = sphi 0, %s37
      %s31 = sphi 0, %s29
      %s32 = sphi 0, %s30
      %s33 = sphi 0, %s31
      %s34 = sphi 0, %s32
      %s46 = sphi 0, %s48
      %s49 = sphi 0, %s46
      %s50 = sphi 0, %s49
      %s66 = sphi 0, %s50
      %s70 = sphi 0, %s70
      %s72 = sphi 0, %s70
      %s73 = sphi 0, %s72
      %s87 = sphi 0, %s73
      %s91 = sphi 0, %s91
      %s93 = sphi 0, %s91
      %s94 = sphi 0, %s93
      %s108 = sphi 0, %s94
      %s114 = sphi 0, %s116
      %s117 = sphi 0, %s114
      %s118 = sphi 0, %s117
      %s134 = sphi 0, %s118
      %s140 = sphi 0, %s142
      %s143 = sphi 0, %s140
      %s144 = sphi 0, %s143
      %s160 = sphi 0, %s144
      %s168 = sphi 0, %s170
      %s171 = sphi 0, %s168
      %s172 = sphi 0, %s171
      %s188 = sphi 0, %s172
      %s194 = sphi 0, %s196
      %s197 = sphi 0, %s194
      %s198 = sphi 0, %s197
      %s214 = sphi 0, %s198
    $region4: #{tpu_custom_call.1} parent=1 // loop_header_branch
      %25 = sbr.rel (%p23) target = $region8
    $region5: #{tpu_custom_call.1} parent=1 // loop_body
      %s27 = ssub.s32 %s22, 1
      %s28 = ssub.s32 %s22, 2
      %s35 = sadd.s32 1, %s30
      %p36 = scmp.ge.s32.totalorder %s35, 2
      %s37 = scalar_select %p36, 0, %s35
      %s38 = sadd.s32 1, %s29
      %s39 = scalar_select %p36, %s38, %s29
      %p40 = scmp.ge.s32.totalorder %s39, 1
      %s41 = scalar_select %p40, 0, %s39
      %s42 = ssub.s32 %s30, %s37
      %s43 = ssub.s32 %s29, %s41
      %s44 = sor.u32 %s42, %s43
      %p45 = scmp.eq.s32.totalorder %s44, 0
      %s47 = sadd.s32 %s46, 1
      %s48 = scalar_select %p45, %s46, %s47
      %p51 = pneg %p45
      %p52 = scmp.eq.s32.totalorder %s22, 1
      %p53 = por %p51, %p52
      %p54 = scmp.ne.s32.totalorder %s46, %s49
      %p55 = scmp.eq.s32.totalorder %s22, 0
      %p56 = por %p54, %p55
      %p57 = scmp.ne.s32.totalorder %s46, %s49
      %p58 = scmp.eq.s32.totalorder %s27, 1
      %p59 = por %p57, %p58
      %p60 = scmp.ne.s32.totalorder %s49, %s50
      %p61 = scmp.eq.s32.totalorder %s27, 0
      %p62 = por %p60, %p61
      %p63 = scmp.ne.s32.totalorder %s49, %s50
      %p64 = scmp.eq.s32.totalorder %s28, 1
      %p65 = por %p63, %p64
      %p67 = scmp.ne.s32.totalorder %s50, %s66
      %p68 = scmp.eq.s32.totalorder %s28, 0
      %p69 = por %p67, %p68
      %s71 = sadd.s32 %s70, 1
      %p74 = scmp.eq.s32.totalorder %s22, 1
      %p75 = scmp.ne.s32.totalorder %s70, %s72
      %p76 = scmp.eq.s32.totalorder %s22, 0
      %p77 = por %p75, %p76
      %p78 = scmp.ne.s32.totalorder %s70, %s72
      %p79 = scmp.eq.s32.totalorder %s27, 1
      %p80 = por %p78, %p79
      %p81 = scmp.ne.s32.totalorder %s72, %s73
      %p82 = scmp.eq.s32.totalorder %s27, 0
      %p83 = por %p81, %p82
      %p84 = scmp.ne.s32.totalorder %s72, %s73
      %p85 = scmp.eq.s32.totalorder %s28, 1
      %p86 = por %p84, %p85
      %p88 = scmp.ne.s32.totalorder %s73, %s87
      %p89 = scmp.eq.s32.totalorder %s28, 0
      %p90 = por %p88, %p89
      %s92 = sadd.s32 %s91, 1
      %p95 = scmp.eq.s32.totalorder %s22, 1
      %p96 = scmp.ne.s32.totalorder %s91, %s93
      %p97 = scmp.eq.s32.totalorder %s22, 0
      %p98 = por %p96, %p97
      %p99 = scmp.ne.s32.totalorder %s91, %s93
      %p100 = scmp.eq.s32.totalorder %s27, 1
      %p101 = por %p99, %p100
      %p102 = scmp.ne.s32.totalorder %s93, %s94
      %p103 = scmp.eq.s32.totalorder %s27, 0
      %p104 = por %p102, %p103
      %p105 = scmp.ne.s32.totalorder %s93, %s94
      %p106 = scmp.eq.s32.totalorder %s28, 1
      %p107 = por %p105, %p106
      %p109 = scmp.ne.s32.totalorder %s94, %s108
      %p110 = scmp.eq.s32.totalorder %s28, 0
      %p111 = por %p109, %p110
      %s112 = ssub.s32 %s29, %s41
      %p113 = scmp.eq.s32.totalorder %s112, 0
      %s115 = sadd.s32 %s114, 1
      %s116 = scalar_select %p113, %s114, %s115
      %p119 = pneg %p113
      %p120 = scmp.eq.s32.totalorder %s22, 1
      %p121 = por %p119, %p120
      %p122 = scmp.ne.s32.totalorder %s114, %s117
      %p123 = scmp.eq.s32.totalorder %s22, 0
      %p124 = por %p122, %p123
      %p125 = scmp.ne.s32.totalorder %s114, %s117
      %p126 = scmp.eq.s32.totalorder %s27, 1
      %p127 = por %p125, %p126
      %p128 = scmp.ne.s32.totalorder %s117, %s118
      %p129 = scmp.eq.s32.totalorder %s27, 0
      %p130 = por %p128, %p129
      %p131 = scmp.ne.s32.totalorder %s117, %s118
      %p132 = scmp.eq.s32.totalorder %s28, 1
      %p133 = por %p131, %p132
      %p135 = scmp.ne.s32.totalorder %s118, %s134
      %p136 = scmp.eq.s32.totalorder %s28, 0
      %p137 = por %p135, %p136
      %s138 = ssub.s32 %s29, %s41
      %p139 = scmp.eq.s32.totalorder %s138, 0
      %s141 = sadd.s32 %s140, 1
      %s142 = scalar_select %p139, %s140, %s141
      %p145 = pneg %p139
      %p146 = scmp.eq.s32.totalorder %s22, 1
      %p147 = por %p145, %p146
      %p148 = scmp.ne.s32.totalorder %s140, %s143
      %p149 = scmp.eq.s32.totalorder %s22, 0
      %p150 = por %p148, %p149
      %p151 = scmp.ne.s32.totalorder %s140, %s143
      %p152 = scmp.eq.s32.totalorder %s27, 1
      %p153 = por %p151, %p152
      %p154 = scmp.ne.s32.totalorder %s143, %s144
      %p155 = scmp.eq.s32.totalorder %s27, 0
      %p156 = por %p154, %p155
      %p157 = scmp.ne.s32.totalorder %s143, %s144
      %p158 = scmp.eq.s32.totalorder %s28, 1
      %p159 = por %p157, %p158
      %p161 = scmp.ne.s32.totalorder %s144, %s160
      %p162 = scmp.eq.s32.totalorder %s28, 0
      %p163 = por %p161, %p162
      %s164 = ssub.s32 %s30, %s37
      %s165 = ssub.s32 %s29, %s41
      %s166 = sor.u32 %s164, %s165
      %p167 = scmp.eq.s32.totalorder %s166, 0
      %s169 = sadd.s32 %s168, 1
      %s170 = scalar_select %p167, %s168, %s169
      %p173 = pneg %p167
      %p174 = scmp.eq.s32.totalorder %s22, 1
      %p175 = por %p173, %p174
      %p176 = scmp.ne.s32.totalorder %s168, %s171
      %p177 = scmp.eq.s32.totalorder %s22, 0
      %p178 = por %p176, %p177
      %p179 = scmp.ne.s32.totalorder %s168, %s171
      %p180 = scmp.eq.s32.totalorder %s27, 1
      %p181 = por %p179, %p180
      %p182 = scmp.ne.s32.totalorder %s171, %s172
      %p183 = scmp.eq.s32.totalorder %s27, 0
      %p184 = por %p182, %p183
      %p185 = scmp.ne.s32.totalorder %s171, %s172
      %p186 = scmp.eq.s32.totalorder %s28, 1
      %p187 = por %p185, %p186
      %p189 = scmp.ne.s32.totalorder %s172, %s188
      %p190 = scmp.eq.s32.totalorder %s28, 0
      %p191 = por %p189, %p190
      %s192 = ssub.s32 %s29, %s41
      %p193 = scmp.eq.s32.totalorder %s192, 0
      %s195 = sadd.s32 %s194, 1
      %s196 = scalar_select %p193, %s194, %s195
      %p199 = pneg %p193
      %p200 = scmp.eq.s32.totalorder %s22, 1
      %p201 = por %p199, %p200
      %p202 = scmp.ne.s32.totalorder %s194, %s197
      %p203 = scmp.eq.s32.totalorder %s22, 0
      %p204 = por %p202, %p203
      %p205 = scmp.ne.s32.totalorder %s194, %s197
      %p206 = scmp.eq.s32.totalorder %s27, 1
      %p207 = por %p205, %p206
      %p208 = scmp.ne.s32.totalorder %s197, %s198
      %p209 = scmp.eq.s32.totalorder %s27, 0
      %p210 = por %p208, %p209
      %p211 = scmp.ne.s32.totalorder %s197, %s198
      %p212 = scmp.eq.s32.totalorder %s28, 1
      %p213 = por %p211, %p212
      %p215 = scmp.ne.s32.totalorder %s198, %s214
      %p216 = scmp.eq.s32.totalorder %s28, 0
      %p217 = por %p215, %p216
      %p218 = scmp.le.s32.totalorder 1, %s22
      %p219 = scmp.lt.s32.totalorder %s22, 3
      %p220 = pnand %p218, %p219
      %p221 = pneg %p220
      // Predicated region
      $region9: #{tpu_custom_call.1} parent=5 // pred_check
        _
      $region10: #{tpu_custom_call.1} parent=5 // pred_check_branch
        %223 = sbr.rel (%p220) target = $region12
      $region11: #{tpu_custom_call.1} parent=5 // pred_region
        %s224 = ssub.s32 %s22, 1
        // Predicated region
        $region13: #{tpu_custom_call.1} parent=11 // pred_check
          %p225 = pneg %p83
        $region14: #{tpu_custom_call.1} parent=11 // pred_check_branch
          %227 = sbr.rel (%p225) target = $region16
        $region15: #{tpu_custom_call.1} parent=11 // pred_region
          %s229 = ssub.s32 4096, 4096
          %230 = vsyncadd [#allocation9], %s229
          %s231 = sshll.u32 [#allocation8], 4
          %s232 = int_to_ptr.vmem [resolvable:$true] %s231
          %237 = dma.hbm_to_vmem [thread:$0]  %s1, 4096, %s232, [#allocation9], 256, 256, 16
        $region16: #{tpu_custom_call.1} parent=11 // pred_fallthru
          _
        // Predicated region
        $region17: #{tpu_custom_call.1} parent=11 // pred_check
          %p238 = pneg %p104
        $region18: #{tpu_custom_call.1} parent=11 // pred_check_branch
          %240 = sbr.rel (%p238) target = $region20
        $region19: #{tpu_custom_call.1} parent=11 // pred_region
          %s242 = ssub.s32 4096, 4096
          %243 = vsyncadd [#allocation9], %s242
          %s244 = sshll.u32 [#allocation10], 4
          %s245 = int_to_ptr.vmem [resolvable:$true] %s244
          %250 = dma.hbm_to_vmem [thread:$0]  %s2, 4096, %s245, [#allocation9], 256, 256, 16
        $region20: #{tpu_custom_call.1} parent=11 // pred_fallthru
          _
        // Predicated region
        $region21: #{tpu_custom_call.1} parent=11 // pred_check
          %p251 = pneg %p130
        $region22: #{tpu_custom_call.1} parent=11 // pred_check_branch
          %253 = sbr.rel (%p251) target = $region24
        $region23: #{tpu_custom_call.1} parent=11 // pred_region
          %s254 = smul.u32 2, %s31
          %s256 = ssub.s32 256, 256
          %257 = vsyncadd [#allocation12], %s256
          %s258 = smul.addr %s254, 128
          %s259 = scalar_lea.hbm %s3, %s258
          %s260 = sshll.u32 [#allocation11], 4
          %s261 = int_to_ptr.vmem [resolvable:$true] %s260
          %266 = dma.hbm_to_vmem [thread:$0]  %s259, 256, %s261, [#allocation12], 128, 128, 8
        $region24: #{tpu_custom_call.1} parent=11 // pred_fallthru
          _
        // Predicated region
        $region25: #{tpu_custom_call.1} parent=11 // pred_check
          %p267 = pneg %p156
        $region26: #{tpu_custom_call.1} parent=11 // pred_check_branch
          %269 = sbr.rel (%p267) target = $region28
        $region27: #{tpu_custom_call.1} parent=11 // pred_region
          %s270 = smul.u32 2, %s31
          %s272 = ssub.s32 256, 256
          %273 = vsyncadd [#allocation12], %s272
          %s274 = smul.addr %s270, 128
          %s275 = scalar_lea.hbm %s4, %s274
          %s276 = sshll.u32 [#allocation13], 4
          %s277 = int_to_ptr.vmem [resolvable:$true] %s276
          %282 = dma.hbm_to_vmem [thread:$0]  %s275, 256, %s277, [#allocation12], 128, 128, 8
        $region28: #{tpu_custom_call.1} parent=11 // pred_fallthru
          _
      $region12: #{tpu_custom_call.1} parent=5 // pred_fallthru
        _
      %p283 = scmp.lt.s32.totalorder %s22, 2
      // Predicated region
      $region29: #{tpu_custom_call.1} parent=5 // pred_check
        %p284 = pneg %p283
      $region30: #{tpu_custom_call.1} parent=5 // pred_check_branch
        %286 = sbr.rel (%p284) target = $region32
      $region31: #{tpu_custom_call.1} parent=5 // pred_region
        // Predicated region
        $region33: #{tpu_custom_call.1} parent=31 // pred_check
          %p287 = pneg %p56
        $region34: #{tpu_custom_call.1} parent=31 // pred_check_branch
          %289 = sbr.rel (%p287) target = $region36
        $region35: #{tpu_custom_call.1} parent=31 // pred_region
          %s290 = sand.u32 %s46, 1
          %s291 = scalar_lea.sflag [#allocation6], %s290
          %s292 = sand.u32 %s46, 1
          %s293 = smul.addr %s292, 256
          %s294 = scalar_lea.vmem [#allocation5], %s293
          %s295 = smul.u32 8, %s30
          %s296 = smul.u32 2, %s29
          %s298 = ssub.s32 4096, 4096
          %299 = vsyncadd %s291, %s298
          %s300 = smul.addr %s296, 4
          %s301 = smul.addr %s295, 8
          %s302 = sadd.s32 %s300, %s301
          %s303 = smul.addr %s302, 64
          %s304 = scalar_lea.hbm %s0, %s303
          %s305 = sshll.u32 %s294, 4
          %s306 = int_to_ptr.vmem [resolvable:$true] %s305
          %311 = dma.hbm_to_vmem [thread:$0]  %s304, 4096, %s306, %s291, 256, 256, 16
        $region36: #{tpu_custom_call.1} parent=31 // pred_fallthru
          _
      $region32: #{tpu_custom_call.1} parent=5 // pred_fallthru
        _
      %p312 = scmp.le.s32.totalorder 1, %s22
      %p313 = scmp.lt.s32.totalorder %s22, 3
      %p314 = pnand %p312, %p313
      %p315 = pneg %p314
      // Predicated region
      $region37: #{tpu_custom_call.1} parent=5 // pred_check
        _
      $region38: #{tpu_custom_call.1} parent=5 // pred_check_branch
        %317 = sbr.rel (%p314) target = $region40
      $region39: #{tpu_custom_call.1} parent=5 // pred_region
        %s318 = ssub.s32 %s22, 1
        %s319 = sand.u32 %s49, 1
        %s320 = scalar_lea.sflag [#allocation6], %s319
        %s321 = sand.u32 %s49, 1
        %s322 = smul.addr %s321, 256
        %s323 = scalar_lea.vmem [#allocation5], %s322
        // Predicated region
        $region41: #{tpu_custom_call.1} parent=39 // pred_check
          %p324 = pneg %p62
        $region42: #{tpu_custom_call.1} parent=39 // pred_check_branch
          %326 = sbr.rel (%p324) target = $region44
        $region43: #{tpu_custom_call.1} parent=39 // pred_region
          %327 = dma.done %s320, 4096
        $region44: #{tpu_custom_call.1} parent=39 // pred_fallthru
          _
        // Predicated region
        $region45: #{tpu_custom_call.1} parent=39 // pred_check
          %p328 = pneg %p83
        $region46: #{tpu_custom_call.1} parent=39 // pred_check_branch
          %330 = sbr.rel (%p328) target = $region48
        $region47: #{tpu_custom_call.1} parent=39 // pred_region
          %331 = dma.done [#allocation9], 4096
        $region48: #{tpu_custom_call.1} parent=39 // pred_fallthru
          _
        // Predicated region
        $region49: #{tpu_custom_call.1} parent=39 // pred_check
          %p332 = pneg %p104
        $region50: #{tpu_custom_call.1} parent=39 // pred_check_branch
          %334 = sbr.rel (%p332) target = $region52
        $region51: #{tpu_custom_call.1} parent=39 // pred_region
          %335 = dma.done [#allocation9], 4096
        $region52: #{tpu_custom_call.1} parent=39 // pred_fallthru
          _
        // Predicated region
        $region53: #{tpu_custom_call.1} parent=39 // pred_check
          %p336 = pneg %p130
        $region54: #{tpu_custom_call.1} parent=39 // pred_check_branch
          %338 = sbr.rel (%p336) target = $region56
        $region55: #{tpu_custom_call.1} parent=39 // pred_region
          %339 = dma.done [#allocation12], 256
        $region56: #{tpu_custom_call.1} parent=39 // pred_fallthru
          _
        // Predicated region
        $region57: #{tpu_custom_call.1} parent=39 // pred_check
          %p340 = pneg %p156
        $region58: #{tpu_custom_call.1} parent=39 // pred_check_branch
          %342 = sbr.rel (%p340) target = $region60
        $region59: #{tpu_custom_call.1} parent=39 // pred_region
          %343 = dma.done [#allocation12], 256
        $region60: #{tpu_custom_call.1} parent=39 // pred_fallthru
          _
        %s344 = sand.u32 %s49, 1
        %s345 = scalar_lea.sflag [#allocation6], %s344
        %s346 = sand.u32 %s49, 1
        %s347 = smul.addr %s346, 256
        %s348 = scalar_lea.vmem [#allocation5], %s347
        %p349 = pneg %p62
        %p350 = pneg %p59
        %p351 = pneg %p83
        %p352 = pneg %p80
        %p353 = pneg %p104
        %p354 = pneg %p101
        %p355 = pneg %p130
        %p356 = pneg %p127
        %p357 = pneg %p156
        %p358 = pneg %p153
        %p359 = pneg %p184
        %p360 = pneg %p181
        %s361 = sand.u32 %s171, 1
        %s362 = scalar_lea.sflag [#allocation7], %s361
        %s363 = sand.u32 %s171, 1
        %s364 = smul.addr %s363, 128
        %s365 = scalar_lea.vmem [#allocation14], %s364
        %p366 = pneg %p210
        %p367 = pneg %p207
        %s368 = smul.u32 8, %s32
        %s369 = smul.u32 2, %s31
        %s370 = smul.u32 2, %s31
        %s371 = smul.u32 2, %s31
        %s372 = smul.u32 8, %s32
        %s373 = smul.u32 2, %s31
        %s374 = smul.u32 2, %s31
        %p376 = scmp.eq.s32.totalorder %s32, 0
        // Predicated region
        $region61: #{tpu_custom_call.1} parent=39 // pred_check
          %p377 = pneg %p376
        $region62: #{tpu_custom_call.1} parent=39 // pred_check_branch
          %379 = sbr.rel (%p377) target = $region64
        $region63: #{tpu_custom_call.1} parent=39 // pred_region
          %v380 = vld [vmem:[#allocation8] sm:$0xff]
          %v381 = vld [vmem:[#allocation8 + $0x8] sm:$0xff]
          %v382 = vld [vmem:[#allocation8 + $0x10] sm:$0xff]
          %v383 = vld [vmem:[#allocation8 + $0x18] sm:$0xff]
          %v384 = vld [vmem:[#allocation8 + $0x20] sm:$0xff]
          %v385 = vld [vmem:[#allocation8 + $0x28] sm:$0xff]
          %v386 = vld [vmem:[#allocation8 + $0x30] sm:$0xff]
          %v387 = vld [vmem:[#allocation8 + $0x38] sm:$0xff]
          %v388 = vld [vmem:[#allocation8 + $0x40] sm:$0xff]
          %v389 = vld [vmem:[#allocation8 + $0x48] sm:$0xff]
          %v390 = vld [vmem:[#allocation8 + $0x50] sm:$0xff]
          %v391 = vld [vmem:[#allocation8 + $0x58] sm:$0xff]
          %v392 = vld [vmem:[#allocation8 + $0x60] sm:$0xff]
          %v393 = vld [vmem:[#allocation8 + $0x68] sm:$0xff]
          %v394 = vld [vmem:[#allocation8 + $0x70] sm:$0xff]
          %v395 = vld [vmem:[#allocation8 + $0x78] sm:$0xff]
          %v396 = vld [vmem:[#allocation8 + $0x80] sm:$0xff]
          %v397 = vld [vmem:[#allocation8 + $0x88] sm:$0xff]
          %v398 = vld [vmem:[#allocation8 + $0x90] sm:$0xff]
          %v399 = vld [vmem:[#allocation8 + $0x98] sm:$0xff]
          %v400 = vld [vmem:[#allocation8 + $0xa0] sm:$0xff]
          %v401 = vld [vmem:[#allocation8 + $0xa8] sm:$0xff]
          %v402 = vld [vmem:[#allocation8 + $0xb0] sm:$0xff]
          %v403 = vld [vmem:[#allocation8 + $0xb8] sm:$0xff]
          %v404 = vld [vmem:[#allocation8 + $0xc0] sm:$0xff]
          %v405 = vld [vmem:[#allocation8 + $0xc8] sm:$0xff]
          %v406 = vld [vmem:[#allocation8 + $0xd0] sm:$0xff]
          %v407 = vld [vmem:[#allocation8 + $0xd8] sm:$0xff]
          %v408 = vld [vmem:[#allocation8 + $0xe0] sm:$0xff]
          %v409 = vld [vmem:[#allocation8 + $0xe8] sm:$0xff]
          %v410 = vld [vmem:[#allocation8 + $0xf0] sm:$0xff]
          %v411 = vld [vmem:[#allocation8 + $0xf8] sm:$0xff]
          %v412 = vunpack.c.l.bf16 %v380
          %v413 = vunpack.c.h.bf16 %v380
          %v414 = vunpack.c.l.bf16 %v381
          %v415 = vunpack.c.h.bf16 %v381
          %v416 = vunpack.c.l.bf16 %v382
          %v417 = vunpack.c.h.bf16 %v382
          %v418 = vunpack.c.l.bf16 %v383
          %v419 = vunpack.c.h.bf16 %v383
          %v420 = vunpack.c.l.bf16 %v384
          %v421 = vunpack.c.h.bf16 %v384
          %v422 = vunpack.c.l.bf16 %v385
          %v423 = vunpack.c.h.bf16 %v385
          %v424 = vunpack.c.l.bf16 %v386
          %v425 = vunpack.c.h.bf16 %v386
          %v426 = vunpack.c.l.bf16 %v387
          %v427 = vunpack.c.h.bf16 %v387
          %v428 = vunpack.c.l.bf16 %v388
          %v429 = vunpack.c.h.bf16 %v388
          %v430 = vunpack.c.l.bf16 %v389
          %v431 = vunpack.c.h.bf16 %v389
          %v432 = vunpack.c.l.bf16 %v390
          %v433 = vunpack.c.h.bf16 %v390
          %v434 = vunpack.c.l.bf16 %v391
          %v435 = vunpack.c.h.bf16 %v391
          %v436 = vunpack.c.l.bf16 %v392
          %v437 = vunpack.c.h.bf16 %v392
          %v438 = vunpack.c.l.bf16 %v393
          %v439 = vunpack.c.h.bf16 %v393
          %v440 = vunpack.c.l.bf16 %v394
          %v441 = vunpack.c.h.bf16 %v394
          %v442 = vunpack.c.l.bf16 %v395
          %v443 = vunpack.c.h.bf16 %v395
          %v444 = vunpack.c.l.bf16 %v396
          %v445 = vunpack.c.h.bf16 %v396
          %v446 = vunpack.c.l.bf16 %v397
          %v447 = vunpack.c.h.bf16 %v397
          %v448 = vunpack.c.l.bf16 %v398
          %v449 = vunpack.c.h.bf16 %v398
          %v450 = vunpack.c.l.bf16 %v399
          %v451 = vunpack.c.h.bf16 %v399
          %v452 = vunpack.c.l.bf16 %v400
          %v453 = vunpack.c.h.bf16 %v400
          %v454 = vunpack.c.l.bf16 %v401
          %v455 = vunpack.c.h.bf16 %v401
          %v456 = vunpack.c.l.bf16 %v402
          %v457 = vunpack.c.h.bf16 %v402
          %v458 = vunpack.c.l.bf16 %v403
          %v459 = vunpack.c.h.bf16 %v403
          %v460 = vunpack.c.l.bf16 %v404
          %v461 = vunpack.c.h.bf16 %v404
          %v462 = vunpack.c.l.bf16 %v405
          %v463 = vunpack.c.h.bf16 %v405
          %v464 = vunpack.c.l.bf16 %v406
          %v465 = vunpack.c.h.bf16 %v406
          %v466 = vunpack.c.l.bf16 %v407
          %v467 = vunpack.c.h.bf16 %v407
          %v468 = vunpack.c.l.bf16 %v408
          %v469 = vunpack.c.h.bf16 %v408
          %v470 = vunpack.c.l.bf16 %v409
          %v471 = vunpack.c.h.bf16 %v409
          %v472 = vunpack.c.l.bf16 %v410
          %v473 = vunpack.c.h.bf16 %v410
          %v474 = vunpack.c.l.bf16 %v411
          %v475 = vunpack.c.h.bf16 %v411
          %v476 = vld [vmem:[#allocation10] sm:$0xff]
          %v477 = vld [vmem:[#allocation10 + $0x8] sm:$0xff]
          %v478 = vld [vmem:[#allocation10 + $0x10] sm:$0xff]
          %v479 = vld [vmem:[#allocation10 + $0x18] sm:$0xff]
          %v480 = vld [vmem:[#allocation10 + $0x20] sm:$0xff]
          %v481 = vld [vmem:[#allocation10 + $0x28] sm:$0xff]
          %v482 = vld [vmem:[#allocation10 + $0x30] sm:$0xff]
          %v483 = vld [vmem:[#allocation10 + $0x38] sm:$0xff]
          %v484 = vld [vmem:[#allocation10 + $0x40] sm:$0xff]
          %v485 = vld [vmem:[#allocation10 + $0x48] sm:$0xff]
          %v486 = vld [vmem:[#allocation10 + $0x50] sm:$0xff]
          %v487 = vld [vmem:[#allocation10 + $0x58] sm:$0xff]
          %v488 = vld [vmem:[#allocation10 + $0x60] sm:$0xff]
          %v489 = vld [vmem:[#allocation10 + $0x68] sm:$0xff]
          %v490 = vld [vmem:[#allocation10 + $0x70] sm:$0xff]
          %v491 = vld [vmem:[#allocation10 + $0x78] sm:$0xff]
          %v492 = vld [vmem:[#allocation10 + $0x80] sm:$0xff]
          %v493 = vld [vmem:[#allocation10 + $0x88] sm:$0xff]
          %v494 = vld [vmem:[#allocation10 + $0x90] sm:$0xff]
          %v495 = vld [vmem:[#allocation10 + $0x98] sm:$0xff]
          %v496 = vld [vmem:[#allocation10 + $0xa0] sm:$0xff]
          %v497 = vld [vmem:[#allocation10 + $0xa8] sm:$0xff]
          %v498 = vld [vmem:[#allocation10 + $0xb0] sm:$0xff]
          %v499 = vld [vmem:[#allocation10 + $0xb8] sm:$0xff]
          %v500 = vld [vmem:[#allocation10 + $0xc0] sm:$0xff]
          %v501 = vld [vmem:[#allocation10 + $0xc8] sm:$0xff]
          %v502 = vld [vmem:[#allocation10 + $0xd0] sm:$0xff]
          %v503 = vld [vmem:[#allocation10 + $0xd8] sm:$0xff]
          %v504 = vld [vmem:[#allocation10 + $0xe0] sm:$0xff]
          %v505 = vld [vmem:[#allocation10 + $0xe8] sm:$0xff]
          %v506 = vld [vmem:[#allocation10 + $0xf0] sm:$0xff]
          %v507 = vld [vmem:[#allocation10 + $0xf8] sm:$0xff]
          %v508 = vunpack.c.l.bf16 %v476
          %v509 = vunpack.c.h.bf16 %v476
          %v510 = vunpack.c.l.bf16 %v477
          %v511 = vunpack.c.h.bf16 %v477
          %v512 = vunpack.c.l.bf16 %v478
          %v513 = vunpack.c.h.bf16 %v478
          %v514 = vunpack.c.l.bf16 %v479
          %v515 = vunpack.c.h.bf16 %v479
          %v516 = vunpack.c.l.bf16 %v480
          %v517 = vunpack.c.h.bf16 %v480
          %v518 = vunpack.c.l.bf16 %v481
          %v519 = vunpack.c.h.bf16 %v481
          %v520 = vunpack.c.l.bf16 %v482
          %v521 = vunpack.c.h.bf16 %v482
          %v522 = vunpack.c.l.bf16 %v483
          %v523 = vunpack.c.h.bf16 %v483
          %v524 = vunpack.c.l.bf16 %v484
          %v525 = vunpack.c.h.bf16 %v484
          %v526 = vunpack.c.l.bf16 %v485
          %v527 = vunpack.c.h.bf16 %v485
          %v528 = vunpack.c.l.bf16 %v486
          %v529 = vunpack.c.h.bf16 %v486
          %v530 = vunpack.c.l.bf16 %v487
          %v531 = vunpack.c.h.bf16 %v487
          %v532 = vunpack.c.l.bf16 %v488
          %v533 = vunpack.c.h.bf16 %v488
          %v534 = vunpack.c.l.bf16 %v489
          %v535 = vunpack.c.h.bf16 %v489
          %v536 = vunpack.c.l.bf16 %v490
          %v537 = vunpack.c.h.bf16 %v490
          %v538 = vunpack.c.l.bf16 %v491
          %v539 = vunpack.c.h.bf16 %v491
          %v540 = vunpack.c.l.bf16 %v492
          %v541 = vunpack.c.h.bf16 %v492
          %v542 = vunpack.c.l.bf16 %v493
          %v543 = vunpack.c.h.bf16 %v493
          %v544 = vunpack.c.l.bf16 %v494
          %v545 = vunpack.c.h.bf16 %v494
          %v546 = vunpack.c.l.bf16 %v495
          %v547 = vunpack.c.h.bf16 %v495
          %v548 = vunpack.c.l.bf16 %v496
          %v549 = vunpack.c.h.bf16 %v496
          %v550 = vunpack.c.l.bf16 %v497
          %v551 = vunpack.c.h.bf16 %v497
          %v552 = vunpack.c.l.bf16 %v498
          %v553 = vunpack.c.h.bf16 %v498
          %v554 = vunpack.c.l.bf16 %v499
          %v555 = vunpack.c.h.bf16 %v499
          %v556 = vunpack.c.l.bf16 %v500
          %v557 = vunpack.c.h.bf16 %v500
          %v558 = vunpack.c.l.bf16 %v501
          %v559 = vunpack.c.h.bf16 %v501
          %v560 = vunpack.c.l.bf16 %v502
          %v561 = vunpack.c.h.bf16 %v502
          %v562 = vunpack.c.l.bf16 %v503
          %v563 = vunpack.c.h.bf16 %v503
          %v564 = vunpack.c.l.bf16 %v504
          %v565 = vunpack.c.h.bf16 %v504
          %v566 = vunpack.c.l.bf16 %v505
          %v567 = vunpack.c.h.bf16 %v505
          %v568 = vunpack.c.l.bf16 %v506
          %v569 = vunpack.c.h.bf16 %v506
          %v570 = vunpack.c.l.bf16 %v507
          %v571 = vunpack.c.h.bf16 %v507
          %v572 = vmul.f32 %v412, %v508
          %v573 = vmul.f32 %v413, %v509
          %v574 = vmul.f32 %v414, %v510
          %v575 = vmul.f32 %v415, %v511
          %v576 = vmul.f32 %v416, %v512
          %v577 = vmul.f32 %v417, %v513
          %v578 = vmul.f32 %v418, %v514
          %v579 = vmul.f32 %v419, %v515
          %v580 = vmul.f32 %v420, %v516
          %v581 = vmul.f32 %v421, %v517
          %v582 = vmul.f32 %v422, %v518
          %v583 = vmul.f32 %v423, %v519
          %v584 = vmul.f32 %v424, %v520
          %v585 = vmul.f32 %v425, %v521
          %v586 = vmul.f32 %v426, %v522
          %v587 = vmul.f32 %v427, %v523
          %v588 = vmul.f32 %v428, %v524
          %v589 = vmul.f32 %v429, %v525
          %v590 = vmul.f32 %v430, %v526
          %v591 = vmul.f32 %v431, %v527
          %v592 = vmul.f32 %v432, %v528
          %v593 = vmul.f32 %v433, %v529
          %v594 = vmul.f32 %v434, %v530
          %v595 = vmul.f32 %v435, %v531
          %v596 = vmul.f32 %v436, %v532
          %v597 = vmul.f32 %v437, %v533
          %v598 = vmul.f32 %v438, %v534
          %v599 = vmul.f32 %v439, %v535
          %v600 = vmul.f32 %v440, %v536
          %v601 = vmul.f32 %v441, %v537
          %v602 = vmul.f32 %v442, %v538
          %v603 = vmul.f32 %v443, %v539
          %v604 = vmul.f32 %v444, %v540
          %v605 = vmul.f32 %v445, %v541
          %v606 = vmul.f32 %v446, %v542
          %v607 = vmul.f32 %v447, %v543
          %v608 = vmul.f32 %v448, %v544
          %v609 = vmul.f32 %v449, %v545
          %v610 = vmul.f32 %v450, %v546
          %v611 = vmul.f32 %v451, %v547
          %v612 = vmul.f32 %v452, %v548
          %v613 = vmul.f32 %v453, %v549
          %v614 = vmul.f32 %v454, %v550
          %v615 = vmul.f32 %v455, %v551
          %v616 = vmul.f32 %v456, %v552
          %v617 = vmul.f32 %v457, %v553
          %v618 = vmul.f32 %v458, %v554
          %v619 = vmul.f32 %v459, %v555
          %v620 = vmul.f32 %v460, %v556
          %v621 = vmul.f32 %v461, %v557
          %v622 = vmul.f32 %v462, %v558
          %v623 = vmul.f32 %v463, %v559
          %v624 = vmul.f32 %v464, %v560
          %v625 = vmul.f32 %v465, %v561
          %v626 = vmul.f32 %v466, %v562
          %v627 = vmul.f32 %v467, %v563
          %v628 = vmul.f32 %v468, %v564
          %v629 = vmul.f32 %v469, %v565
          %v630 = vmul.f32 %v470, %v566
          %v631 = vmul.f32 %v471, %v567
          %v632 = vmul.f32 %v472, %v568
          %v633 = vmul.f32 %v473, %v569
          %v634 = vmul.f32 %v474, %v570
          %v635 = vmul.f32 %v475, %v571
          %v636 = vmul.f32 %v572, 2.0
          %v637 = vmul.f32 %v573, 2.0
          %v638 = vmul.f32 %v574, 2.0
          %v639 = vmul.f32 %v575, 2.0
          %v640 = vmul.f32 %v576, 2.0
          %v641 = vmul.f32 %v577, 2.0
          %v642 = vmul.f32 %v578, 2.0
          %v643 = vmul.f32 %v579, 2.0
          %v644 = vmul.f32 %v580, 2.0
          %v645 = vmul.f32 %v581, 2.0
          %v646 = vmul.f32 %v582, 2.0
          %v647 = vmul.f32 %v583, 2.0
          %v648 = vmul.f32 %v584, 2.0
          %v649 = vmul.f32 %v585, 2.0
          %v650 = vmul.f32 %v586, 2.0
          %v651 = vmul.f32 %v587, 2.0
          %v652 = vmul.f32 %v588, 2.0
          %v653 = vmul.f32 %v589, 2.0
          %v654 = vmul.f32 %v590, 2.0
          %v655 = vmul.f32 %v591, 2.0
          %v656 = vmul.f32 %v592, 2.0
          %v657 = vmul.f32 %v593, 2.0
          %v658 = vmul.f32 %v594, 2.0
          %v659 = vmul.f32 %v595, 2.0
          %v660 = vmul.f32 %v596, 2.0
          %v661 = vmul.f32 %v597, 2.0
          %v662 = vmul.f32 %v598, 2.0
          %v663 = vmul.f32 %v599, 2.0
          %v664 = vmul.f32 %v600, 2.0
          %v665 = vmul.f32 %v601, 2.0
          %v666 = vmul.f32 %v602, 2.0
          %v667 = vmul.f32 %v603, 2.0
          %v668 = vmul.f32 %v604, 2.0
          %v669 = vmul.f32 %v605, 2.0
          %v670 = vmul.f32 %v606, 2.0
          %v671 = vmul.f32 %v607, 2.0
          %v672 = vmul.f32 %v608, 2.0
          %v673 = vmul.f32 %v609, 2.0
          %v674 = vmul.f32 %v610, 2.0
          %v675 = vmul.f32 %v611, 2.0
          %v676 = vmul.f32 %v612, 2.0
          %v677 = vmul.f32 %v613, 2.0
          %v678 = vmul.f32 %v614, 2.0
          %v679 = vmul.f32 %v615, 2.0
          %v680 = vmul.f32 %v616, 2.0
          %v681 = vmul.f32 %v617, 2.0
          %v682 = vmul.f32 %v618, 2.0
          %v683 = vmul.f32 %v619, 2.0
          %v684 = vmul.f32 %v620, 2.0
          %v685 = vmul.f32 %v621, 2.0
          %v686 = vmul.f32 %v622, 2.0
          %v687 = vmul.f32 %v623, 2.0
          %v688 = vmul.f32 %v624, 2.0
          %v689 = vmul.f32 %v625, 2.0
          %v690 = vmul.f32 %v626, 2.0
          %v691 = vmul.f32 %v627, 2.0
          %v692 = vmul.f32 %v628, 2.0
          %v693 = vmul.f32 %v629, 2.0
          %v694 = vmul.f32 %v630, 2.0
          %v695 = vmul.f32 %v631, 2.0
          %v696 = vmul.f32 %v632, 2.0
          %v697 = vmul.f32 %v633, 2.0
          %v698 = vmul.f32 %v634, 2.0
          %v699 = vmul.f32 %v635, 2.0
          %v700 = vpack.c.bf16 %v640, %v636
          %v701 = vpack.c.bf16 %v641, %v637
          %v702 = vpack.c.bf16 %v642, %v638
          %v703 = vpack.c.bf16 %v643, %v639
          %v704 = vpack.c.bf16 %v648, %v644
          %v705 = vpack.c.bf16 %v649, %v645
          %v706 = vpack.c.bf16 %v650, %v646
          %v707 = vpack.c.bf16 %v651, %v647
          %v708 = vpack.c.bf16 %v656, %v652
          %v709 = vpack.c.bf16 %v657, %v653
          %v710 = vpack.c.bf16 %v658, %v654
          %v711 = vpack.c.bf16 %v659, %v655
          %v712 = vpack.c.bf16 %v664, %v660
          %v713 = vpack.c.bf16 %v665, %v661
          %v714 = vpack.c.bf16 %v666, %v662
          %v715 = vpack.c.bf16 %v667, %v663
          %v716 = vpack.c.bf16 %v672, %v668
          %v717 = vpack.c.bf16 %v673, %v669
          %v718 = vpack.c.bf16 %v674, %v670
          %v719 = vpack.c.bf16 %v675, %v671
          %v720 = vpack.c.bf16 %v680, %v676
          %v721 = vpack.c.bf16 %v681, %v677
          %v722 = vpack.c.bf16 %v682, %v678
          %v723 = vpack.c.bf16 %v683, %v679
          %v724 = vpack.c.bf16 %v688, %v684
          %v725 = vpack.c.bf16 %v689, %v685
          %v726 = vpack.c.bf16 %v690, %v686
          %v727 = vpack.c.bf16 %v691, %v687
          %v728 = vpack.c.bf16 %v696, %v692
          %v729 = vpack.c.bf16 %v697, %v693
          %v730 = vpack.c.bf16 %v698, %v694
          %v731 = vpack.c.bf16 %v699, %v695
          %732 = vst [vmem:[#allocation4] sm:$0xff] %v700
          %733 = vst [vmem:[#allocation4 + $0x8] sm:$0xff] %v701
          %734 = vst [vmem:[#allocation4 + $0x10] sm:$0xff] %v702
          %735 = vst [vmem:[#allocation4 + $0x18] sm:$0xff] %v703
          %736 = vst [vmem:[#allocation4 + $0x20] sm:$0xff] %v704
          %737 = vst [vmem:[#allocation4 + $0x28] sm:$0xff] %v705
          %738 = vst [vmem:[#allocation4 + $0x30] sm:$0xff] %v706
          %739 = vst [vmem:[#allocation4 + $0x38] sm:$0xff] %v707
          %740 = vst [vmem:[#allocation4 + $0x40] sm:$0xff] %v708
          %741 = vst [vmem:[#allocation4 + $0x48] sm:$0xff] %v709
          %742 = vst [vmem:[#allocation4 + $0x50] sm:$0xff] %v710
          %743 = vst [vmem:[#allocation4 + $0x58] sm:$0xff] %v711
          %744 = vst [vmem:[#allocation4 + $0x60] sm:$0xff] %v712
          %745 = vst [vmem:[#allocation4 + $0x68] sm:$0xff] %v713
          %746 = vst [vmem:[#allocation4 + $0x70] sm:$0xff] %v714
          %747 = vst [vmem:[#allocation4 + $0x78] sm:$0xff] %v715
          %748 = vst [vmem:[#allocation4 + $0x80] sm:$0xff] %v716
          %749 = vst [vmem:[#allocation4 + $0x88] sm:$0xff] %v717
          %750 = vst [vmem:[#allocation4 + $0x90] sm:$0xff] %v718
          %751 = vst [vmem:[#allocation4 + $0x98] sm:$0xff] %v719
          %752 = vst [vmem:[#allocation4 + $0xa0] sm:$0xff] %v720
          %753 = vst [vmem:[#allocation4 + $0xa8] sm:$0xff] %v721
          %754 = vst [vmem:[#allocation4 + $0xb0] sm:$0xff] %v722
          %755 = vst [vmem:[#allocation4 + $0xb8] sm:$0xff] %v723
          %756 = vst [vmem:[#allocation4 + $0xc0] sm:$0xff] %v724
          %757 = vst [vmem:[#allocation4 + $0xc8] sm:$0xff] %v725
          %758 = vst [vmem:[#allocation4 + $0xd0] sm:$0xff] %v726
          %759 = vst [vmem:[#allocation4 + $0xd8] sm:$0xff] %v727
          %760 = vst [vmem:[#allocation4 + $0xe0] sm:$0xff] %v728
          %761 = vst [vmem:[#allocation4 + $0xe8] sm:$0xff] %v729
          %762 = vst [vmem:[#allocation4 + $0xf0] sm:$0xff] %v730
          %763 = vst [vmem:[#allocation4 + $0xf8] sm:$0xff] %v731
          %v764 = vld [vmem:[#allocation11] sm:$0xff]
          %v765 = vld [vmem:[#allocation11 + $0x8] sm:$0xff]
          %v766 = vpack.c.bf16 %v765, %v764
          %767 = vst [vmem:[#allocation2] sm:$0xff] %v766
          %v768 = vld [vmem:[#allocation13] sm:$0xff]
          %v769 = vld [vmem:[#allocation13 + $0x8] sm:$0xff]
          %770 = vst [vmem:[#allocation3] sm:$0xff] %v768
          %771 = vst [vmem:[#allocation3 + $0x8] sm:$0xff] %v769
        $region64: #{tpu_custom_call.1} parent=39 // pred_fallthru
          _
        %v772 = vld [vmem:[#allocation2] sm:$0xff]
        %v773 = vld [vmem:[#allocation4] sm:$0xff]
        %v774 = vld [vmem:[#allocation4 + $0x8] sm:$0xff]
        %v775 = vld [vmem:[#allocation4 + $0x10] sm:$0xff]
        %v776 = vld [vmem:[#allocation4 + $0x18] sm:$0xff]
        %v777 = vld [vmem:[#allocation4 + $0x20] sm:$0xff]
        %v778 = vld [vmem:[#allocation4 + $0x28] sm:$0xff]
        %v779 = vld [vmem:[#allocation4 + $0x30] sm:$0xff]
        %v780 = vld [vmem:[#allocation4 + $0x38] sm:$0xff]
        %v781 = vld [vmem:[#allocation4 + $0x40] sm:$0xff]
        %v782 = vld [vmem:[#allocation4 + $0x48] sm:$0xff]
        %v783 = vld [vmem:[#allocation4 + $0x50] sm:$0xff]
        %v784 = vld [vmem:[#allocation4 + $0x58] sm:$0xff]
        %v785 = vld [vmem:[#allocation4 + $0x60] sm:$0xff]
        %v786 = vld [vmem:[#allocation4 + $0x68] sm:$0xff]
        %v787 = vld [vmem:[#allocation4 + $0x70] sm:$0xff]
        %v788 = vld [vmem:[#allocation4 + $0x78] sm:$0xff]
        %v789 = vld [vmem:[#allocation4 + $0x80] sm:$0xff]
        %v790 = vld [vmem:[#allocation4 + $0x88] sm:$0xff]
        %v791 = vld [vmem:[#allocation4 + $0x90] sm:$0xff]
        %v792 = vld [vmem:[#allocation4 + $0x98] sm:$0xff]
        %v793 = vld [vmem:[#allocation4 + $0xa0] sm:$0xff]
        %v794 = vld [vmem:[#allocation4 + $0xa8] sm:$0xff]
        %v795 = vld [vmem:[#allocation4 + $0xb0] sm:$0xff]
        %v796 = vld [vmem:[#allocation4 + $0xb8] sm:$0xff]
        %v797 = vld [vmem:[#allocation4 + $0xc0] sm:$0xff]
        %v798 = vld [vmem:[#allocation4 + $0xc8] sm:$0xff]
        %v799 = vld [vmem:[#allocation4 + $0xd0] sm:$0xff]
        %v800 = vld [vmem:[#allocation4 + $0xd8] sm:$0xff]
        %v801 = vld [vmem:[#allocation4 + $0xe0] sm:$0xff]
        %v802 = vld [vmem:[#allocation4 + $0xe8] sm:$0xff]
        %v803 = vld [vmem:[#allocation4 + $0xf0] sm:$0xff]
        %v804 = vld [vmem:[#allocation4 + $0xf8] sm:$0xff]
        %805 = vmatprep.subr.bf16.mxu0 %v774
        %806 = vmatpush1.bf16.msra.mxu0 %v773
        %807 = vmatprep.subr.bf16.mxu0 %v778
        %808 = vmatpush1.bf16.msra.mxu0 %v777
        %809 = vmatprep.subr.bf16.mxu0 %v782
        %810 = vmatpush1.bf16.msra.mxu0 %v781
        %811 = vmatprep.subr.bf16.mxu0 %v786
        %812 = vmatpush1.bf16.msra.mxu0 %v785
        %813 = vmatprep.subr.bf16.mxu0 %v790
        %814 = vmatpush1.bf16.msra.mxu0 %v789
        %815 = vmatprep.subr.bf16.mxu0 %v794
        %816 = vmatpush1.bf16.msra.mxu0 %v793
        %817 = vmatprep.subr.bf16.mxu0 %v798
        %818 = vmatpush1.bf16.msra.mxu0 %v797
        %819 = vmatprep.subr.bf16.mxu0 %v802
        %820 = vmatpush1.bf16.msra.mxu0 %v801
        %821 = vmatprep.subr.bf16.mxu0 0
        %822 = vmatpush1.bf16.msra.mxu0 0
        %823 = vmatprep.subr.bf16.mxu0 0
        %824 = vmatpush1.bf16.msra.mxu0 0
        %825 = vmatprep.subr.bf16.mxu0 0
        %826 = vmatpush1.bf16.msra.mxu0 0
        %827 = vmatprep.subr.bf16.mxu0 0
        %828 = vmatpush1.bf16.msra.mxu0 0
        %829 = vmatprep.subr.bf16.mxu0 0
        %830 = vmatpush1.bf16.msra.mxu0 0
        %831 = vmatprep.subr.bf16.mxu0 0
        %832 = vmatpush1.bf16.msra.mxu0 0
        %833 = vmatprep.subr.bf16.mxu0 0
        %834 = vmatpush1.bf16.msra.mxu0 0
        %835 = vmatprep.subr.bf16.mxu0 0
        %836 = vmatpush1.bf16.msra.mxu0 0
        %837 = vmatprep.mubr.bf16.mxu0 0
        %838 = vmatmul.mubr.bf16.gmra.mrb[0].mxu0 %v772
        %v839 = vpop.f32.mrb[0].mxu0
        %v840 = vadd.f32 0.0, %v839
        %v841 = vpop.f32.mrb[0].mxu0
        %v842 = vadd.f32 0.0, %v841
        %v843 = vpop.f32.mrb[0].mxu0
        %v844 = vadd.f32 0.0, %v843
        %v845 = vpop.f32.mrb[0].mxu0
        %v846 = vadd.f32 0.0, %v845
        %847 = vdwg.mxu0
        %848 = vmatprep.subr.bf16.mxu0 %v776
        %849 = vmatpush1.bf16.msra.mxu0 %v775
        %850 = vmatprep.subr.bf16.mxu0 %v780
        %851 = vmatpush1.bf16.msra.mxu0 %v779
        %852 = vmatprep.subr.bf16.mxu0 %v784
        %853 = vmatpush1.bf16.msra.mxu0 %v783
        %854 = vmatprep.subr.bf16.mxu0 %v788
        %855 = vmatpush1.bf16.msra.mxu0 %v787
        %856 = vmatprep.subr.bf16.mxu0 %v792
        %857 = vmatpush1.bf16.msra.mxu0 %v791
        %858 = vmatprep.subr.bf16.mxu0 %v796
        %859 = vmatpush1.bf16.msra.mxu0 %v795
        %860 = vmatprep.subr.bf16.mxu0 %v800
        %861 = vmatpush1.bf16.msra.mxu0 %v799
        %862 = vmatprep.subr.bf16.mxu0 %v804
        %863 = vmatpush1.bf16.msra.mxu0 %v803
        %864 = vmatprep.subr.bf16.mxu0 0
        %865 = vmatpush1.bf16.msra.mxu0 0
        %866 = vmatprep.subr.bf16.mxu0 0
        %867 = vmatpush1.bf16.msra.mxu0 0
        %868 = vmatprep.subr.bf16.mxu0 0
        %869 = vmatpush1.bf16.msra.mxu0 0
        %870 = vmatprep.subr.bf16.mxu0 0
        %871 = vmatpush1.bf16.msra.mxu0 0
        %872 = vmatprep.subr.bf16.mxu0 0
        %873 = vmatpush1.bf16.msra.mxu0 0
        %874 = vmatprep.subr.bf16.mxu0 0
        %875 = vmatpush1.bf16.msra.mxu0 0
        %876 = vmatprep.subr.bf16.mxu0 0
        %877 = vmatpush1.bf16.msra.mxu0 0
        %878 = vmatprep.subr.bf16.mxu0 0
        %879 = vmatpush1.bf16.msra.mxu0 0
        %880 = vmatprep.mubr.bf16.mxu0 0
        %881 = vmatmul.mubr.bf16.gmra.mrb[0].mxu0 %v772
        %v882 = vpop.f32.mrb[0].mxu0
        %v883 = vadd.f32 0.0, %v882
        %v884 = vpop.f32.mrb[0].mxu0
        %v885 = vadd.f32 0.0, %v884
        %v886 = vpop.f32.mrb[0].mxu0
        %v887 = vadd.f32 0.0, %v886
        %v888 = vpop.f32.mrb[0].mxu0
        %v889 = vadd.f32 0.0, %v888
        %890 = vdwg.mxu0
        %v891 = vld [vmem:[%s323] sm:$0xff]
        %v892 = vld [vmem:[%s323 + $0x8] sm:$0xff]
        %v893 = vld [vmem:[%s323 + $0x10] sm:$0xff]
        %v894 = vld [vmem:[%s323 + $0x18] sm:$0xff]
        %v895 = vunpack.c.l.bf16 %v891
        %v896 = vunpack.c.h.bf16 %v891
        %v897 = vunpack.c.l.bf16 %v892
        %v898 = vunpack.c.h.bf16 %v892
        %v899 = vunpack.c.l.bf16 %v893
        %v900 = vunpack.c.h.bf16 %v893
        %v901 = vunpack.c.l.bf16 %v894
        %v902 = vunpack.c.h.bf16 %v894
        %v903 = vadd.f32 %v895, %v840
        %v904 = vadd.f32 %v896, %v842
        %v905 = vadd.f32 %v897, %v883
        %v906 = vadd.f32 %v898, %v885
        %v907 = vadd.f32 %v899, %v844
        %v908 = vadd.f32 %v900, %v846
        %v909 = vadd.f32 %v901, %v887
        %v910 = vadd.f32 %v902, %v889
        %v911 = vxor.u32 %v903, 2147483648
        %v912 = vxor.u32 %v907, 2147483648
        %v913 = vmul.f32 %v911, 1.442695
        %v914 = vpow.pop %v913
        %v915 = vmul.f32 %v912, 1.442695
        %v916 = vpow.pop %v915
        %v917 = vadd.f32 %v914, 1.0
        %v918 = vadd.f32 %v916, 1.0
        %v919 = vrcp.pop %v917
        %v920 = vmul.f32 1.0, %v919
        %v921 = vrcp.pop %v918
        %v922 = vmul.f32 1.0, %v921
        %v923 = vxor.u32 %v904, 2147483648
        %v924 = vxor.u32 %v908, 2147483648
        %v925 = vmul.f32 %v923, 1.442695
        %v926 = vpow.pop %v925
        %v927 = vmul.f32 %v924, 1.442695
        %v928 = vpow.pop %v927
        %v929 = vadd.f32 %v926, 1.0
        %v930 = vadd.f32 %v928, 1.0
        %v931 = vrcp.pop %v929
        %v932 = vmul.f32 1.0, %v931
        %v933 = vrcp.pop %v930
        %v934 = vmul.f32 1.0, %v933
        %v935 = vtanh.pop %v905
        %v936 = vtanh.pop %v909
        %v937 = vxor.u32 %v906, 2147483648
        %v938 = vxor.u32 %v910, 2147483648
        %v939 = vmul.f32 %v937, 1.442695
        %v940 = vpow.pop %v939
        %v941 = vmul.f32 %v938, 1.442695
        %v942 = vpow.pop %v941
        %v943 = vadd.f32 %v940, 1.0
        %v944 = vadd.f32 %v942, 1.0
        %v945 = vrcp.pop %v943
        %v946 = vmul.f32 1.0, %v945
        %v947 = vrcp.pop %v944
        %v948 = vmul.f32 1.0, %v947
        %v949 = vld [vmem:[#allocation3] sm:$0xff]
        %v950 = vld [vmem:[#allocation3 + $0x8] sm:$0xff]
        %v951 = vmul.f32 %v932, %v949
        %v952 = vmul.f32 %v934, %v950
        %v953 = vmul.f32 %v920, %v935
        %v954 = vmul.f32 %v922, %v936
        %v955 = vadd.f32 %v951, %v953
        %v956 = vadd.f32 %v952, %v954
        %v957 = vtanh.pop %v955
        %v958 = vtanh.pop %v956
        %v959 = vmul.f32 %v946, %v957
        %v960 = vmul.f32 %v948, %v958
        %961 = vst [vmem:[#allocation3] sm:$0xff] %v955
        %962 = vst [vmem:[#allocation3 + $0x8] sm:$0xff] %v956
        %v963 = vpack.c.bf16 %v960, %v959
        %964 = vst [vmem:[#allocation2] sm:$0xff] %v963
        %965 = vst [vmem:[%s365] sm:$0xff] %v959
        %966 = vst [vmem:[%s365 + $0x8] sm:$0xff] %v960
        %v967 = vld [vmem:[#allocation2] sm:$0xff]
        %v968 = vld [vmem:[#allocation4] sm:$0xff]
        %v969 = vld [vmem:[#allocation4 + $0x8] sm:$0xff]
        %v970 = vld [vmem:[#allocation4 + $0x10] sm:$0xff]
        %v971 = vld [vmem:[#allocation4 + $0x18] sm:$0xff]
        %v972 = vld [vmem:[#allocation4 + $0x20] sm:$0xff]
        %v973 = vld [vmem:[#allocation4 + $0x28] sm:$0xff]
        %v974 = vld [vmem:[#allocation4 + $0x30] sm:$0xff]
        %v975 = vld [vmem:[#allocation4 + $0x38] sm:$0xff]
        %v976 = vld [vmem:[#allocation4 + $0x40] sm:$0xff]
        %v977 = vld [vmem:[#allocation4 + $0x48] sm:$0xff]
        %v978 = vld [vmem:[#allocation4 + $0x50] sm:$0xff]
        %v979 = vld [vmem:[#allocation4 + $0x58] sm:$0xff]
        %v980 = vld [vmem:[#allocation4 + $0x60] sm:$0xff]
        %v981 = vld [vmem:[#allocation4 + $0x68] sm:$0xff]
        %v982 = vld [vmem:[#allocation4 + $0x70] sm:$0xff]
        %v983 = vld [vmem:[#allocation4 + $0x78] sm:$0xff]
        %v984 = vld [vmem:[#allocation4 + $0x80] sm:$0xff]
        %v985 = vld [vmem:[#allocation4 + $0x88] sm:$0xff]
        %v986 = vld [vmem:[#allocation4 + $0x90] sm:$0xff]
        %v987 = vld [vmem:[#allocation4 + $0x98] sm:$0xff]
        %v988 = vld [vmem:[#allocation4 + $0xa0] sm:$0xff]
        %v989 = vld [vmem:[#allocation4 + $0xa8] sm:$0xff]
        %v990 = vld [vmem:[#allocation4 + $0xb0] sm:$0xff]
        %v991 = vld [vmem:[#allocation4 + $0xb8] sm:$0xff]
        %v992 = vld [vmem:[#allocation4 + $0xc0] sm:$0xff]
        %v993 = vld [vmem:[#allocation4 + $0xc8] sm:$0xff]
        %v994 = vld [vmem:[#allocation4 + $0xd0] sm:$0xff]
        %v995 = vld [vmem:[#allocation4 + $0xd8] sm:$0xff]
        %v996 = vld [vmem:[#allocation4 + $0xe0] sm:$0xff]
        %v997 = vld [vmem:[#allocation4 + $0xe8] sm:$0xff]
        %v998 = vld [vmem:[#allocation4 + $0xf0] sm:$0xff]
        %v999 = vld [vmem:[#allocation4 + $0xf8] sm:$0xff]
        %1000 = vmatprep.subr.bf16.mxu0 %v969
        %1001 = vmatpush1.bf16.msra.mxu0 %v968
        %1002 = vmatprep.subr.bf16.mxu0 %v973
        %1003 = vmatpush1.bf16.msra.mxu0 %v972
        %1004 = vmatprep.subr.bf16.mxu0 %v977
        %1005 = vmatpush1.bf16.msra.mxu0 %v976
        %1006 = vmatprep.subr.bf16.mxu0 %v981
        %1007 = vmatpush1.bf16.msra.mxu0 %v980
        %1008 = vmatprep.subr.bf16.mxu0 %v985
        %1009 = vmatpush1.bf16.msra.mxu0 %v984
        %1010 = vmatprep.subr.bf16.mxu0 %v989
        %1011 = vmatpush1.bf16.msra.mxu0 %v988
        %1012 = vmatprep.subr.bf16.mxu0 %v993
        %1013 = vmatpush1.bf16.msra.mxu0 %v992
        %1014 = vmatprep.subr.bf16.mxu0 %v997
        %1015 = vmatpush1.bf16.msra.mxu0 %v996
        %1016 = vmatprep.subr.bf16.mxu0 0
        %1017 = vmatpush1.bf16.msra.mxu0 0
        %1018 = vmatprep.subr.bf16.mxu0 0
        %1019 = vmatpush1.bf16.msra.mxu0 0
        %1020 = vmatprep.subr.bf16.mxu0 0
        %1021 = vmatpush1.bf16.msra.mxu0 0
        %1022 = vmatprep.subr.bf16.mxu0 0
        %1023 = vmatpush1.bf16.msra.mxu0 0
        %1024 = vmatprep.subr.bf16.mxu0 0
        %1025 = vmatpush1.bf16.msra.mxu0 0
        %1026 = vmatprep.subr.bf16.mxu0 0
        %1027 = vmatpush1.bf16.msra.mxu0 0
        %1028 = vmatprep.subr.bf16.mxu0 0
        %1029 = vmatpush1.bf16.msra.mxu0 0
        %1030 = vmatprep.subr.bf16.mxu0 0
        %1031 = vmatpush1.bf16.msra.mxu0 0
        %1032 = vmatprep.mubr.bf16.mxu0 0
        %1033 = vmatmul.mubr.bf16.gmra.mrb[0].mxu0 %v967
        %v1034 = vpop.f32.mrb[0].mxu0
        %v1035 = vadd.f32 0.0, %v1034
        %v1036 = vpop.f32.mrb[0].mxu0
        %v1037 = vadd.f32 0.0, %v1036
        %v1038 = vpop.f32.mrb[0].mxu0
        %v1039 = vadd.f32 0.0, %v1038
        %v1040 = vpop.f32.mrb[0].mxu0
        %v1041 = vadd.f32 0.0, %v1040
        %1042 = vdwg.mxu0
        %1043 = vmatprep.subr.bf16.mxu0 %v971
        %1044 = vmatpush1.bf16.msra.mxu0 %v970
        %1045 = vmatprep.subr.bf16.mxu0 %v975
        %1046 = vmatpush1.bf16.msra.mxu0 %v974
        %1047 = vmatprep.subr.bf16.mxu0 %v979
        %1048 = vmatpush1.bf16.msra.mxu0 %v978
        %1049 = vmatprep.subr.bf16.mxu0 %v983
        %1050 = vmatpush1.bf16.msra.mxu0 %v982
        %1051 = vmatprep.subr.bf16.mxu0 %v987
        %1052 = vmatpush1.bf16.msra.mxu0 %v986
        %1053 = vmatprep.subr.bf16.mxu0 %v991
        %1054 = vmatpush1.bf16.msra.mxu0 %v990
        %1055 = vmatprep.subr.bf16.mxu0 %v995
        %1056 = vmatpush1.bf16.msra.mxu0 %v994
        %1057 = vmatprep.subr.bf16.mxu0 %v999
        %1058 = vmatpush1.bf16.msra.mxu0 %v998
        %1059 = vmatprep.subr.bf16.mxu0 0
        %1060 = vmatpush1.bf16.msra.mxu0 0
        %1061 = vmatprep.subr.bf16.mxu0 0
        %1062 = vmatpush1.bf16.msra.mxu0 0
        %1063 = vmatprep.subr.bf16.mxu0 0
        %1064 = vmatpush1.bf16.msra.mxu0 0
        %1065 = vmatprep.subr.bf16.mxu0 0
        %1066 = vmatpush1.bf16.msra.mxu0 0
        %1067 = vmatprep.subr.bf16.mxu0 0
        %1068 = vmatpush1.bf16.msra.mxu0 0
        %1069 = vmatprep.subr.bf16.mxu0 0
        %1070 = vmatpush1.bf16.msra.mxu0 0
        %1071 = vmatprep.subr.bf16.mxu0 0
        %1072 = vmatpush1.bf16.msra.mxu0 0
        %1073 = vmatprep.subr.bf16.mxu0 0
        %1074 = vmatpush1.bf16.msra.mxu0 0
        %1075 = vmatprep.mubr.bf16.mxu0 0
        %1076 = vmatmul.mubr.bf16.gmra.mrb[0].mxu0 %v967
        %v1077 = vpop.f32.mrb[0].mxu0
        %v1078 = vadd.f32 0.0, %v1077
        %v1079 = vpop.f32.mrb[0].mxu0
        %v1080 = vadd.f32 0.0, %v1079
        %v1081 = vpop.f32.mrb[0].mxu0
        %v1082 = vadd.f32 0.0, %v1081
        %v1083 = vpop.f32.mrb[0].mxu0
        %v1084 = vadd.f32 0.0, %v1083
        %1085 = vdwg.mxu0
        %s1086 = scalar_lea.vmem %s323, 32 [#allocation5]
        %v1087 = vld [vmem:[%s1086] sm:$0xff]
        %v1088 = vld [vmem:[%s1086 + $0x8] sm:$0xff]
        %v1089 = vld [vmem:[%s1086 + $0x10] sm:$0xff]
        %v1090 = vld [vmem:[%s1086 + $0x18] sm:$0xff]
        %v1091 = vunpack.c.l.bf16 %v1087
        %v1092 = vunpack.c.h.bf16 %v1087
        %v1093 = vunpack.c.l.bf16 %v1088
        %v1094 = vunpack.c.h.bf16 %v1088
        %v1095 = vunpack.c.l.bf16 %v1089
        %v1096 = vunpack.c.h.bf16 %v1089
        %v1097 = vunpack.c.l.bf16 %v1090
        %v1098 = vunpack.c.h.bf16 %v1090
        %v1099 = vadd.f32 %v1091, %v1035
        %v1100 = vadd.f32 %v1092, %v1037
        %v1101 = vadd.f32 %v1093, %v1078
        %v1102 = vadd.f32 %v1094, %v1080
        %v1103 = vadd.f32 %v1095, %v1039
        %v1104 = vadd.f32 %v1096, %v1041
        %v1105 = vadd.f32 %v1097, %v1082
        %v1106 = vadd.f32 %v1098, %v1084
        %v1107 = vxor.u32 %v1099, 2147483648
        %v1108 = vxor.u32 %v1103, 2147483648
        %v1109 = vmul.f32 %v1107, 1.442695
        %v1110 = vpow.pop %v1109
        %v1111 = vmul.f32 %v1108, 1.442695
        %v1112 = vpow.pop %v1111
        %v1113 = vadd.f32 %v1110, 1.0
        %v1114 = vadd.f32 %v1112, 1.0
        %v1115 = vrcp.pop %v1113
        %v1116 = vmul.f32 1.0, %v1115
        %v1117 = vrcp.pop %v1114
        %v1118 = vmul.f32 1.0, %v1117
        %v1119 = vxor.u32 %v1100, 2147483648
        %v1120 = vxor.u32 %v1104, 2147483648
        %v1121 = vmul.f32 %v1119, 1.442695
        %v1122 = vpow.pop %v1121
        %v1123 = vmul.f32 %v1120, 1.442695
        %v1124 = vpow.pop %v1123
        %v1125 = vadd.f32 %v1122, 1.0
        %v1126 = vadd.f32 %v1124, 1.0
        %v1127 = vrcp.pop %v1125
        %v1128 = vmul.f32 1.0, %v1127
        %v1129 = vrcp.pop %v1126
        %v1130 = vmul.f32 1.0, %v1129
        %v1131 = vtanh.pop %v1101
        %v1132 = vtanh.pop %v1105
        %v1133 = vxor.u32 %v1102, 2147483648
        %v1134 = vxor.u32 %v1106, 2147483648
        %v1135 = vmul.f32 %v1133, 1.442695
        %v1136 = vpow.pop %v1135
        %v1137 = vmul.f32 %v1134, 1.442695
        %v1138 = vpow.pop %v1137
        %v1139 = vadd.f32 %v1136, 1.0
        %v1140 = vadd.f32 %v1138, 1.0
        %v1141 = vrcp.pop %v1139
        %v1142 = vmul.f32 1.0, %v1141
        %v1143 = vrcp.pop %v1140
        %v1144 = vmul.f32 1.0, %v1143
        %v1145 = vld [vmem:[#allocation3] sm:$0xff]
        %v1146 = vld [vmem:[#allocation3 + $0x8] sm:$0xff]
        %v1147 = vmul.f32 %v1128, %v1145
        %v1148 = vmul.f32 %v1130, %v1146
        %v1149 = vmul.f32 %v1116, %v1131
        %v1150 = vmul.f32 %v1118, %v1132
        %v1151 = vadd.f32 %v1147, %v1149
        %v1152 = vadd.f32 %v1148, %v1150
        %v1153 = vtanh.pop %v1151
        %v1154 = vtanh.pop %v1152
        %v1155 = vmul.f32 %v1142, %v1153
        %v1156 = vmul.f32 %v1144, %v1154
        %1157 = vst [vmem:[#allocation3] sm:$0xff] %v1151
        %1158 = vst [vmem:[#allocation3 + $0x8] sm:$0xff] %v1152
        %v1159 = vpack.c.bf16 %v1156, %v1155
        %1160 = vst [vmem:[#allocation2] sm:$0xff] %v1159
        %s1161 = scalar_lea.vmem %s365, 16 [#allocation14]
        %1162 = vst [vmem:[%s1161] sm:$0xff] %v1155
        %1163 = vst [vmem:[%s1161 + $0x8] sm:$0xff] %v1156
        %v1164 = vld [vmem:[#allocation2] sm:$0xff]
        %v1165 = vld [vmem:[#allocation4] sm:$0xff]
        %v1166 = vld [vmem:[#allocation4 + $0x8] sm:$0xff]
        %v1167 = vld [vmem:[#allocation4 + $0x10] sm:$0xff]
        %v1168 = vld [vmem:[#allocation4 + $0x18] sm:$0xff]
        %v1169 = vld [vmem:[#allocation4 + $0x20] sm:$0xff]
        %v1170 = vld [vmem:[#allocation4 + $0x28] sm:$0xff]
        %v1171 = vld [vmem:[#allocation4 + $0x30] sm:$0xff]
        %v1172 = vld [vmem:[#allocation4 + $0x38] sm:$0xff]
        %v1173 = vld [vmem:[#allocation4 + $0x40] sm:$0xff]
        %v1174 = vld [vmem:[#allocation4 + $0x48] sm:$0xff]
        %v1175 = vld [vmem:[#allocation4 + $0x50] sm:$0xff]
        %v1176 = vld [vmem:[#allocation4 + $0x58] sm:$0xff]
        %v1177 = vld [vmem:[#allocation4 + $0x60] sm:$0xff]
        %v1178 = vld [vmem:[#allocation4 + $0x68] sm:$0xff]
        %v1179 = vld [vmem:[#allocation4 + $0x70] sm:$0xff]
        %v1180 = vld [vmem:[#allocation4 + $0x78] sm:$0xff]
        %v1181 = vld [vmem:[#allocation4 + $0x80] sm:$0xff]
        %v1182 = vld [vmem:[#allocation4 + $0x88] sm:$0xff]
        %v1183 = vld [vmem:[#allocation4 + $0x90] sm:$0xff]
        %v1184 = vld [vmem:[#allocation4 + $0x98] sm:$0xff]
        %v1185 = vld [vmem:[#allocation4 + $0xa0] sm:$0xff]
        %v1186 = vld [vmem:[#allocation4 + $0xa8] sm:$0xff]
        %v1187 = vld [vmem:[#allocation4 + $0xb0] sm:$0xff]
        %v1188 = vld [vmem:[#allocation4 + $0xb8] sm:$0xff]
        %v1189 = vld [vmem:[#allocation4 + $0xc0] sm:$0xff]
        %v1190 = vld [vmem:[#allocation4 + $0xc8] sm:$0xff]
        %v1191 = vld [vmem:[#allocation4 + $0xd0] sm:$0xff]
        %v1192 = vld [vmem:[#allocation4 + $0xd8] sm:$0xff]
        %v1193 = vld [vmem:[#allocation4 + $0xe0] sm:$0xff]
        %v1194 = vld [vmem:[#allocation4 + $0xe8] sm:$0xff]
        %v1195 = vld [vmem:[#allocation4 + $0xf0] sm:$0xff]
        %v1196 = vld [vmem:[#allocation4 + $0xf8] sm:$0xff]
        %1197 = vmatprep.subr.bf16.mxu0 %v1166
        %1198 = vmatpush1.bf16.msra.mxu0 %v1165
        %1199 = vmatprep.subr.bf16.mxu0 %v1170
        %1200 = vmatpush1.bf16.msra.mxu0 %v1169
        %1201 = vmatprep.subr.bf16.mxu0 %v1174
        %1202 = vmatpush1.bf16.msra.mxu0 %v1173
        %1203 = vmatprep.subr.bf16.mxu0 %v1178
        %1204 = vmatpush1.bf16.msra.mxu0 %v1177
        %1205 = vmatprep.subr.bf16.mxu0 %v1182
        %1206 = vmatpush1.bf16.msra.mxu0 %v1181
        %1207 = vmatprep.subr.bf16.mxu0 %v1186
        %1208 = vmatpush1.bf16.msra.mxu0 %v1185
        %1209 = vmatprep.subr.bf16.mxu0 %v1190
        %1210 = vmatpush1.bf16.msra.mxu0 %v1189
        %1211 = vmatprep.subr.bf16.mxu0 %v1194
        %1212 = vmatpush1.bf16.msra.mxu0 %v1193
        %1213 = vmatprep.subr.bf16.mxu0 0
        %1214 = vmatpush1.bf16.msra.mxu0 0
        %1215 = vmatprep.subr.bf16.mxu0 0
        %1216 = vmatpush1.bf16.msra.mxu0 0
        %1217 = vmatprep.subr.bf16.mxu0 0
        %1218 = vmatpush1.bf16.msra.mxu0 0
        %1219 = vmatprep.subr.bf16.mxu0 0
        %1220 = vmatpush1.bf16.msra.mxu0 0
        %1221 = vmatprep.subr.bf16.mxu0 0
        %1222 = vmatpush1.bf16.msra.mxu0 0
        %1223 = vmatprep.subr.bf16.mxu0 0
        %1224 = vmatpush1.bf16.msra.mxu0 0
        %1225 = vmatprep.subr.bf16.mxu0 0
        %1226 = vmatpush1.bf16.msra.mxu0 0
        %1227 = vmatprep.subr.bf16.mxu0 0
        %1228 = vmatpush1.bf16.msra.mxu0 0
        %1229 = vmatprep.mubr.bf16.mxu0 0
        %1230 = vmatmul.mubr.bf16.gmra.mrb[0].mxu0 %v1164
        %v1231 = vpop.f32.mrb[0].mxu0
        %v1232 = vadd.f32 0.0, %v1231
        %v1233 = vpop.f32.mrb[0].mxu0
        %v1234 = vadd.f32 0.0, %v1233
        %v1235 = vpop.f32.mrb[0].mxu0
        %v1236 = vadd.f32 0.0, %v1235
        %v1237 = vpop.f32.mrb[0].mxu0
        %v1238 = vadd.f32 0.0, %v1237
        %1239 = vdwg.mxu0
        %1240 = vmatprep.subr.bf16.mxu0 %v1168
        %1241 = vmatpush1.bf16.msra.mxu0 %v1167
        %1242 = vmatprep.subr.bf16.mxu0 %v1172
        %1243 = vmatpush1.bf16.msra.mxu0 %v1171
        %1244 = vmatprep.subr.bf16.mxu0 %v1176
        %1245 = vmatpush1.bf16.msra.mxu0 %v1175
        %1246 = vmatprep.subr.bf16.mxu0 %v1180
        %1247 = vmatpush1.bf16.msra.mxu0 %v1179
        %1248 = vmatprep.subr.bf16.mxu0 %v1184
        %1249 = vmatpush1.bf16.msra.mxu0 %v1183
        %1250 = vmatprep.subr.bf16.mxu0 %v1188
        %1251 = vmatpush1.bf16.msra.mxu0 %v1187
        %1252 = vmatprep.subr.bf16.mxu0 %v1192
        %1253 = vmatpush1.bf16.msra.mxu0 %v1191
        %1254 = vmatprep.subr.bf16.mxu0 %v1196
        %1255 = vmatpush1.bf16.msra.mxu0 %v1195
        %1256 = vmatprep.subr.bf16.mxu0 0
        %1257 = vmatpush1.bf16.msra.mxu0 0
        %1258 = vmatprep.subr.bf16.mxu0 0
        %1259 = vmatpush1.bf16.msra.mxu0 0
        %1260 = vmatprep.subr.bf16.mxu0 0
        %1261 = vmatpush1.bf16.msra.mxu0 0
        %1262 = vmatprep.subr.bf16.mxu0 0
        %1263 = vmatpush1.bf16.msra.mxu0 0
        %1264 = vmatprep.subr.bf16.mxu0 0
        %1265 = vmatpush1.bf16.msra.mxu0 0
        %1266 = vmatprep.subr.bf16.mxu0 0
        %1267 = vmatpush1.bf16.msra.mxu0 0
        %1268 = vmatprep.subr.bf16.mxu0 0
        %1269 = vmatpush1.bf16.msra.mxu0 0
        %1270 = vmatprep.subr.bf16.mxu0 0
        %1271 = vmatpush1.bf16.msra.mxu0 0
        %1272 = vmatprep.mubr.bf16.mxu0 0
        %1273 = vmatmul.mubr.bf16.gmra.mrb[0].mxu0 %v1164
        %v1274 = vpop.f32.mrb[0].mxu0
        %v1275 = vadd.f32 0.0, %v1274
        %v1276 = vpop.f32.mrb[0].mxu0
        %v1277 = vadd.f32 0.0, %v1276
        %v1278 = vpop.f32.mrb[0].mxu0
        %v1279 = vadd.f32 0.0, %v1278
        %v1280 = vpop.f32.mrb[0].mxu0
        %v1281 = vadd.f32 0.0, %v1280
        %1282 = vdwg.mxu0
        %s1283 = scalar_lea.vmem %s323, 64 [#allocation5]
        %v1284 = vld [vmem:[%s1283] sm:$0xff]
        %v1285 = vld [vmem:[%s1283 + $0x8] sm:$0xff]
        %v1286 = vld [vmem:[%s1283 + $0x10] sm:$0xff]
        %v1287 = vld [vmem:[%s1283 + $0x18] sm:$0xff]
        %v1288 = vunpack.c.l.bf16 %v1284
        %v1289 = vunpack.c.h.bf16 %v1284
        %v1290 = vunpack.c.l.bf16 %v1285
        %v1291 = vunpack.c.h.bf16 %v1285
        %v1292 = vunpack.c.l.bf16 %v1286
        %v1293 = vunpack.c.h.bf16 %v1286
        %v1294 = vunpack.c.l.bf16 %v1287
        %v1295 = vunpack.c.h.bf16 %v1287
        %v1296 = vadd.f32 %v1288, %v1232
        %v1297 = vadd.f32 %v1289, %v1234
        %v1298 = vadd.f32 %v1290, %v1275
        %v1299 = vadd.f32 %v1291, %v1277
        %v1300 = vadd.f32 %v1292, %v1236
        %v1301 = vadd.f32 %v1293, %v1238
        %v1302 = vadd.f32 %v1294, %v1279
        %v1303 = vadd.f32 %v1295, %v1281
        %v1304 = vxor.u32 %v1296, 2147483648
        %v1305 = vxor.u32 %v1300, 2147483648
        %v1306 = vmul.f32 %v1304, 1.442695
        %v1307 = vpow.pop %v1306
        %v1308 = vmul.f32 %v1305, 1.442695
        %v1309 = vpow.pop %v1308
        %v1310 = vadd.f32 %v1307, 1.0
        %v1311 = vadd.f32 %v1309, 1.0
        %v1312 = vrcp.pop %v1310
        %v1313 = vmul.f32 1.0, %v1312
        %v1314 = vrcp.pop %v1311
        %v1315 = vmul.f32 1.0, %v1314
        %v1316 = vxor.u32 %v1297, 2147483648
        %v1317 = vxor.u32 %v1301, 2147483648
        %v1318 = vmul.f32 %v1316, 1.442695
        %v1319 = vpow.pop %v1318
        %v1320 = vmul.f32 %v1317, 1.442695
        %v1321 = vpow.pop %v1320
        %v1322 = vadd.f32 %v1319, 1.0
        %v1323 = vadd.f32 %v1321, 1.0
        %v1324 = vrcp.pop %v1322
        %v1325 = vmul.f32 1.0, %v1324
        %v1326 = vrcp.pop %v1323
        %v1327 = vmul.f32 1.0, %v1326
        %v1328 = vtanh.pop %v1298
        %v1329 = vtanh.pop %v1302
        %v1330 = vxor.u32 %v1299, 2147483648
        %v1331 = vxor.u32 %v1303, 2147483648
        %v1332 = vmul.f32 %v1330, 1.442695
        %v1333 = vpow.pop %v1332
        %v1334 = vmul.f32 %v1331, 1.442695
        %v1335 = vpow.pop %v1334
        %v1336 = vadd.f32 %v1333, 1.0
        %v1337 = vadd.f32 %v1335, 1.0
        %v1338 = vrcp.pop %v1336
        %v1339 = vmul.f32 1.0, %v1338
        %v1340 = vrcp.pop %v1337
        %v1341 = vmul.f32 1.0, %v1340
        %v1342 = vld [vmem:[#allocation3] sm:$0xff]
        %v1343 = vld [vmem:[#allocation3 + $0x8] sm:$0xff]
        %v1344 = vmul.f32 %v1325, %v1342
        %v1345 = vmul.f32 %v1327, %v1343
        %v1346 = vmul.f32 %v1313, %v1328
        %v1347 = vmul.f32 %v1315, %v1329
        %v1348 = vadd.f32 %v1344, %v1346
        %v1349 = vadd.f32 %v1345, %v1347
        %v1350 = vtanh.pop %v1348
        %v1351 = vtanh.pop %v1349
        %v1352 = vmul.f32 %v1339, %v1350
        %v1353 = vmul.f32 %v1341, %v1351
        %1354 = vst [vmem:[#allocation3] sm:$0xff] %v1348
        %1355 = vst [vmem:[#allocation3 + $0x8] sm:$0xff] %v1349
        %v1356 = vpack.c.bf16 %v1353, %v1352
        %1357 = vst [vmem:[#allocation2] sm:$0xff] %v1356
        %s1358 = scalar_lea.vmem %s365, 32 [#allocation14]
        %1359 = vst [vmem:[%s1358] sm:$0xff] %v1352
        %1360 = vst [vmem:[%s1358 + $0x8] sm:$0xff] %v1353
        %v1361 = vld [vmem:[#allocation2] sm:$0xff]
        %v1362 = vld [vmem:[#allocation4] sm:$0xff]
        %v1363 = vld [vmem:[#allocation4 + $0x8] sm:$0xff]
        %v1364 = vld [vmem:[#allocation4 + $0x10] sm:$0xff]
        %v1365 = vld [vmem:[#allocation4 + $0x18] sm:$0xff]
        %v1366 = vld [vmem:[#allocation4 + $0x20] sm:$0xff]
        %v1367 = vld [vmem:[#allocation4 + $0x28] sm:$0xff]
        %v1368 = vld [vmem:[#allocation4 + $0x30] sm:$0xff]
        %v1369 = vld [vmem:[#allocation4 + $0x38] sm:$0xff]
        %v1370 = vld [vmem:[#allocation4 + $0x40] sm:$0xff]
        %v1371 = vld [vmem:[#allocation4 + $0x48] sm:$0xff]
        %v1372 = vld [vmem:[#allocation4 + $0x50] sm:$0xff]
        %v1373 = vld [vmem:[#allocation4 + $0x58] sm:$0xff]
        %v1374 = vld [vmem:[#allocation4 + $0x60] sm:$0xff]
        %v1375 = vld [vmem:[#allocation4 + $0x68] sm:$0xff]
        %v1376 = vld [vmem:[#allocation4 + $0x70] sm:$0xff]
        %v1377 = vld [vmem:[#allocation4 + $0x78] sm:$0xff]
        %v1378 = vld [vmem:[#allocation4 + $0x80] sm:$0xff]
        %v1379 = vld [vmem:[#allocation4 + $0x88] sm:$0xff]
        %v1380 = vld [vmem:[#allocation4 + $0x90] sm:$0xff]
        %v1381 = vld [vmem:[#allocation4 + $0x98] sm:$0xff]
        %v1382 = vld [vmem:[#allocation4 + $0xa0] sm:$0xff]
        %v1383 = vld [vmem:[#allocation4 + $0xa8] sm:$0xff]
        %v1384 = vld [vmem:[#allocation4 + $0xb0] sm:$0xff]
        %v1385 = vld [vmem:[#allocation4 + $0xb8] sm:$0xff]
        %v1386 = vld [vmem:[#allocation4 + $0xc0] sm:$0xff]
        %v1387 = vld [vmem:[#allocation4 + $0xc8] sm:$0xff]
        %v1388 = vld [vmem:[#allocation4 + $0xd0] sm:$0xff]
        %v1389 = vld [vmem:[#allocation4 + $0xd8] sm:$0xff]
        %v1390 = vld [vmem:[#allocation4 + $0xe0] sm:$0xff]
        %v1391 = vld [vmem:[#allocation4 + $0xe8] sm:$0xff]
        %v1392 = vld [vmem:[#allocation4 + $0xf0] sm:$0xff]
        %v1393 = vld [vmem:[#allocation4 + $0xf8] sm:$0xff]
        %1394 = vmatprep.subr.bf16.mxu0 %v1363
        %1395 = vmatpush1.bf16.msra.mxu0 %v1362
        %1396 = vmatprep.subr.bf16.mxu0 %v1367
        %1397 = vmatpush1.bf16.msra.mxu0 %v1366
        %1398 = vmatprep.subr.bf16.mxu0 %v1371
        %1399 = vmatpush1.bf16.msra.mxu0 %v1370
        %1400 = vmatprep.subr.bf16.mxu0 %v1375
        %1401 = vmatpush1.bf16.msra.mxu0 %v1374
        %1402 = vmatprep.subr.bf16.mxu0 %v1379
        %1403 = vmatpush1.bf16.msra.mxu0 %v1378
        %1404 = vmatprep.subr.bf16.mxu0 %v1383
        %1405 = vmatpush1.bf16.msra.mxu0 %v1382
        %1406 = vmatprep.subr.bf16.mxu0 %v1387
        %1407 = vmatpush1.bf16.msra.mxu0 %v1386
        %1408 = vmatprep.subr.bf16.mxu0 %v1391
        %1409 = vmatpush1.bf16.msra.mxu0 %v1390
        %1410 = vmatprep.subr.bf16.mxu0 0
        %1411 = vmatpush1.bf16.msra.mxu0 0
        %1412 = vmatprep.subr.bf16.mxu0 0
        %1413 = vmatpush1.bf16.msra.mxu0 0
        %1414 = vmatprep.subr.bf16.mxu0 0
        %1415 = vmatpush1.bf16.msra.mxu0 0
        %1416 = vmatprep.subr.bf16.mxu0 0
        %1417 = vmatpush1.bf16.msra.mxu0 0
        %1418 = vmatprep.subr.bf16.mxu0 0
        %1419 = vmatpush1.bf16.msra.mxu0 0
        %1420 = vmatprep.subr.bf16.mxu0 0
        %1421 = vmatpush1.bf16.msra.mxu0 0
        %1422 = vmatprep.subr.bf16.mxu0 0
        %1423 = vmatpush1.bf16.msra.mxu0 0
        %1424 = vmatprep.subr.bf16.mxu0 0
        %1425 = vmatpush1.bf16.msra.mxu0 0
        %1426 = vmatprep.mubr.bf16.mxu0 0
        %1427 = vmatmul.mubr.bf16.gmra.mrb[0].mxu0 %v1361
        %v1428 = vpop.f32.mrb[0].mxu0
        %v1429 = vadd.f32 0.0, %v1428
        %v1430 = vpop.f32.mrb[0].mxu0
        %v1431 = vadd.f32 0.0, %v1430
        %v1432 = vpop.f32.mrb[0].mxu0
        %v1433 = vadd.f32 0.0, %v1432
        %v1434 = vpop.f32.mrb[0].mxu0
        %v1435 = vadd.f32 0.0, %v1434
        %1436 = vdwg.mxu0
        %1437 = vmatprep.subr.bf16.mxu0 %v1365
        %1438 = vmatpush1.bf16.msra.mxu0 %v1364
        %1439 = vmatprep.subr.bf16.mxu0 %v1369
        %1440 = vmatpush1.bf16.msra.mxu0 %v1368
        %1441 = vmatprep.subr.bf16.mxu0 %v1373
        %1442 = vmatpush1.bf16.msra.mxu0 %v1372
        %1443 = vmatprep.subr.bf16.mxu0 %v1377
        %1444 = vmatpush1.bf16.msra.mxu0 %v1376
        %1445 = vmatprep.subr.bf16.mxu0 %v1381
        %1446 = vmatpush1.bf16.msra.mxu0 %v1380
        %1447 = vmatprep.subr.bf16.mxu0 %v1385
        %1448 = vmatpush1.bf16.msra.mxu0 %v1384
        %1449 = vmatprep.subr.bf16.mxu0 %v1389
        %1450 = vmatpush1.bf16.msra.mxu0 %v1388
        %1451 = vmatprep.subr.bf16.mxu0 %v1393
        %1452 = vmatpush1.bf16.msra.mxu0 %v1392
        %1453 = vmatprep.subr.bf16.mxu0 0
        %1454 = vmatpush1.bf16.msra.mxu0 0
        %1455 = vmatprep.subr.bf16.mxu0 0
        %1456 = vmatpush1.bf16.msra.mxu0 0
        %1457 = vmatprep.subr.bf16.mxu0 0
        %1458 = vmatpush1.bf16.msra.mxu0 0
        %1459 = vmatprep.subr.bf16.mxu0 0
        %1460 = vmatpush1.bf16.msra.mxu0 0
        %1461 = vmatprep.subr.bf16.mxu0 0
        %1462 = vmatpush1.bf16.msra.mxu0 0
        %1463 = vmatprep.subr.bf16.mxu0 0
        %1464 = vmatpush1.bf16.msra.mxu0 0
        %1465 = vmatprep.subr.bf16.mxu0 0
        %1466 = vmatpush1.bf16.msra.mxu0 0
        %1467 = vmatprep.subr.bf16.mxu0 0
        %1468 = vmatpush1.bf16.msra.mxu0 0
        %1469 = vmatprep.mubr.bf16.mxu0 0
        %1470 = vmatmul.mubr.bf16.gmra.mrb[0].mxu0 %v1361
        %v1471 = vpop.f32.mrb[0].mxu0
        %v1472 = vadd.f32 0.0, %v1471
        %v1473 = vpop.f32.mrb[0].mxu0
        %v1474 = vadd.f32 0.0, %v1473
        %v1475 = vpop.f32.mrb[0].mxu0
        %v1476 = vadd.f32 0.0, %v1475
        %v1477 = vpop.f32.mrb[0].mxu0
        %v1478 = vadd.f32 0.0, %v1477
        %1479 = vdwg.mxu0
        %s1480 = scalar_lea.vmem %s323, 96 [#allocation5]
        %v1481 = vld [vmem:[%s1480] sm:$0xff]
        %v1482 = vld [vmem:[%s1480 + $0x8] sm:$0xff]
        %v1483 = vld [vmem:[%s1480 + $0x10] sm:$0xff]
        %v1484 = vld [vmem:[%s1480 + $0x18] sm:$0xff]
        %v1485 = vunpack.c.l.bf16 %v1481
        %v1486 = vunpack.c.h.bf16 %v1481
        %v1487 = vunpack.c.l.bf16 %v1482
        %v1488 = vunpack.c.h.bf16 %v1482
        %v1489 = vunpack.c.l.bf16 %v1483
        %v1490 = vunpack.c.h.bf16 %v1483
        %v1491 = vunpack.c.l.bf16 %v1484
        %v1492 = vunpack.c.h.bf16 %v1484
        %v1493 = vadd.f32 %v1485, %v1429
        %v1494 = vadd.f32 %v1486, %v1431
        %v1495 = vadd.f32 %v1487, %v1472
        %v1496 = vadd.f32 %v1488, %v1474
        %v1497 = vadd.f32 %v1489, %v1433
        %v1498 = vadd.f32 %v1490, %v1435
        %v1499 = vadd.f32 %v1491, %v1476
        %v1500 = vadd.f32 %v1492, %v1478
        %v1501 = vxor.u32 %v1493, 2147483648
        %v1502 = vxor.u32 %v1497, 2147483648
        %v1503 = vmul.f32 %v1501, 1.442695
        %v1504 = vpow.pop %v1503
        %v1505 = vmul.f32 %v1502, 1.442695
        %v1506 = vpow.pop %v1505
        %v1507 = vadd.f32 %v1504, 1.0
        %v1508 = vadd.f32 %v1506, 1.0
        %v1509 = vrcp.pop %v1507
        %v1510 = vmul.f32 1.0, %v1509
        %v1511 = vrcp.pop %v1508
        %v1512 = vmul.f32 1.0, %v1511
        %v1513 = vxor.u32 %v1494, 2147483648
        %v1514 = vxor.u32 %v1498, 2147483648
        %v1515 = vmul.f32 %v1513, 1.442695
        %v1516 = vpow.pop %v1515
        %v1517 = vmul.f32 %v1514, 1.442695
        %v1518 = vpow.pop %v1517
        %v1519 = vadd.f32 %v1516, 1.0
        %v1520 = vadd.f32 %v1518, 1.0
        %v1521 = vrcp.pop %v1519
        %v1522 = vmul.f32 1.0, %v1521
        %v1523 = vrcp.pop %v1520
        %v1524 = vmul.f32 1.0, %v1523
        %v1525 = vtanh.pop %v1495
        %v1526 = vtanh.pop %v1499
        %v1527 = vxor.u32 %v1496, 2147483648
        %v1528 = vxor.u32 %v1500, 2147483648
        %v1529 = vmul.f32 %v1527, 1.442695
        %v1530 = vpow.pop %v1529
        %v1531 = vmul.f32 %v1528, 1.442695
        %v1532 = vpow.pop %v1531
        %v1533 = vadd.f32 %v1530, 1.0
        %v1534 = vadd.f32 %v1532, 1.0
        %v1535 = vrcp.pop %v1533
        %v1536 = vmul.f32 1.0, %v1535
        %v1537 = vrcp.pop %v1534
        %v1538 = vmul.f32 1.0, %v1537
        %v1539 = vld [vmem:[#allocation3] sm:$0xff]
        %v1540 = vld [vmem:[#allocation3 + $0x8] sm:$0xff]
        %v1541 = vmul.f32 %v1522, %v1539
        %v1542 = vmul.f32 %v1524, %v1540
        %v1543 = vmul.f32 %v1510, %v1525
        %v1544 = vmul.f32 %v1512, %v1526
        %v1545 = vadd.f32 %v1541, %v1543
        %v1546 = vadd.f32 %v1542, %v1544
        %v1547 = vtanh.pop %v1545
        %v1548 = vtanh.pop %v1546
        %v1549 = vmul.f32 %v1536, %v1547
        %v1550 = vmul.f32 %v1538, %v1548
        %1551 = vst [vmem:[#allocation3] sm:$0xff] %v1545
        %1552 = vst [vmem:[#allocation3 + $0x8] sm:$0xff] %v1546
        %v1553 = vpack.c.bf16 %v1550, %v1549
        %1554 = vst [vmem:[#allocation2] sm:$0xff] %v1553
        %s1555 = scalar_lea.vmem %s365, 48 [#allocation14]
        %1556 = vst [vmem:[%s1555] sm:$0xff] %v1549
        %1557 = vst [vmem:[%s1555 + $0x8] sm:$0xff] %v1550
        %v1558 = vld [vmem:[#allocation2] sm:$0xff]
        %v1559 = vld [vmem:[#allocation4] sm:$0xff]
        %v1560 = vld [vmem:[#allocation4 + $0x8] sm:$0xff]
        %v1561 = vld [vmem:[#allocation4 + $0x10] sm:$0xff]
        %v1562 = vld [vmem:[#allocation4 + $0x18] sm:$0xff]
        %v1563 = vld [vmem:[#allocation4 + $0x20] sm:$0xff]
        %v1564 = vld [vmem:[#allocation4 + $0x28] sm:$0xff]
        %v1565 = vld [vmem:[#allocation4 + $0x30] sm:$0xff]
        %v1566 = vld [vmem:[#allocation4 + $0x38] sm:$0xff]
        %v1567 = vld [vmem:[#allocation4 + $0x40] sm:$0xff]
        %v1568 = vld [vmem:[#allocation4 + $0x48] sm:$0xff]
        %v1569 = vld [vmem:[#allocation4 + $0x50] sm:$0xff]
        %v1570 = vld [vmem:[#allocation4 + $0x58] sm:$0xff]
        %v1571 = vld [vmem:[#allocation4 + $0x60] sm:$0xff]
        %v1572 = vld [vmem:[#allocation4 + $0x68] sm:$0xff]
        %v1573 = vld [vmem:[#allocation4 + $0x70] sm:$0xff]
        %v1574 = vld [vmem:[#allocation4 + $0x78] sm:$0xff]
        %v1575 = vld [vmem:[#allocation4 + $0x80] sm:$0xff]
        %v1576 = vld [vmem:[#allocation4 + $0x88] sm:$0xff]
        %v1577 = vld [vmem:[#allocation4 + $0x90] sm:$0xff]
        %v1578 = vld [vmem:[#allocation4 + $0x98] sm:$0xff]
        %v1579 = vld [vmem:[#allocation4 + $0xa0] sm:$0xff]
        %v1580 = vld [vmem:[#allocation4 + $0xa8] sm:$0xff]
        %v1581 = vld [vmem:[#allocation4 + $0xb0] sm:$0xff]
        %v1582 = vld [vmem:[#allocation4 + $0xb8] sm:$0xff]
        %v1583 = vld [vmem:[#allocation4 + $0xc0] sm:$0xff]
        %v1584 = vld [vmem:[#allocation4 + $0xc8] sm:$0xff]
        %v1585 = vld [vmem:[#allocation4 + $0xd0] sm:$0xff]
        %v1586 = vld [vmem:[#allocation4 + $0xd8] sm:$0xff]
        %v1587 = vld [vmem:[#allocation4 + $0xe0] sm:$0xff]
        %v1588 = vld [vmem:[#allocation4 + $0xe8] sm:$0xff]
        %v1589 = vld [vmem:[#allocation4 + $0xf0] sm:$0xff]
        %v1590 = vld [vmem:[#allocation4 + $0xf8] sm:$0xff]
        %1591 = vmatprep.subr.bf16.mxu0 %v1560
        %1592 = vmatpush1.bf16.msra.mxu0 %v1559
        %1593 = vmatprep.subr.bf16.mxu0 %v1564
        %1594 = vmatpush1.bf16.msra.mxu0 %v1563
        %1595 = vmatprep.subr.bf16.mxu0 %v1568
        %1596 = vmatpush1.bf16.msra.mxu0 %v1567
        %1597 = vmatprep.subr.bf16.mxu0 %v1572
        %1598 = vmatpush1.bf16.msra.mxu0 %v1571
        %1599 = vmatprep.subr.bf16.mxu0 %v1576
        %1600 = vmatpush1.bf16.msra.mxu0 %v1575
        %1601 = vmatprep.subr.bf16.mxu0 %v1580
        %1602 = vmatpush1.bf16.msra.mxu0 %v1579
        %1603 = vmatprep.subr.bf16.mxu0 %v1584
        %1604 = vmatpush1.bf16.msra.mxu0 %v1583
        %1605 = vmatprep.subr.bf16.mxu0 %v1588
        %1606 = vmatpush1.bf16.msra.mxu0 %v1587
        %1607 = vmatprep.subr.bf16.mxu0 0
        %1608 = vmatpush1.bf16.msra.mxu0 0
        %1609 = vmatprep.subr.bf16.mxu0 0
        %1610 = vmatpush1.bf16.msra.mxu0 0
        %1611 = vmatprep.subr.bf16.mxu0 0
        %1612 = vmatpush1.bf16.msra.mxu0 0
        %1613 = vmatprep.subr.bf16.mxu0 0
        %1614 = vmatpush1.bf16.msra.mxu0 0
        %1615 = vmatprep.subr.bf16.mxu0 0
        %1616 = vmatpush1.bf16.msra.mxu0 0
        %1617 = vmatprep.subr.bf16.mxu0 0
        %1618 = vmatpush1.bf16.msra.mxu0 0
        %1619 = vmatprep.subr.bf16.mxu0 0
        %1620 = vmatpush1.bf16.msra.mxu0 0
        %1621 = vmatprep.subr.bf16.mxu0 0
        %1622 = vmatpush1.bf16.msra.mxu0 0
        %1623 = vmatprep.mubr.bf16.mxu0 0
        %1624 = vmatmul.mubr.bf16.gmra.mrb[0].mxu0 %v1558
        %v1625 = vpop.f32.mrb[0].mxu0
        %v1626 = vadd.f32 0.0, %v1625
        %v1627 = vpop.f32.mrb[0].mxu0
        %v1628 = vadd.f32 0.0, %v1627
        %v1629 = vpop.f32.mrb[0].mxu0
        %v1630 = vadd.f32 0.0, %v1629
        %v1631 = vpop.f32.mrb[0].mxu0
        %v1632 = vadd.f32 0.0, %v1631
        %1633 = vdwg.mxu0
        %1634 = vmatprep.subr.bf16.mxu0 %v1562
        %1635 = vmatpush1.bf16.msra.mxu0 %v1561
        %1636 = vmatprep.subr.bf16.mxu0 %v1566
        %1637 = vmatpush1.bf16.msra.mxu0 %v1565
        %1638 = vmatprep.subr.bf16.mxu0 %v1570
        %1639 = vmatpush1.bf16.msra.mxu0 %v1569
        %1640 = vmatprep.subr.bf16.mxu0 %v1574
        %1641 = vmatpush1.bf16.msra.mxu0 %v1573
        %1642 = vmatprep.subr.bf16.mxu0 %v1578
        %1643 = vmatpush1.bf16.msra.mxu0 %v1577
        %1644 = vmatprep.subr.bf16.mxu0 %v1582
        %1645 = vmatpush1.bf16.msra.mxu0 %v1581
        %1646 = vmatprep.subr.bf16.mxu0 %v1586
        %1647 = vmatpush1.bf16.msra.mxu0 %v1585
        %1648 = vmatprep.subr.bf16.mxu0 %v1590
        %1649 = vmatpush1.bf16.msra.mxu0 %v1589
        %1650 = vmatprep.subr.bf16.mxu0 0
        %1651 = vmatpush1.bf16.msra.mxu0 0
        %1652 = vmatprep.subr.bf16.mxu0 0
        %1653 = vmatpush1.bf16.msra.mxu0 0
        %1654 = vmatprep.subr.bf16.mxu0 0
        %1655 = vmatpush1.bf16.msra.mxu0 0
        %1656 = vmatprep.subr.bf16.mxu0 0
        %1657 = vmatpush1.bf16.msra.mxu0 0
        %1658 = vmatprep.subr.bf16.mxu0 0
        %1659 = vmatpush1.bf16.msra.mxu0 0
        %1660 = vmatprep.subr.bf16.mxu0 0
        %1661 = vmatpush1.bf16.msra.mxu0 0
        %1662 = vmatprep.subr.bf16.mxu0 0
        %1663 = vmatpush1.bf16.msra.mxu0 0
        %1664 = vmatprep.subr.bf16.mxu0 0
        %1665 = vmatpush1.bf16.msra.mxu0 0
        %1666 = vmatprep.mubr.bf16.mxu0 0
        %1667 = vmatmul.mubr.bf16.gmra.mrb[0].mxu0 %v1558
        %v1668 = vpop.f32.mrb[0].mxu0
        %v1669 = vadd.f32 0.0, %v1668
        %v1670 = vpop.f32.mrb[0].mxu0
        %v1671 = vadd.f32 0.0, %v1670
        %v1672 = vpop.f32.mrb[0].mxu0
        %v1673 = vadd.f32 0.0, %v1672
        %v1674 = vpop.f32.mrb[0].mxu0
        %v1675 = vadd.f32 0.0, %v1674
        %1676 = vdwg.mxu0
        %s1677 = scalar_lea.vmem %s323, 128 [#allocation5]
        %v1678 = vld [vmem:[%s1677] sm:$0xff]
        %v1679 = vld [vmem:[%s1677 + $0x8] sm:$0xff]
        %v1680 = vld [vmem:[%s1677 + $0x10] sm:$0xff]
        %v1681 = vld [vmem:[%s1677 + $0x18] sm:$0xff]
        %v1682 = vunpack.c.l.bf16 %v1678
        %v1683 = vunpack.c.h.bf16 %v1678
        %v1684 = vunpack.c.l.bf16 %v1679
        %v1685 = vunpack.c.h.bf16 %v1679
        %v1686 = vunpack.c.l.bf16 %v1680
        %v1687 = vunpack.c.h.bf16 %v1680
        %v1688 = vunpack.c.l.bf16 %v1681
        %v1689 = vunpack.c.h.bf16 %v1681
        %v1690 = vadd.f32 %v1682, %v1626
        %v1691 = vadd.f32 %v1683, %v1628
        %v1692 = vadd.f32 %v1684, %v1669
        %v1693 = vadd.f32 %v1685, %v1671
        %v1694 = vadd.f32 %v1686, %v1630
        %v1695 = vadd.f32 %v1687, %v1632
        %v1696 = vadd.f32 %v1688, %v1673
        %v1697 = vadd.f32 %v1689, %v1675
        %v1698 = vxor.u32 %v1690, 2147483648
        %v1699 = vxor.u32 %v1694, 2147483648
        %v1700 = vmul.f32 %v1698, 1.442695
        %v1701 = vpow.pop %v1700
        %v1702 = vmul.f32 %v1699, 1.442695
        %v1703 = vpow.pop %v1702
        %v1704 = vadd.f32 %v1701, 1.0
        %v1705 = vadd.f32 %v1703, 1.0
        %v1706 = vrcp.pop %v1704
        %v1707 = vmul.f32 1.0, %v1706
        %v1708 = vrcp.pop %v1705
        %v1709 = vmul.f32 1.0, %v1708
        %v1710 = vxor.u32 %v1691, 2147483648
        %v1711 = vxor.u32 %v1695, 2147483648
        %v1712 = vmul.f32 %v1710, 1.442695
        %v1713 = vpow.pop %v1712
        %v1714 = vmul.f32 %v1711, 1.442695
        %v1715 = vpow.pop %v1714
        %v1716 = vadd.f32 %v1713, 1.0
        %v1717 = vadd.f32 %v1715, 1.0
        %v1718 = vrcp.pop %v1716
        %v1719 = vmul.f32 1.0, %v1718
        %v1720 = vrcp.pop %v1717
        %v1721 = vmul.f32 1.0, %v1720
        %v1722 = vtanh.pop %v1692
        %v1723 = vtanh.pop %v1696
        %v1724 = vxor.u32 %v1693, 2147483648
        %v1725 = vxor.u32 %v1697, 2147483648
        %v1726 = vmul.f32 %v1724, 1.442695
        %v1727 = vpow.pop %v1726
        %v1728 = vmul.f32 %v1725, 1.442695
        %v1729 = vpow.pop %v1728
        %v1730 = vadd.f32 %v1727, 1.0
        %v1731 = vadd.f32 %v1729, 1.0
        %v1732 = vrcp.pop %v1730
        %v1733 = vmul.f32 1.0, %v1732
        %v1734 = vrcp.pop %v1731
        %v1735 = vmul.f32 1.0, %v1734
        %v1736 = vld [vmem:[#allocation3] sm:$0xff]
        %v1737 = vld [vmem:[#allocation3 + $0x8] sm:$0xff]
        %v1738 = vmul.f32 %v1719, %v1736
        %v1739 = vmul.f32 %v1721, %v1737
        %v1740 = vmul.f32 %v1707, %v1722
        %v1741 = vmul.f32 %v1709, %v1723
        %v1742 = vadd.f32 %v1738, %v1740
        %v1743 = vadd.f32 %v1739, %v1741
        %v1744 = vtanh.pop %v1742
        %v1745 = vtanh.pop %v1743
        %v1746 = vmul.f32 %v1733, %v1744
        %v1747 = vmul.f32 %v1735, %v1745
        %1748 = vst [vmem:[#allocation3] sm:$0xff] %v1742
        %1749 = vst [vmem:[#allocation3 + $0x8] sm:$0xff] %v1743
        %v1750 = vpack.c.bf16 %v1747, %v1746
        %1751 = vst [vmem:[#allocation2] sm:$0xff] %v1750
        %s1752 = scalar_lea.vmem %s365, 64 [#allocation14]
        %1753 = vst [vmem:[%s1752] sm:$0xff] %v1746
        %1754 = vst [vmem:[%s1752 + $0x8] sm:$0xff] %v1747
        %v1755 = vld [vmem:[#allocation2] sm:$0xff]
        %v1756 = vld [vmem:[#allocation4] sm:$0xff]
        %v1757 = vld [vmem:[#allocation4 + $0x8] sm:$0xff]
        %v1758 = vld [vmem:[#allocation4 + $0x10] sm:$0xff]
        %v1759 = vld [vmem:[#allocation4 + $0x18] sm:$0xff]
        %v1760 = vld [vmem:[#allocation4 + $0x20] sm:$0xff]
        %v1761 = vld [vmem:[#allocation4 + $0x28] sm:$0xff]
        %v1762 = vld [vmem:[#allocation4 + $0x30] sm:$0xff]
        %v1763 = vld [vmem:[#allocation4 + $0x38] sm:$0xff]
        %v1764 = vld [vmem:[#allocation4 + $0x40] sm:$0xff]
        %v1765 = vld [vmem:[#allocation4 + $0x48] sm:$0xff]
        %v1766 = vld [vmem:[#allocation4 + $0x50] sm:$0xff]
        %v1767 = vld [vmem:[#allocation4 + $0x58] sm:$0xff]
        %v1768 = vld [vmem:[#allocation4 + $0x60] sm:$0xff]
        %v1769 = vld [vmem:[#allocation4 + $0x68] sm:$0xff]
        %v1770 = vld [vmem:[#allocation4 + $0x70] sm:$0xff]
        %v1771 = vld [vmem:[#allocation4 + $0x78] sm:$0xff]
        %v1772 = vld [vmem:[#allocation4 + $0x80] sm:$0xff]
        %v1773 = vld [vmem:[#allocation4 + $0x88] sm:$0xff]
        %v1774 = vld [vmem:[#allocation4 + $0x90] sm:$0xff]
        %v1775 = vld [vmem:[#allocation4 + $0x98] sm:$0xff]
        %v1776 = vld [vmem:[#allocation4 + $0xa0] sm:$0xff]
        %v1777 = vld [vmem:[#allocation4 + $0xa8] sm:$0xff]
        %v1778 = vld [vmem:[#allocation4 + $0xb0] sm:$0xff]
        %v1779 = vld [vmem:[#allocation4 + $0xb8] sm:$0xff]
        %v1780 = vld [vmem:[#allocation4 + $0xc0] sm:$0xff]
        %v1781 = vld [vmem:[#allocation4 + $0xc8] sm:$0xff]
        %v1782 = vld [vmem:[#allocation4 + $0xd0] sm:$0xff]
        %v1783 = vld [vmem:[#allocation4 + $0xd8] sm:$0xff]
        %v1784 = vld [vmem:[#allocation4 + $0xe0] sm:$0xff]
        %v1785 = vld [vmem:[#allocation4 + $0xe8] sm:$0xff]
        %v1786 = vld [vmem:[#allocation4 + $0xf0] sm:$0xff]
        %v1787 = vld [vmem:[#allocation4 + $0xf8] sm:$0xff]
        %1788 = vmatprep.subr.bf16.mxu0 %v1757
        %1789 = vmatpush1.bf16.msra.mxu0 %v1756
        %1790 = vmatprep.subr.bf16.mxu0 %v1761
        %1791 = vmatpush1.bf16.msra.mxu0 %v1760
        %1792 = vmatprep.subr.bf16.mxu0 %v1765
        %1793 = vmatpush1.bf16.msra.mxu0 %v1764
        %1794 = vmatprep.subr.bf16.mxu0 %v1769
        %1795 = vmatpush1.bf16.msra.mxu0 %v1768
        %1796 = vmatprep.subr.bf16.mxu0 %v1773
        %1797 = vmatpush1.bf16.msra.mxu0 %v1772
        %1798 = vmatprep.subr.bf16.mxu0 %v1777
        %1799 = vmatpush1.bf16.msra.mxu0 %v1776
        %1800 = vmatprep.subr.bf16.mxu0 %v1781
        %1801 = vmatpush1.bf16.msra.mxu0 %v1780
        %1802 = vmatprep.subr.bf16.mxu0 %v1785
        %1803 = vmatpush1.bf16.msra.mxu0 %v1784
        %1804 = vmatprep.subr.bf16.mxu0 0
        %1805 = vmatpush1.bf16.msra.mxu0 0
        %1806 = vmatprep.subr.bf16.mxu0 0
        %1807 = vmatpush1.bf16.msra.mxu0 0
        %1808 = vmatprep.subr.bf16.mxu0 0
        %1809 = vmatpush1.bf16.msra.mxu0 0
        %1810 = vmatprep.subr.bf16.mxu0 0
        %1811 = vmatpush1.bf16.msra.mxu0 0
        %1812 = vmatprep.subr.bf16.mxu0 0
        %1813 = vmatpush1.bf16.msra.mxu0 0
        %1814 = vmatprep.subr.bf16.mxu0 0
        %1815 = vmatpush1.bf16.msra.mxu0 0
        %1816 = vmatprep.subr.bf16.mxu0 0
        %1817 = vmatpush1.bf16.msra.mxu0 0
        %1818 = vmatprep.subr.bf16.mxu0 0
        %1819 = vmatpush1.bf16.msra.mxu0 0
        %1820 = vmatprep.mubr.bf16.mxu0 0
        %1821 = vmatmul.mubr.bf16.gmra.mrb[0].mxu0 %v1755
        %v1822 = vpop.f32.mrb[0].mxu0
        %v1823 = vadd.f32 0.0, %v1822
        %v1824 = vpop.f32.mrb[0].mxu0
        %v1825 = vadd.f32 0.0, %v1824
        %v1826 = vpop.f32.mrb[0].mxu0
        %v1827 = vadd.f32 0.0, %v1826
        %v1828 = vpop.f32.mrb[0].mxu0
        %v1829 = vadd.f32 0.0, %v1828
        %1830 = vdwg.mxu0
        %1831 = vmatprep.subr.bf16.mxu0 %v1759
        %1832 = vmatpush1.bf16.msra.mxu0 %v1758
        %1833 = vmatprep.subr.bf16.mxu0 %v1763
        %1834 = vmatpush1.bf16.msra.mxu0 %v1762
        %1835 = vmatprep.subr.bf16.mxu0 %v1767
        %1836 = vmatpush1.bf16.msra.mxu0 %v1766
        %1837 = vmatprep.subr.bf16.mxu0 %v1771
        %1838 = vmatpush1.bf16.msra.mxu0 %v1770
        %1839 = vmatprep.subr.bf16.mxu0 %v1775
        %1840 = vmatpush1.bf16.msra.mxu0 %v1774
        %1841 = vmatprep.subr.bf16.mxu0 %v1779
        %1842 = vmatpush1.bf16.msra.mxu0 %v1778
        %1843 = vmatprep.subr.bf16.mxu0 %v1783
        %1844 = vmatpush1.bf16.msra.mxu0 %v1782
        %1845 = vmatprep.subr.bf16.mxu0 %v1787
        %1846 = vmatpush1.bf16.msra.mxu0 %v1786
        %1847 = vmatprep.subr.bf16.mxu0 0
        %1848 = vmatpush1.bf16.msra.mxu0 0
        %1849 = vmatprep.subr.bf16.mxu0 0
        %1850 = vmatpush1.bf16.msra.mxu0 0
        %1851 = vmatprep.subr.bf16.mxu0 0
        %1852 = vmatpush1.bf16.msra.mxu0 0
        %1853 = vmatprep.subr.bf16.mxu0 0
        %1854 = vmatpush1.bf16.msra.mxu0 0
        %1855 = vmatprep.subr.bf16.mxu0 0
        %1856 = vmatpush1.bf16.msra.mxu0 0
        %1857 = vmatprep.subr.bf16.mxu0 0
        %1858 = vmatpush1.bf16.msra.mxu0 0
        %1859 = vmatprep.subr.bf16.mxu0 0
        %1860 = vmatpush1.bf16.msra.mxu0 0
        %1861 = vmatprep.subr.bf16.mxu0 0
        %1862 = vmatpush1.bf16.msra.mxu0 0
        %1863 = vmatprep.mubr.bf16.mxu0 0
        %1864 = vmatmul.mubr.bf16.gmra.mrb[0].mxu0 %v1755
        %v1865 = vpop.f32.mrb[0].mxu0
        %v1866 = vadd.f32 0.0, %v1865
        %v1867 = vpop.f32.mrb[0].mxu0
        %v1868 = vadd.f32 0.0, %v1867
        %v1869 = vpop.f32.mrb[0].mxu0
        %v1870 = vadd.f32 0.0, %v1869
        %v1871 = vpop.f32.mrb[0].mxu0
        %v1872 = vadd.f32 0.0, %v1871
        %1873 = vdwg.mxu0
        %s1874 = scalar_lea.vmem %s323, 160 [#allocation5]
        %v1875 = vld [vmem:[%s1874] sm:$0xff]
        %v1876 = vld [vmem:[%s1874 + $0x8] sm:$0xff]
        %v1877 = vld [vmem:[%s1874 + $0x10] sm:$0xff]
        %v1878 = vld [vmem:[%s1874 + $0x18] sm:$0xff]
        %v1879 = vunpack.c.l.bf16 %v1875
        %v1880 = vunpack.c.h.bf16 %v1875
        %v1881 = vunpack.c.l.bf16 %v1876
        %v1882 = vunpack.c.h.bf16 %v1876
        %v1883 = vunpack.c.l.bf16 %v1877
        %v1884 = vunpack.c.h.bf16 %v1877
        %v1885 = vunpack.c.l.bf16 %v1878
        %v1886 = vunpack.c.h.bf16 %v1878
        %v1887 = vadd.f32 %v1879, %v1823
        %v1888 = vadd.f32 %v1880, %v1825
        %v1889 = vadd.f32 %v1881, %v1866
        %v1890 = vadd.f32 %v1882, %v1868
        %v1891 = vadd.f32 %v1883, %v1827
        %v1892 = vadd.f32 %v1884, %v1829
        %v1893 = vadd.f32 %v1885, %v1870
        %v1894 = vadd.f32 %v1886, %v1872
        %v1895 = vxor.u32 %v1887, 2147483648
        %v1896 = vxor.u32 %v1891, 2147483648
        %v1897 = vmul.f32 %v1895, 1.442695
        %v1898 = vpow.pop %v1897
        %v1899 = vmul.f32 %v1896, 1.442695
        %v1900 = vpow.pop %v1899
        %v1901 = vadd.f32 %v1898, 1.0
        %v1902 = vadd.f32 %v1900, 1.0
        %v1903 = vrcp.pop %v1901
        %v1904 = vmul.f32 1.0, %v1903
        %v1905 = vrcp.pop %v1902
        %v1906 = vmul.f32 1.0, %v1905
        %v1907 = vxor.u32 %v1888, 2147483648
        %v1908 = vxor.u32 %v1892, 2147483648
        %v1909 = vmul.f32 %v1907, 1.442695
        %v1910 = vpow.pop %v1909
        %v1911 = vmul.f32 %v1908, 1.442695
        %v1912 = vpow.pop %v1911
        %v1913 = vadd.f32 %v1910, 1.0
        %v1914 = vadd.f32 %v1912, 1.0
        %v1915 = vrcp.pop %v1913
        %v1916 = vmul.f32 1.0, %v1915
        %v1917 = vrcp.pop %v1914
        %v1918 = vmul.f32 1.0, %v1917
        %v1919 = vtanh.pop %v1889
        %v1920 = vtanh.pop %v1893
        %v1921 = vxor.u32 %v1890, 2147483648
        %v1922 = vxor.u32 %v1894, 2147483648
        %v1923 = vmul.f32 %v1921, 1.442695
        %v1924 = vpow.pop %v1923
        %v1925 = vmul.f32 %v1922, 1.442695
        %v1926 = vpow.pop %v1925
        %v1927 = vadd.f32 %v1924, 1.0
        %v1928 = vadd.f32 %v1926, 1.0
        %v1929 = vrcp.pop %v1927
        %v1930 = vmul.f32 1.0, %v1929
        %v1931 = vrcp.pop %v1928
        %v1932 = vmul.f32 1.0, %v1931
        %v1933 = vld [vmem:[#allocation3] sm:$0xff]
        %v1934 = vld [vmem:[#allocation3 + $0x8] sm:$0xff]
        %v1935 = vmul.f32 %v1916, %v1933
        %v1936 = vmul.f32 %v1918, %v1934
        %v1937 = vmul.f32 %v1904, %v1919
        %v1938 = vmul.f32 %v1906, %v1920
        %v1939 = vadd.f32 %v1935, %v1937
        %v1940 = vadd.f32 %v1936, %v1938
        %v1941 = vtanh.pop %v1939
        %v1942 = vtanh.pop %v1940
        %v1943 = vmul.f32 %v1930, %v1941
        %v1944 = vmul.f32 %v1932, %v1942
        %1945 = vst [vmem:[#allocation3] sm:$0xff] %v1939
        %1946 = vst [vmem:[#allocation3 + $0x8] sm:$0xff] %v1940
        %v1947 = vpack.c.bf16 %v1944, %v1943
        %1948 = vst [vmem:[#allocation2] sm:$0xff] %v1947
        %s1949 = scalar_lea.vmem %s365, 80 [#allocation14]
        %1950 = vst [vmem:[%s1949] sm:$0xff] %v1943
        %1951 = vst [vmem:[%s1949 + $0x8] sm:$0xff] %v1944
        %v1952 = vld [vmem:[#allocation2] sm:$0xff]
        %v1953 = vld [vmem:[#allocation4] sm:$0xff]
        %v1954 = vld [vmem:[#allocation4 + $0x8] sm:$0xff]
        %v1955 = vld [vmem:[#allocation4 + $0x10] sm:$0xff]
        %v1956 = vld [vmem:[#allocation4 + $0x18] sm:$0xff]
        %v1957 = vld [vmem:[#allocation4 + $0x20] sm:$0xff]
        %v1958 = vld [vmem:[#allocation4 + $0x28] sm:$0xff]
        %v1959 = vld [vmem:[#allocation4 + $0x30] sm:$0xff]
        %v1960 = vld [vmem:[#allocation4 + $0x38] sm:$0xff]
        %v1961 = vld [vmem:[#allocation4 + $0x40] sm:$0xff]
        %v1962 = vld [vmem:[#allocation4 + $0x48] sm:$0xff]
        %v1963 = vld [vmem:[#allocation4 + $0x50] sm:$0xff]
        %v1964 = vld [vmem:[#allocation4 + $0x58] sm:$0xff]
        %v1965 = vld [vmem:[#allocation4 + $0x60] sm:$0xff]
        %v1966 = vld [vmem:[#allocation4 + $0x68] sm:$0xff]
        %v1967 = vld [vmem:[#allocation4 + $0x70] sm:$0xff]
        %v1968 = vld [vmem:[#allocation4 + $0x78] sm:$0xff]
        %v1969 = vld [vmem:[#allocation4 + $0x80] sm:$0xff]
        %v1970 = vld [vmem:[#allocation4 + $0x88] sm:$0xff]
        %v1971 = vld [vmem:[#allocation4 + $0x90] sm:$0xff]
        %v1972 = vld [vmem:[#allocation4 + $0x98] sm:$0xff]
        %v1973 = vld [vmem:[#allocation4 + $0xa0] sm:$0xff]
        %v1974 = vld [vmem:[#allocation4 + $0xa8] sm:$0xff]
        %v1975 = vld [vmem:[#allocation4 + $0xb0] sm:$0xff]
        %v1976 = vld [vmem:[#allocation4 + $0xb8] sm:$0xff]
        %v1977 = vld [vmem:[#allocation4 + $0xc0] sm:$0xff]
        %v1978 = vld [vmem:[#allocation4 + $0xc8] sm:$0xff]
        %v1979 = vld [vmem:[#allocation4 + $0xd0] sm:$0xff]
        %v1980 = vld [vmem:[#allocation4 + $0xd8] sm:$0xff]
        %v1981 = vld [vmem:[#allocation4 + $0xe0] sm:$0xff]
        %v1982 = vld [vmem:[#allocation4 + $0xe8] sm:$0xff]
        %v1983 = vld [vmem:[#allocation4 + $0xf0] sm:$0xff]
        %v1984 = vld [vmem:[#allocation4 + $0xf8] sm:$0xff]
        %1985 = vmatprep.subr.bf16.mxu0 %v1954
        %1986 = vmatpush1.bf16.msra.mxu0 %v1953
        %1987 = vmatprep.subr.bf16.mxu0 %v1958
        %1988 = vmatpush1.bf16.msra.mxu0 %v1957
        %1989 = vmatprep.subr.bf16.mxu0 %v1962
        %1990 = vmatpush1.bf16.msra.mxu0 %v1961
        %1991 = vmatprep.subr.bf16.mxu0 %v1966
        %1992 = vmatpush1.bf16.msra.mxu0 %v1965
        %1993 = vmatprep.subr.bf16.mxu0 %v1970
        %1994 = vmatpush1.bf16.msra.mxu0 %v1969
        %1995 = vmatprep.subr.bf16.mxu0 %v1974
        %1996 = vmatpush1.bf16.msra.mxu0 %v1973
        %1997 = vmatprep.subr.bf16.mxu0 %v1978
        %1998 = vmatpush1.bf16.msra.mxu0 %v1977
        %1999 = vmatprep.subr.bf16.mxu0 %v1982
        %2000 = vmatpush1.bf16.msra.mxu0 %v1981
        %2001 = vmatprep.subr.bf16.mxu0 0
        %2002 = vmatpush1.bf16.msra.mxu0 0
        %2003 = vmatprep.subr.bf16.mxu0 0
        %2004 = vmatpush1.bf16.msra.mxu0 0
        %2005 = vmatprep.subr.bf16.mxu0 0
        %2006 = vmatpush1.bf16.msra.mxu0 0
        %2007 = vmatprep.subr.bf16.mxu0 0
        %2008 = vmatpush1.bf16.msra.mxu0 0
        %2009 = vmatprep.subr.bf16.mxu0 0
        %2010 = vmatpush1.bf16.msra.mxu0 0
        %2011 = vmatprep.subr.bf16.mxu0 0
        %2012 = vmatpush1.bf16.msra.mxu0 0
        %2013 = vmatprep.subr.bf16.mxu0 0
        %2014 = vmatpush1.bf16.msra.mxu0 0
        %2015 = vmatprep.subr.bf16.mxu0 0
        %2016 = vmatpush1.bf16.msra.mxu0 0
        %2017 = vmatprep.mubr.bf16.mxu0 0
        %2018 = vmatmul.mubr.bf16.gmra.mrb[0].mxu0 %v1952
        %v2019 = vpop.f32.mrb[0].mxu0
        %v2020 = vadd.f32 0.0, %v2019
        %v2021 = vpop.f32.mrb[0].mxu0
        %v2022 = vadd.f32 0.0, %v2021
        %v2023 = vpop.f32.mrb[0].mxu0
        %v2024 = vadd.f32 0.0, %v2023
        %v2025 = vpop.f32.mrb[0].mxu0
        %v2026 = vadd.f32 0.0, %v2025
        %2027 = vdwg.mxu0
        %2028 = vmatprep.subr.bf16.mxu0 %v1956
        %2029 = vmatpush1.bf16.msra.mxu0 %v1955
        %2030 = vmatprep.subr.bf16.mxu0 %v1960
        %2031 = vmatpush1.bf16.msra.mxu0 %v1959
        %2032 = vmatprep.subr.bf16.mxu0 %v1964
        %2033 = vmatpush1.bf16.msra.mxu0 %v1963
        %2034 = vmatprep.subr.bf16.mxu0 %v1968
        %2035 = vmatpush1.bf16.msra.mxu0 %v1967
        %2036 = vmatprep.subr.bf16.mxu0 %v1972
        %2037 = vmatpush1.bf16.msra.mxu0 %v1971
        %2038 = vmatprep.subr.bf16.mxu0 %v1976
        %2039 = vmatpush1.bf16.msra.mxu0 %v1975
        %2040 = vmatprep.subr.bf16.mxu0 %v1980
        %2041 = vmatpush1.bf16.msra.mxu0 %v1979
        %2042 = vmatprep.subr.bf16.mxu0 %v1984
        %2043 = vmatpush1.bf16.msra.mxu0 %v1983
        %2044 = vmatprep.subr.bf16.mxu0 0
        %2045 = vmatpush1.bf16.msra.mxu0 0
        %2046 = vmatprep.subr.bf16.mxu0 0
        %2047 = vmatpush1.bf16.msra.mxu0 0
        %2048 = vmatprep.subr.bf16.mxu0 0
        %2049 = vmatpush1.bf16.msra.mxu0 0
        %2050 = vmatprep.subr.bf16.mxu0 0
        %2051 = vmatpush1.bf16.msra.mxu0 0
        %2052 = vmatprep.subr.bf16.mxu0 0
        %2053 = vmatpush1.bf16.msra.mxu0 0
        %2054 = vmatprep.subr.bf16.mxu0 0
        %2055 = vmatpush1.bf16.msra.mxu0 0
        %2056 = vmatprep.subr.bf16.mxu0 0
        %2057 = vmatpush1.bf16.msra.mxu0 0
        %2058 = vmatprep.subr.bf16.mxu0 0
        %2059 = vmatpush1.bf16.msra.mxu0 0
        %2060 = vmatprep.mubr.bf16.mxu0 0
        %2061 = vmatmul.mubr.bf16.gmra.mrb[0].mxu0 %v1952
        %v2062 = vpop.f32.mrb[0].mxu0
        %v2063 = vadd.f32 0.0, %v2062
        %v2064 = vpop.f32.mrb[0].mxu0
        %v2065 = vadd.f32 0.0, %v2064
        %v2066 = vpop.f32.mrb[0].mxu0
        %v2067 = vadd.f32 0.0, %v2066
        %v2068 = vpop.f32.mrb[0].mxu0
        %v2069 = vadd.f32 0.0, %v2068
        %2070 = vdwg.mxu0
        %s2071 = scalar_lea.vmem %s323, 192 [#allocation5]
        %v2072 = vld [vmem:[%s2071] sm:$0xff]
        %v2073 = vld [vmem:[%s2071 + $0x8] sm:$0xff]
        %v2074 = vld [vmem:[%s2071 + $0x10] sm:$0xff]
        %v2075 = vld [vmem:[%s2071 + $0x18] sm:$0xff]
        %v2076 = vunpack.c.l.bf16 %v2072
        %v2077 = vunpack.c.h.bf16 %v2072
        %v2078 = vunpack.c.l.bf16 %v2073
        %v2079 = vunpack.c.h.bf16 %v2073
        %v2080 = vunpack.c.l.bf16 %v2074
        %v2081 = vunpack.c.h.bf16 %v2074
        %v2082 = vunpack.c.l.bf16 %v2075
        %v2083 = vunpack.c.h.bf16 %v2075
        %v2084 = vadd.f32 %v2076, %v2020
        %v2085 = vadd.f32 %v2077, %v2022
        %v2086 = vadd.f32 %v2078, %v2063
        %v2087 = vadd.f32 %v2079, %v2065
        %v2088 = vadd.f32 %v2080, %v2024
        %v2089 = vadd.f32 %v2081, %v2026
        %v2090 = vadd.f32 %v2082, %v2067
        %v2091 = vadd.f32 %v2083, %v2069
        %v2092 = vxor.u32 %v2084, 2147483648
        %v2093 = vxor.u32 %v2088, 2147483648
        %v2094 = vmul.f32 %v2092, 1.442695
        %v2095 = vpow.pop %v2094
        %v2096 = vmul.f32 %v2093, 1.442695
        %v2097 = vpow.pop %v2096
        %v2098 = vadd.f32 %v2095, 1.0
        %v2099 = vadd.f32 %v2097, 1.0
        %v2100 = vrcp.pop %v2098
        %v2101 = vmul.f32 1.0, %v2100
        %v2102 = vrcp.pop %v2099
        %v2103 = vmul.f32 1.0, %v2102
        %v2104 = vxor.u32 %v2085, 2147483648
        %v2105 = vxor.u32 %v2089, 2147483648
        %v2106 = vmul.f32 %v2104, 1.442695
        %v2107 = vpow.pop %v2106
        %v2108 = vmul.f32 %v2105, 1.442695
        %v2109 = vpow.pop %v2108
        %v2110 = vadd.f32 %v2107, 1.0
        %v2111 = vadd.f32 %v2109, 1.0
        %v2112 = vrcp.pop %v2110
        %v2113 = vmul.f32 1.0, %v2112
        %v2114 = vrcp.pop %v2111
        %v2115 = vmul.f32 1.0, %v2114
        %v2116 = vtanh.pop %v2086
        %v2117 = vtanh.pop %v2090
        %v2118 = vxor.u32 %v2087, 2147483648
        %v2119 = vxor.u32 %v2091, 2147483648
        %v2120 = vmul.f32 %v2118, 1.442695
        %v2121 = vpow.pop %v2120
        %v2122 = vmul.f32 %v2119, 1.442695
        %v2123 = vpow.pop %v2122
        %v2124 = vadd.f32 %v2121, 1.0
        %v2125 = vadd.f32 %v2123, 1.0
        %v2126 = vrcp.pop %v2124
        %v2127 = vmul.f32 1.0, %v2126
        %v2128 = vrcp.pop %v2125
        %v2129 = vmul.f32 1.0, %v2128
        %v2130 = vld [vmem:[#allocation3] sm:$0xff]
        %v2131 = vld [vmem:[#allocation3 + $0x8] sm:$0xff]
        %v2132 = vmul.f32 %v2113, %v2130
        %v2133 = vmul.f32 %v2115, %v2131
        %v2134 = vmul.f32 %v2101, %v2116
        %v2135 = vmul.f32 %v2103, %v2117
        %v2136 = vadd.f32 %v2132, %v2134
        %v2137 = vadd.f32 %v2133, %v2135
        %v2138 = vtanh.pop %v2136
        %v2139 = vtanh.pop %v2137
        %v2140 = vmul.f32 %v2127, %v2138
        %v2141 = vmul.f32 %v2129, %v2139
        %2142 = vst [vmem:[#allocation3] sm:$0xff] %v2136
        %2143 = vst [vmem:[#allocation3 + $0x8] sm:$0xff] %v2137
        %v2144 = vpack.c.bf16 %v2141, %v2140
        %2145 = vst [vmem:[#allocation2] sm:$0xff] %v2144
        %s2146 = scalar_lea.vmem %s365, 96 [#allocation14]
        %2147 = vst [vmem:[%s2146] sm:$0xff] %v2140
        %2148 = vst [vmem:[%s2146 + $0x8] sm:$0xff] %v2141
        %v2149 = vld [vmem:[#allocation2] sm:$0xff]
        %v2150 = vld [vmem:[#allocation4] sm:$0xff]
        %v2151 = vld [vmem:[#allocation4 + $0x8] sm:$0xff]
        %v2152 = vld [vmem:[#allocation4 + $0x10] sm:$0xff]
        %v2153 = vld [vmem:[#allocation4 + $0x18] sm:$0xff]
        %v2154 = vld [vmem:[#allocation4 + $0x20] sm:$0xff]
        %v2155 = vld [vmem:[#allocation4 + $0x28] sm:$0xff]
        %v2156 = vld [vmem:[#allocation4 + $0x30] sm:$0xff]
        %v2157 = vld [vmem:[#allocation4 + $0x38] sm:$0xff]
        %v2158 = vld [vmem:[#allocation4 + $0x40] sm:$0xff]
        %v2159 = vld [vmem:[#allocation4 + $0x48] sm:$0xff]
        %v2160 = vld [vmem:[#allocation4 + $0x50] sm:$0xff]
        %v2161 = vld [vmem:[#allocation4 + $0x58] sm:$0xff]
        %v2162 = vld [vmem:[#allocation4 + $0x60] sm:$0xff]
        %v2163 = vld [vmem:[#allocation4 + $0x68] sm:$0xff]
        %v2164 = vld [vmem:[#allocation4 + $0x70] sm:$0xff]
        %v2165 = vld [vmem:[#allocation4 + $0x78] sm:$0xff]
        %v2166 = vld [vmem:[#allocation4 + $0x80] sm:$0xff]
        %v2167 = vld [vmem:[#allocation4 + $0x88] sm:$0xff]
        %v2168 = vld [vmem:[#allocation4 + $0x90] sm:$0xff]
        %v2169 = vld [vmem:[#allocation4 + $0x98] sm:$0xff]
        %v2170 = vld [vmem:[#allocation4 + $0xa0] sm:$0xff]
        %v2171 = vld [vmem:[#allocation4 + $0xa8] sm:$0xff]
        %v2172 = vld [vmem:[#allocation4 + $0xb0] sm:$0xff]
        %v2173 = vld [vmem:[#allocation4 + $0xb8] sm:$0xff]
        %v2174 = vld [vmem:[#allocation4 + $0xc0] sm:$0xff]
        %v2175 = vld [vmem:[#allocation4 + $0xc8] sm:$0xff]
        %v2176 = vld [vmem:[#allocation4 + $0xd0] sm:$0xff]
        %v2177 = vld [vmem:[#allocation4 + $0xd8] sm:$0xff]
        %v2178 = vld [vmem:[#allocation4 + $0xe0] sm:$0xff]
        %v2179 = vld [vmem:[#allocation4 + $0xe8] sm:$0xff]
        %v2180 = vld [vmem:[#allocation4 + $0xf0] sm:$0xff]
        %v2181 = vld [vmem:[#allocation4 + $0xf8] sm:$0xff]
        %2182 = vmatprep.subr.bf16.mxu0 %v2151
        %2183 = vmatpush1.bf16.msra.mxu0 %v2150
        %2184 = vmatprep.subr.bf16.mxu0 %v2155
        %2185 = vmatpush1.bf16.msra.mxu0 %v2154
        %2186 = vmatprep.subr.bf16.mxu0 %v2159
        %2187 = vmatpush1.bf16.msra.mxu0 %v2158
        %2188 = vmatprep.subr.bf16.mxu0 %v2163
        %2189 = vmatpush1.bf16.msra.mxu0 %v2162
        %2190 = vmatprep.subr.bf16.mxu0 %v2167
        %2191 = vmatpush1.bf16.msra.mxu0 %v2166
        %2192 = vmatprep.subr.bf16.mxu0 %v2171
        %2193 = vmatpush1.bf16.msra.mxu0 %v2170
        %2194 = vmatprep.subr.bf16.mxu0 %v2175
        %2195 = vmatpush1.bf16.msra.mxu0 %v2174
        %2196 = vmatprep.subr.bf16.mxu0 %v2179
        %2197 = vmatpush1.bf16.msra.mxu0 %v2178
        %2198 = vmatprep.subr.bf16.mxu0 0
        %2199 = vmatpush1.bf16.msra.mxu0 0
        %2200 = vmatprep.subr.bf16.mxu0 0
        %2201 = vmatpush1.bf16.msra.mxu0 0
        %2202 = vmatprep.subr.bf16.mxu0 0
        %2203 = vmatpush1.bf16.msra.mxu0 0
        %2204 = vmatprep.subr.bf16.mxu0 0
        %2205 = vmatpush1.bf16.msra.mxu0 0
        %2206 = vmatprep.subr.bf16.mxu0 0
        %2207 = vmatpush1.bf16.msra.mxu0 0
        %2208 = vmatprep.subr.bf16.mxu0 0
        %2209 = vmatpush1.bf16.msra.mxu0 0
        %2210 = vmatprep.subr.bf16.mxu0 0
        %2211 = vmatpush1.bf16.msra.mxu0 0
        %2212 = vmatprep.subr.bf16.mxu0 0
        %2213 = vmatpush1.bf16.msra.mxu0 0
        %2214 = vmatprep.mubr.bf16.mxu0 0
        %2215 = vmatmul.mubr.bf16.gmra.mrb[0].mxu0 %v2149
        %v2216 = vpop.f32.mrb[0].mxu0
        %v2217 = vadd.f32 0.0, %v2216
        %v2218 = vpop.f32.mrb[0].mxu0
        %v2219 = vadd.f32 0.0, %v2218
        %v2220 = vpop.f32.mrb[0].mxu0
        %v2221 = vadd.f32 0.0, %v2220
        %v2222 = vpop.f32.mrb[0].mxu0
        %v2223 = vadd.f32 0.0, %v2222
        %2224 = vdwg.mxu0
        %2225 = vmatprep.subr.bf16.mxu0 %v2153
        %2226 = vmatpush1.bf16.msra.mxu0 %v2152
        %2227 = vmatprep.subr.bf16.mxu0 %v2157
        %2228 = vmatpush1.bf16.msra.mxu0 %v2156
        %2229 = vmatprep.subr.bf16.mxu0 %v2161
        %2230 = vmatpush1.bf16.msra.mxu0 %v2160
        %2231 = vmatprep.subr.bf16.mxu0 %v2165
        %2232 = vmatpush1.bf16.msra.mxu0 %v2164
        %2233 = vmatprep.subr.bf16.mxu0 %v2169
        %2234 = vmatpush1.bf16.msra.mxu0 %v2168
        %2235 = vmatprep.subr.bf16.mxu0 %v2173
        %2236 = vmatpush1.bf16.msra.mxu0 %v2172
        %2237 = vmatprep.subr.bf16.mxu0 %v2177
        %2238 = vmatpush1.bf16.msra.mxu0 %v2176
        %2239 = vmatprep.subr.bf16.mxu0 %v2181
        %2240 = vmatpush1.bf16.msra.mxu0 %v2180
        %2241 = vmatprep.subr.bf16.mxu0 0
        %2242 = vmatpush1.bf16.msra.mxu0 0
        %2243 = vmatprep.subr.bf16.mxu0 0
        %2244 = vmatpush1.bf16.msra.mxu0 0
        %2245 = vmatprep.subr.bf16.mxu0 0
        %2246 = vmatpush1.bf16.msra.mxu0 0
        %2247 = vmatprep.subr.bf16.mxu0 0
        %2248 = vmatpush1.bf16.msra.mxu0 0
        %2249 = vmatprep.subr.bf16.mxu0 0
        %2250 = vmatpush1.bf16.msra.mxu0 0
        %2251 = vmatprep.subr.bf16.mxu0 0
        %2252 = vmatpush1.bf16.msra.mxu0 0
        %2253 = vmatprep.subr.bf16.mxu0 0
        %2254 = vmatpush1.bf16.msra.mxu0 0
        %2255 = vmatprep.subr.bf16.mxu0 0
        %2256 = vmatpush1.bf16.msra.mxu0 0
        %2257 = vmatprep.mubr.bf16.mxu0 0
        %2258 = vmatmul.mubr.bf16.gmra.mrb[0].mxu0 %v2149
        %v2259 = vpop.f32.mrb[0].mxu0
        %v2260 = vadd.f32 0.0, %v2259
        %v2261 = vpop.f32.mrb[0].mxu0
        %v2262 = vadd.f32 0.0, %v2261
        %v2263 = vpop.f32.mrb[0].mxu0
        %v2264 = vadd.f32 0.0, %v2263
        %v2265 = vpop.f32.mrb[0].mxu0
        %v2266 = vadd.f32 0.0, %v2265
        %2267 = vdwg.mxu0
        %s2268 = scalar_lea.vmem %s323, 224 [#allocation5]
        %v2269 = vld [vmem:[%s2268] sm:$0xff]
        %v2270 = vld [vmem:[%s2268 + $0x8] sm:$0xff]
        %v2271 = vld [vmem:[%s2268 + $0x10] sm:$0xff]
        %v2272 = vld [vmem:[%s2268 + $0x18] sm:$0xff]
        %v2273 = vunpack.c.l.bf16 %v2269
        %v2274 = vunpack.c.h.bf16 %v2269
        %v2275 = vunpack.c.l.bf16 %v2270
        %v2276 = vunpack.c.h.bf16 %v2270
        %v2277 = vunpack.c.l.bf16 %v2271
        %v2278 = vunpack.c.h.bf16 %v2271
        %v2279 = vunpack.c.l.bf16 %v2272
        %v2280 = vunpack.c.h.bf16 %v2272
        %v2281 = vadd.f32 %v2273, %v2217
        %v2282 = vadd.f32 %v2274, %v2219
        %v2283 = vadd.f32 %v2275, %v2260
        %v2284 = vadd.f32 %v2276, %v2262
        %v2285 = vadd.f32 %v2277, %v2221
        %v2286 = vadd.f32 %v2278, %v2223
        %v2287 = vadd.f32 %v2279, %v2264
        %v2288 = vadd.f32 %v2280, %v2266
        %v2289 = vxor.u32 %v2281, 2147483648
        %v2290 = vxor.u32 %v2285, 2147483648
        %v2291 = vmul.f32 %v2289, 1.442695
        %v2292 = vpow.pop %v2291
        %v2293 = vmul.f32 %v2290, 1.442695
        %v2294 = vpow.pop %v2293
        %v2295 = vadd.f32 %v2292, 1.0
        %v2296 = vadd.f32 %v2294, 1.0
        %v2297 = vrcp.pop %v2295
        %v2298 = vmul.f32 1.0, %v2297
        %v2299 = vrcp.pop %v2296
        %v2300 = vmul.f32 1.0, %v2299
        %v2301 = vxor.u32 %v2282, 2147483648
        %v2302 = vxor.u32 %v2286, 2147483648
        %v2303 = vmul.f32 %v2301, 1.442695
        %v2304 = vpow.pop %v2303
        %v2305 = vmul.f32 %v2302, 1.442695
        %v2306 = vpow.pop %v2305
        %v2307 = vadd.f32 %v2304, 1.0
        %v2308 = vadd.f32 %v2306, 1.0
        %v2309 = vrcp.pop %v2307
        %v2310 = vmul.f32 1.0, %v2309
        %v2311 = vrcp.pop %v2308
        %v2312 = vmul.f32 1.0, %v2311
        %v2313 = vtanh.pop %v2283
        %v2314 = vtanh.pop %v2287
        %v2315 = vxor.u32 %v2284, 2147483648
        %v2316 = vxor.u32 %v2288, 2147483648
        %v2317 = vmul.f32 %v2315, 1.442695
        %v2318 = vpow.pop %v2317
        %v2319 = vmul.f32 %v2316, 1.442695
        %v2320 = vpow.pop %v2319
        %v2321 = vadd.f32 %v2318, 1.0
        %v2322 = vadd.f32 %v2320, 1.0
        %v2323 = vrcp.pop %v2321
        %v2324 = vmul.f32 1.0, %v2323
        %v2325 = vrcp.pop %v2322
        %v2326 = vmul.f32 1.0, %v2325
        %v2327 = vld [vmem:[#allocation3] sm:$0xff]
        %v2328 = vld [vmem:[#allocation3 + $0x8] sm:$0xff]
        %v2329 = vmul.f32 %v2310, %v2327
        %v2330 = vmul.f32 %v2312, %v2328
        %v2331 = vmul.f32 %v2298, %v2313
        %v2332 = vmul.f32 %v2300, %v2314
        %v2333 = vadd.f32 %v2329, %v2331
        %v2334 = vadd.f32 %v2330, %v2332
        %v2335 = vtanh.pop %v2333
        %v2336 = vtanh.pop %v2334
        %v2337 = vmul.f32 %v2324, %v2335
        %v2338 = vmul.f32 %v2326, %v2336
        %2339 = vst [vmem:[#allocation3] sm:$0xff] %v2333
        %2340 = vst [vmem:[#allocation3 + $0x8] sm:$0xff] %v2334
        %v2341 = vpack.c.bf16 %v2338, %v2337
        %2342 = vst [vmem:[#allocation2] sm:$0xff] %v2341
        %s2343 = scalar_lea.vmem %s365, 112 [#allocation14]
        %2344 = vst [vmem:[%s2343] sm:$0xff] %v2337
        %2345 = vst [vmem:[%s2343 + $0x8] sm:$0xff] %v2338
        %v2346 = vld [vmem:[#allocation3] sm:$0xff]
        %v2347 = vld [vmem:[#allocation3 + $0x8] sm:$0xff]
        %2348 = vst [vmem:[#allocation15] sm:$0xff] %v2346
        %2349 = vst [vmem:[#allocation15 + $0x8] sm:$0xff] %v2347
        %s2350 = sand.u32 %s171, 1
        %s2351 = scalar_lea.sflag [#allocation7], %s2350
        %s2352 = sand.u32 %s171, 1
        %s2353 = smul.addr %s2352, 128
        %s2354 = scalar_lea.vmem [#allocation14], %s2353
        // Predicated region
        $region65: #{tpu_custom_call.1} parent=39 // pred_check
          %p2355 = pneg %p181
        $region66: #{tpu_custom_call.1} parent=39 // pred_check_branch
          %2357 = sbr.rel (%p2355) target = $region68
        $region67: #{tpu_custom_call.1} parent=39 // pred_region
          %s2358 = smul.u32 8, %s32
          %s2359 = smul.u32 2, %s31
          %s2361 = ssub.s32 2048, 2048
          %2362 = vsyncadd %s2351, %s2361
          %s2363 = smul.addr %s2358, 2
          %s2364 = sadd.s32 %s2359, %s2363
          %s2365 = smul.addr %s2364, 128
          %s2366 = scalar_lea.hbm %s5, %s2365
          %s2367 = sshll.u32 %s2354, 4
          %s2368 = int_to_ptr.vmem [resolvable:$true] %s2367
          %2373 = dma.vmem_to_hbm [thread:$0]  %s2368, 2048, %s2366, %s2351, 128, 128, 8
        $region68: #{tpu_custom_call.1} parent=39 // pred_fallthru
          _
        // Predicated region
        $region69: #{tpu_custom_call.1} parent=39 // pred_check
          %p2374 = pneg %p207
        $region70: #{tpu_custom_call.1} parent=39 // pred_check_branch
          %2376 = sbr.rel (%p2374) target = $region72
        $region71: #{tpu_custom_call.1} parent=39 // pred_region
          %s2377 = smul.u32 2, %s31
          %s2379 = ssub.s32 256, 256
          %2380 = vsyncadd [#allocation16], %s2379
          %s2381 = smul.addr %s2377, 128
          %s2382 = scalar_lea.hbm %s6, %s2381
          %s2383 = sshll.u32 [#allocation15], 4
          %s2384 = int_to_ptr.vmem [resolvable:$true] %s2383
          %2389 = dma.vmem_to_hbm [thread:$0]  %s2384, 256, %s2382, [#allocation16], 128, 128, 8
        $region72: #{tpu_custom_call.1} parent=39 // pred_fallthru
          _
        // Predicated region
        $region73: #{tpu_custom_call.1} parent=39 // pred_check
          %p2390 = pneg %p207
        $region74: #{tpu_custom_call.1} parent=39 // pred_check_branch
          %2392 = sbr.rel (%p2390) target = $region76
        $region75: #{tpu_custom_call.1} parent=39 // pred_region
          %2393 = dma.done [#allocation16], 256
        $region76: #{tpu_custom_call.1} parent=39 // pred_fallthru
          _
      $region40: #{tpu_custom_call.1} parent=5 // pred_fallthru
        _
      %p2394 = scmp.le.s32.totalorder 2, %s22
      // Predicated region
      $region77: #{tpu_custom_call.1} parent=5 // pred_check
        %p2395 = pneg %p2394
      $region78: #{tpu_custom_call.1} parent=5 // pred_check_branch
        %2397 = sbr.rel (%p2395) target = $region80
      $region79: #{tpu_custom_call.1} parent=5 // pred_region
        %s2398 = ssub.s32 %s22, 2
        // Predicated region
        $region81: #{tpu_custom_call.1} parent=79 // pred_check
          %p2399 = pneg %p187
        $region82: #{tpu_custom_call.1} parent=79 // pred_check_branch
          %2401 = sbr.rel (%p2399) target = $region84
        $region83: #{tpu_custom_call.1} parent=79 // pred_region
          %s2402 = sand.u32 %s172, 1
          %s2403 = scalar_lea.sflag [#allocation7], %s2402
          %s2404 = sand.u32 %s172, 1
          %s2405 = smul.addr %s2404, 128
          %s2406 = scalar_lea.vmem [#allocation14], %s2405
          %2407 = dma.done %s2403, 2048
        $region84: #{tpu_custom_call.1} parent=79 // pred_fallthru
          _
      $region80: #{tpu_custom_call.1} parent=5 // pred_fallthru
        _
    $region6: #{tpu_custom_call.1} parent=1 // loop_footer
      %s26 = sadd.s32 1, %s22
    $region7: #{tpu_custom_call.1} parent=1 // loop_footer_branch
      %21 = sbr.rel target = $region3
    $region8: #{tpu_custom_call.1} parent=1 // loop_exit
      _
    %2408 = vsyncpa [#allocation6], 1
    %s2409 = scalar_lea.sflag [#allocation6], 1
    %2410 = vsyncpa %s2409, 1
    %2411 = vsyncpa [#allocation9], 1
    %2412 = vsyncpa [#allocation12], 1
    %2413 = vsyncpa [#allocation7], 1
    %s2414 = scalar_lea.sflag [#allocation7], 1
    %2415 = vsyncpa %s2414, 1
    %2416 = vsyncpa [#allocation16], 1

</llo_original>
